<compile_context>
chip_gen: v7x
topology: tpu7x:2x2x1
jax: 0.10.0
libtpu: 0.0.40
codegen_flags: <defaults>
</compile_context>

<pallas_src>
import jax
import jax.numpy as jnp
import numpy as np
from jax.experimental import pallas as pl
from jax.experimental.pallas import tpu as pltpu

LN_EPS = 1e-5


def _separated_head_kernel(x_ref, w1s_ref, vecs_ref, mavg_ref, eexp_ref,
                           eexpg_ref, w2bd_ref, wouts_ref, b2bo_ref, out_ref):
    Bt, L, H = x_ref.shape
    OH = w1s_ref.shape[1]
    O = mavg_ref.shape[1]

    def mm(a, b):
        # 2-D contraction, f32 accumulation on the MXU.
        return jax.lax.dot_general(a, b, (((1,), (0,)), ((), ())),
                                   preferred_element_type=jnp.float32)

    b1, beta = vecs_ref[0:1, :], vecs_ref[1:2, :]          # (1, O*H) each
    b2_row, bout_row = b2bo_ref[0:1, :], b2bo_ref[1:2, :]  # (1, O) each

    # (0) single bf16 cast of x, reused by both GEMMs; 2-D view with M = Bt*L.
    xb = x_ref[...].reshape(Bt * L, H).astype(jnp.bfloat16)

    # (1) all O heads in one lane-dense bf16 GEMM (f32 accumulation).
    z = mm(xb, w1s_ref[...]) + b1                          # (Bt*L, O*H) f32

    # (2) per-head LayerNorm: centered variance (robust), gamma folded into the
    #     expansion matrix.  All elementwise math in f32 (v5e-safe).
    mean_c = mm(z, mavg_ref[...])                          # (Bt*L, O)
    mean_e = mm(mean_c, eexp_ref[...])                     # (Bt*L, O*H)
    d = z - mean_e
    var_c = mm(d * d, mavg_ref[...])                       # (Bt*L, O)
    rstd_c = jax.lax.rsqrt(var_c + LN_EPS)
    scale_e = mm(rstd_c, eexpg_ref[...])                   # rstd * gamma, expanded
    # tanh GELU (EUP) instead of exact erf (long VPU polynomial) -- see header.
    za = jax.nn.gelu(d * scale_e + beta, approximate=True)

    # (3) per-head attention scores via one block-diagonal matmul.
    s = mm(za, w2bd_ref[...]) + b2_row                     # (Bt*L, O)

    # (4) w_out folded into pooling, reusing the bf16 x (single-pass bf16 GEMM).
    xw = mm(xb, wouts_ref[...])                            # (Bt*L, O) f32

    # (5) unnormalized softmax over L; one reciprocal on (Bt, O) via the EUP.
    #     (mask intentionally ignored, matching the PyTorch module.)
    s3 = s.reshape(Bt, L, O)
    xw3 = xw.reshape(Bt, L, O)
    m = jnp.max(s3, axis=1, keepdims=True)
    e = jnp.exp(s3 - m)
    val_un = jnp.sum(e * xw3, axis=1)                      # (Bt, O)
    denom = jnp.sum(e, axis=1)                             # (Bt, O)

    # (6) single lane-dense store of the whole output block.
    out_ref[...] = val_un * pl.reciprocal(denom, approx=True) + bout_row


def _vmem_capacity_bytes():
    try:
        return int(pltpu.get_tpu_info().vmem_capacity_bytes)
    except Exception:
        return 64 * 1024 * 1024      # conservative (v7x-sized) fallback


def _pick_b_tile(B, L, H, O, vmem_cap):
    """Live-set- and generation-aware batch tile.

    Budget counts ~6 live (L, O*H) f32 intermediates per batch row plus the
    double-buffered x tile, its bf16 copy, and (possibly double-buffered)
    weights.  On 64 MiB parts (v7x, 2 TCs) prefer an even grid of >= 2 tiles so
    both TensorCores get equal work; on 128 MiB parts (v5e/v6e, 1 TC) prefer
    the largest tile so M = b_tile*L feeds the MXU and amortizes per-step and
    narrow-store overhead."""
    OH = O * H
    dual_core = vmem_cap < (100 * 1024 * 1024)   # 64 MiB/TC -> v7x-like (2 TCs)

    # Bytes that do not scale with b_tile (constant-index weights). Count two
    # buffers each in case single-buffering (pl.Buffered(1)) is unavailable.
    weight_bytes = 2 * (H * OH * 2          # w1s (bf16)
                        + 2 * OH * 4        # b1 / beta
                        + 2 * OH * O * 4    # mavg + w2bd
                        + 2 * O * OH * 4    # eexp + eexp_gamma
                        + H * O * 2         # wouts (bf16)
                        + 2 * O * 4)        # b2 / b_out
    # Bytes per batch row: ~6 live (L, O*H) f32 temps + double-buffered x tile
    # + bf16 x copy + small O-wide temps.
    per_row = L * (6 * OH * 4 + 2 * H * 4 + H * 2 + 8 * O * 4)
    budget = int(vmem_cap * 0.5)
    cap = max(1, (budget - weight_bytes) // max(1, per_row))

    # Legal tiles: divide B and satisfy the output-block sublane constraint
    # (multiple of 8, or the whole batch).
    legal = [d for d in range(1, B + 1) if B % d == 0 and (d % 8 == 0 or d == B)]
    fit = [d for d in legal if d <= cap] or [min(legal)]

    def key(bt):
        n_tiles = B // bt
        balanced = (n_tiles >= 2 and n_tiles % 2 == 0) if dual_core else True
        return (balanced, bt)        # prefer balanced grids on dual-core, then larger tiles

    return max(fit, key=key)


def separated_head(x, params, mask=None, *, b_tile=None):
    """Fused SeparatedHead forward.  `mask` is accepted for API parity with the
    PyTorch module but is INTENTIONALLY IGNORED (nn.Sequential drops it)."""
    del mask
    B, L, H = x.shape
    O = params["w1"].shape[0]
    OH = O * H
    f32 = jnp.float32

    # ---- pack / stack derived operands (plain XLA, outside the kernel) ----
    # stacked first Linear: (H, O*H), bf16 for MXU throughput
    w1s = jnp.transpose(params["w1"], (1, 0, 2)).reshape(H, OH).astype(jnp.bfloat16)
    # packed per-head vectors: rows = b1, beta   -> (2, O*H)   (gamma folded below)
    vecs = jnp.concatenate([params["b1"].reshape(1, OH),
                            params["beta"].reshape(1, OH)], axis=0).astype(f32)
    eye_o = jnp.eye(O, dtype=f32)
    gamma2 = params["gamma"].reshape(O, H).astype(f32)
    mavg = jnp.kron(eye_o, jnp.ones((H, 1), f32)) / H                 # (O*H, O) chunk average
    eexp = jnp.kron(eye_o, jnp.ones((1, H), f32))                     # (O, O*H) chunk expansion
    eexpg = (eye_o[:, :, None] * gamma2[:, None, :]).reshape(O, OH)   # gamma-folded expansion
    w2 = params["w2"].reshape(O, H).astype(f32)
    w2bd = (w2[:, :, None] * eye_o[:, None, :]).reshape(OH, O)        # block-diag (O*H, O)
    wouts = params["w_out"].reshape(O, H).T.astype(jnp.bfloat16)      # (H, O) bf16
    b2bo = jnp.concatenate([params["b2"].reshape(1, O),
                            params["b_out"].reshape(1, O)], axis=0).astype(f32)

    vmem_cap = _vmem_capacity_bytes()
    if b_tile is None:
        b_tile = _pick_b_tile(B, L, H, O, vmem_cap)
    assert B % b_tile == 0, "b_tile must divide batch"
    grid = (B // b_tile,)

    const2 = lambda i: (0, 0)   # weights: constant block index -> DMA'd once

    def weight_spec(shape, single_buffer):
        if single_buffer:
            # Constant-index weights only need one VMEM buffer; halving their
            # footprint matters most on v7x's 64 MiB VMEM.
            return pl.BlockSpec(shape, const2, pipeline_mode=pl.Buffered(1))
        return pl.BlockSpec(shape, const2)

    def build_call(single_buffer):
        in_specs = [
            pl.BlockSpec((b_tile, L, H), lambda i: (i, 0, 0)),   # x, batch-tiled
            weight_spec((H, OH), single_buffer),                 # W1 stacked (bf16)
            weight_spec((2, OH), single_buffer),                 # b1 / beta
            weight_spec((OH, O), single_buffer),                 # chunk-average
            weight_spec((O, OH), single_buffer),                 # chunk-expansion
            weight_spec((O, OH), single_buffer),                 # gamma-folded expansion
            weight_spec((OH, O), single_buffer),                 # block-diag w2
            weight_spec((H, O), single_buffer),                  # W_out stacked (bf16)
            weight_spec((2, O), single_buffer),                  # b2 / b_out
        ]
        return pl.pallas_call(
            _separated_head_kernel,
            out_shape=jax.ShapeDtypeStruct((B, O), jnp.float32),
            grid_spec=pltpu.PrefetchScalarGridSpec(
                num_scalar_prefetch=0,
                grid=grid,
                in_specs=in_specs,
                out_specs=pl.BlockSpec((b_tile, O), lambda i: (i, 0)),  # lane-dense block
            ),
            compiler_params=pltpu.CompilerParams(
                dimension_semantics=("parallel",),        # batch tiles -> both TCs on v7x
                vmem_limit_bytes=int(vmem_cap * 0.9),
            ),
        )

    args = (x, w1s, vecs, mavg, eexp, eexpg, w2bd, wouts, b2bo)
    try:
        return build_call(single_buffer=True)(*args)
    except Exception:
        # pipeline_mode=pl.Buffered(1) unsupported in this Pallas build -> fall
        # back to default double-buffered weights (already in the VMEM budget).
        return build_call(single_buffer=False)(*args)


def init_params(key, in_features, out_features):
    H, O = in_features, out_features
    ks = jax.random.split(key, 6)
    scale = 1.0 / np.sqrt(H)
    return {
        "w1":    jax.random.uniform(ks[0], (O, H, H), jnp.float32, -scale, scale),
        "b1":    jax.random.uniform(ks[1], (O, 1, H), jnp.float32, -scale, scale),
        "gamma": jnp.ones((O, 1, H), jnp.float32),    # LayerNorm default init
        "beta":  jnp.zeros((O, 1, H), jnp.float32),
        "w2":    jax.random.uniform(ks[2], (O, 1, H), jnp.float32, -scale, scale),
        "b2":    jax.random.uniform(ks[3], (O, 1, 1), jnp.float32, -scale, scale),
        "w_out": jax.random.uniform(ks[4], (O, 1, H), jnp.float32, -scale, scale),
        "b_out": jax.random.uniform(ks[5], (O, 1, 1), jnp.float32, -scale, scale),
    }


def reference(x, p):
    """Pure-JAX f32 mirror of the PyTorch forward (per-head loop + concat)."""
    outs = []
    for o in range(p["w1"].shape[0]):
        z = x @ p["w1"][o] + p["b1"][o]
        mean = z.mean(-1, keepdims=True)
        var = jnp.square(z - mean).mean(-1, keepdims=True)
        z = (z - mean) / jnp.sqrt(var + LN_EPS) * p["gamma"][o] + p["beta"][o]
        z = jax.nn.gelu(z, approximate=False)
        s = jnp.sum(z * p["w2"][o], axis=-1, keepdims=True) + p["b2"][o]
        a = jax.nn.softmax(s, axis=1)
        pooled = jnp.sum(a * x, axis=1)
        val = jnp.sum(pooled * p["w_out"][o, 0], axis=-1, keepdims=True) \
              + p["b_out"][o, 0]
        outs.append(val)
    return jnp.concatenate(outs, axis=-1)


if __name__ == "__main__":
    B, L, H, O = 16, 8, 32, 4          # batch, seq, in_features, out_features
    key = jax.random.PRNGKey(0)
    kx, kp = jax.random.split(key)
    x = jax.random.normal(kx, (B, L, H), jnp.float32)
    params = init_params(kp, H, O)

    ref = reference(x, params)

    # Tolerance relaxed vs pure f32: bf16 MXU operands, tanh GELU, approx reciprocal.
    # 1) auto-tiled path (generation/VMEM-aware b_tile heuristic)
    out_auto = jax.block_until_ready(separated_head(x, params))
    np.testing.assert_allclose(np.asarray(out_auto), np.asarray(ref), rtol=5e-2, atol=5e-2)

    # 2) explicit 2-tile even grid (exercises multi-tile path / both TCs on v7x)
    out = jax.block_until_ready(separated_head(x, params, b_tile=8))
    np.testing.assert_allclose(np.asarray(out), np.asarray(ref), rtol=5e-2, atol=5e-2)

    print("KERNEL_OK")
</pallas_src>

<mosaic_0001>
module attributes {stable_mosaic.version = 11 : i64} {
  func.func @_separated_head_kernel(%arg0: i32, %arg1: memref<8x8x32xf32, #tpu.memory_space<vmem>>, %arg2: memref<32x128xbf16, #tpu.memory_space<vmem>>, %arg3: memref<2x128xf32, #tpu.memory_space<vmem>>, %arg4: memref<128x4xf32, #tpu.memory_space<vmem>>, %arg5: memref<4x128xf32, #tpu.memory_space<vmem>>, %arg6: memref<4x128xf32, #tpu.memory_space<vmem>>, %arg7: memref<128x4xf32, #tpu.memory_space<vmem>>, %arg8: memref<32x4xbf16, #tpu.memory_space<vmem>>, %arg9: memref<2x4xf32, #tpu.memory_space<vmem>>, %arg10: memref<8x4xf32, #tpu.memory_space<vmem>>) attributes {dimension_semantics = [#tpu.dimension_semantics<parallel>], iteration_bounds = array<i64: 2>, scalar_prefetch = 0 : i64, scratch_operands = 0 : i64, tpu.core_type = #tpu.core_type<tc>, window_params = [{transform_indices = @transform_0, window_bounds = array<i64: 8, 8, 32>}, {pipeline_mode = #tpu.pipeline_mode<synchronous>, transform_indices = @transform_1, window_bounds = array<i64: 32, 128>}, {pipeline_mode = #tpu.pipeline_mode<synchronous>, transform_indices = @transform_2, window_bounds = array<i64: 2, 128>}, {pipeline_mode = #tpu.pipeline_mode<synchronous>, transform_indices = @transform_3, window_bounds = array<i64: 128, 4>}, {pipeline_mode = #tpu.pipeline_mode<synchronous>, transform_indices = @transform_4, window_bounds = array<i64: 4, 128>}, {pipeline_mode = #tpu.pipeline_mode<synchronous>, transform_indices = @transform_5, window_bounds = array<i64: 4, 128>}, {pipeline_mode = #tpu.pipeline_mode<synchronous>, transform_indices = @transform_6, window_bounds = array<i64: 128, 4>}, {pipeline_mode = #tpu.pipeline_mode<synchronous>, transform_indices = @transform_7, window_bounds = array<i64: 32, 4>}, {pipeline_mode = #tpu.pipeline_mode<synchronous>, transform_indices = @transform_8, window_bounds = array<i64: 2, 4>}, {transform_indices = @transform_9, window_bounds = array<i64: 8, 4>}]} {
    %c0 = arith.constant 0 : index
    %c0_0 = arith.constant 0 : index
    %0 = vector.load %arg3[%c0, %c0_0] : memref<2x128xf32, #tpu.memory_space<vmem>>, vector<1x128xf32>
    %c1 = arith.constant 1 : index
    %c0_1 = arith.constant 0 : index
    %1 = vector.load %arg3[%c1, %c0_1] : memref<2x128xf32, #tpu.memory_space<vmem>>, vector<1x128xf32>
    %c0_2 = arith.constant 0 : index
    %c0_3 = arith.constant 0 : index
    %2 = vector.load %arg9[%c0_2, %c0_3] : memref<2x4xf32, #tpu.memory_space<vmem>>, vector<1x4xf32>
    %c1_4 = arith.constant 1 : index
    %c0_5 = arith.constant 0 : index
    %3 = vector.load %arg9[%c1_4, %c0_5] : memref<2x4xf32, #tpu.memory_space<vmem>>, vector<1x4xf32>
    %c0_6 = arith.constant 0 : index
    %c0_7 = arith.constant 0 : index
    %c0_8 = arith.constant 0 : index
    %4 = vector.load %arg1[%c0_6, %c0_7, %c0_8] : memref<8x8x32xf32, #tpu.memory_space<vmem>>, vector<8x8x32xf32>
    %5 = vector.shape_cast %4 : vector<8x8x32xf32> to vector<64x32xf32>
    %6 = arith.truncf %5 : vector<64x32xf32> to vector<64x32xbf16>
    %c0_9 = arith.constant 0 : index
    %c0_10 = arith.constant 0 : index
    %7 = vector.load %arg2[%c0_9, %c0_10] : memref<32x128xbf16, #tpu.memory_space<vmem>>, vector<32x128xbf16>
    %cst = arith.constant dense<0.000000e+00> : vector<64x128xf32>
    %8 = tpu.matmul %6, %7, %cst {dimension_numbers = #tpu.dot_dimension_numbers<[1], [0], [0], [1], [0, 0, 1, 1], [], []>} : vector<64x32xbf16>, vector<32x128xbf16>, vector<64x128xf32> -> vector<64x128xf32>
    %9 = vector.broadcast %0 : vector<1x128xf32> to vector<64x128xf32>
    %10 = arith.addf %8, %9 : vector<64x128xf32>
    %c0_11 = arith.constant 0 : index
    %c0_12 = arith.constant 0 : index
    %11 = vector.load %arg4[%c0_11, %c0_12] : memref<128x4xf32, #tpu.memory_space<vmem>>, vector<128x4xf32>
    %cst_13 = arith.constant dense<0.000000e+00> : vector<64x4xf32>
    %12 = tpu.matmul %10, %11, %cst_13 {dimension_numbers = #tpu.dot_dimension_numbers<[1], [0], [0], [1], [0, 0, 1, 1], [], []>} : vector<64x128xf32>, vector<128x4xf32>, vector<64x4xf32> -> vector<64x4xf32>
    %c0_14 = arith.constant 0 : index
    %c0_15 = arith.constant 0 : index
    %13 = vector.load %arg5[%c0_14, %c0_15] : memref<4x128xf32, #tpu.memory_space<vmem>>, vector<4x128xf32>
    %cst_16 = arith.constant dense<0.000000e+00> : vector<64x128xf32>
    %14 = tpu.matmul %12, %13, %cst_16 {dimension_numbers = #tpu.dot_dimension_numbers<[1], [0], [0], [1], [0, 0, 1, 1], [], []>} : vector<64x4xf32>, vector<4x128xf32>, vector<64x128xf32> -> vector<64x128xf32>
    %15 = arith.subf %10, %14 : vector<64x128xf32>
    %16 = arith.mulf %15, %15 : vector<64x128xf32>
    %c0_17 = arith.constant 0 : index
    %c0_18 = arith.constant 0 : index
    %17 = vector.load %arg4[%c0_17, %c0_18] : memref<128x4xf32, #tpu.memory_space<vmem>>, vector<128x4xf32>
    %cst_19 = arith.constant dense<0.000000e+00> : vector<64x4xf32>
    %18 = tpu.matmul %16, %17, %cst_19 {dimension_numbers = #tpu.dot_dimension_numbers<[1], [0], [0], [1], [0, 0, 1, 1], [], []>} : vector<64x128xf32>, vector<128x4xf32>, vector<64x4xf32> -> vector<64x4xf32>
    %cst_20 = arith.constant 9.99999974E-6 : f32
    %19 = vector.broadcast %cst_20 : f32 to vector<64x4xf32>
    %20 = arith.addf %18, %19 : vector<64x4xf32>
    %21 = math.rsqrt %20 : vector<64x4xf32>
    %c0_21 = arith.constant 0 : index
    %c0_22 = arith.constant 0 : index
    %22 = vector.load %arg6[%c0_21, %c0_22] : memref<4x128xf32, #tpu.memory_space<vmem>>, vector<4x128xf32>
    %cst_23 = arith.constant dense<0.000000e+00> : vector<64x128xf32>
    %23 = tpu.matmul %21, %22, %cst_23 {dimension_numbers = #tpu.dot_dimension_numbers<[1], [0], [0], [1], [0, 0, 1, 1], [], []>} : vector<64x4xf32>, vector<4x128xf32>, vector<64x128xf32> -> vector<64x128xf32>
    %24 = arith.mulf %15, %23 : vector<64x128xf32>
    %25 = vector.broadcast %1 : vector<1x128xf32> to vector<64x128xf32>
    %26 = arith.addf %24, %25 : vector<64x128xf32>
    %27 = arith.mulf %26, %26 : vector<64x128xf32>
    %28 = arith.mulf %26, %27 : vector<64x128xf32>
    %cst_24 = arith.constant 4.471500e-02 : f32
    %29 = vector.broadcast %cst_24 : f32 to vector<64x128xf32>
    %30 = arith.mulf %29, %28 : vector<64x128xf32>
    %31 = arith.addf %26, %30 : vector<64x128xf32>
    %cst_25 = arith.constant 0.797884583 : f32
    %32 = vector.broadcast %cst_25 : f32 to vector<64x128xf32>
    %33 = arith.mulf %32, %31 : vector<64x128xf32>
    %34 = math.tanh %33 : vector<64x128xf32>
    %cst_26 = arith.constant 1.000000e+00 : f32
    %35 = vector.broadcast %cst_26 : f32 to vector<64x128xf32>
    %36 = arith.addf %35, %34 : vector<64x128xf32>
    %cst_27 = arith.constant 5.000000e-01 : f32
    %37 = vector.broadcast %cst_27 : f32 to vector<64x128xf32>
    %38 = arith.mulf %37, %36 : vector<64x128xf32>
    %39 = arith.mulf %26, %38 : vector<64x128xf32>
    %c0_28 = arith.constant 0 : index
    %c0_29 = arith.constant 0 : index
    %40 = vector.load %arg7[%c0_28, %c0_29] : memref<128x4xf32, #tpu.memory_space<vmem>>, vector<128x4xf32>
    %cst_30 = arith.constant dense<0.000000e+00> : vector<64x4xf32>
    %41 = tpu.matmul %39, %40, %cst_30 {dimension_numbers = #tpu.dot_dimension_numbers<[1], [0], [0], [1], [0, 0, 1, 1], [], []>} : vector<64x128xf32>, vector<128x4xf32>, vector<64x4xf32> -> vector<64x4xf32>
    %42 = vector.broadcast %2 : vector<1x4xf32> to vector<64x4xf32>
    %43 = arith.addf %41, %42 : vector<64x4xf32>
    %c0_31 = arith.constant 0 : index
    %c0_32 = arith.constant 0 : index
    %44 = vector.load %arg8[%c0_31, %c0_32] : memref<32x4xbf16, #tpu.memory_space<vmem>>, vector<32x4xbf16>
    %cst_33 = arith.constant dense<0.000000e+00> : vector<64x4xf32>
    %45 = tpu.matmul %6, %44, %cst_33 {dimension_numbers = #tpu.dot_dimension_numbers<[1], [0], [0], [1], [0, 0, 1, 1], [], []>} : vector<64x32xbf16>, vector<32x4xbf16>, vector<64x4xf32> -> vector<64x4xf32>
    %46 = vector.shape_cast %43 : vector<64x4xf32> to vector<8x8x4xf32>
    %47 = vector.shape_cast %45 : vector<64x4xf32> to vector<8x8x4xf32>
    %cst_34 = arith.constant dense<0xFF800000> : vector<8x4xf32>
    %48 = vector.multi_reduction <maximumf>, %46, %cst_34 [1] : vector<8x8x4xf32> to vector<8x4xf32>
    %49 = vector.shape_cast %48 : vector<8x4xf32> to vector<8x1x4xf32>
    %50 = vector.broadcast %49 : vector<8x1x4xf32> to vector<8x8x4xf32>
    %51 = arith.subf %46, %50 : vector<8x8x4xf32>
    %52 = math.exp %51 : vector<8x8x4xf32>
    %53 = arith.mulf %52, %47 : vector<8x8x4xf32>
    %cst_35 = arith.constant dense<0.000000e+00> : vector<8x4xf32>
    %54 = vector.multi_reduction <add>, %53, %cst_35 [1] : vector<8x8x4xf32> to vector<8x4xf32>
    %cst_36 = arith.constant dense<0.000000e+00> : vector<8x4xf32>
    %55 = vector.multi_reduction <add>, %52, %cst_36 [1] : vector<8x8x4xf32> to vector<8x4xf32>
    %56 = tpu.reciprocal %55 {approx = true} : vector<8x4xf32> -> vector<8x4xf32>
    %57 = arith.mulf %54, %56 : vector<8x4xf32>
    %58 = vector.broadcast %3 : vector<1x4xf32> to vector<8x4xf32>
    %59 = arith.addf %57, %58 : vector<8x4xf32>
    %c0_37 = arith.constant 0 : index
    %c0_38 = arith.constant 0 : index
    %60 = vector.load %arg10[%c0_37, %c0_38] : memref<8x4xf32, #tpu.memory_space<vmem>>, vector<8x4xf32>
    tpu.vector_store %arg10[%c0_37, %c0_38], %59 {strides = array<i32>} : memref<8x4xf32, #tpu.memory_space<vmem>>, vector<8x4xf32>,
    return
  }
  func.func @transform_0(%arg0: i32) -> (i32, i32, i32) {
    %c0_i32 = arith.constant 0 : i32
    %c0_i32_0 = arith.constant 0 : i32
    %c0_i32_1 = arith.constant 0 : i32
    return %arg0, %c0_i32, %c0_i32_0 : i32, i32, i32
  }
  func.func @transform_1(%arg0: i32) -> (i32, i32) {
    %c0_i32 = arith.constant 0 : i32
    %c0_i32_0 = arith.constant 0 : i32
    %c0_i32_1 = arith.constant 0 : i32
    return %c0_i32, %c0_i32_0 : i32, i32
  }
  func.func @transform_2(%arg0: i32) -> (i32, i32) {
    %c0_i32 = arith.constant 0 : i32
    %c0_i32_0 = arith.constant 0 : i32
    %c0_i32_1 = arith.constant 0 : i32
    return %c0_i32, %c0_i32_0 : i32, i32
  }
  func.func @transform_3(%arg0: i32) -> (i32, i32) {
    %c0_i32 = arith.constant 0 : i32
    %c0_i32_0 = arith.constant 0 : i32
    %c0_i32_1 = arith.constant 0 : i32
    return %c0_i32, %c0_i32_0 : i32, i32
  }
  func.func @transform_4(%arg0: i32) -> (i32, i32) {
    %c0_i32 = arith.constant 0 : i32
    %c0_i32_0 = arith.constant 0 : i32
    %c0_i32_1 = arith.constant 0 : i32
    return %c0_i32, %c0_i32_0 : i32, i32
  }
  func.func @transform_5(%arg0: i32) -> (i32, i32) {
    %c0_i32 = arith.constant 0 : i32
    %c0_i32_0 = arith.constant 0 : i32
    %c0_i32_1 = arith.constant 0 : i32
    return %c0_i32, %c0_i32_0 : i32, i32
  }
  func.func @transform_6(%arg0: i32) -> (i32, i32) {
    %c0_i32 = arith.constant 0 : i32
    %c0_i32_0 = arith.constant 0 : i32
    %c0_i32_1 = arith.constant 0 : i32
    return %c0_i32, %c0_i32_0 : i32, i32
  }
  func.func @transform_7(%arg0: i32) -> (i32, i32) {
    %c0_i32 = arith.constant 0 : i32
    %c0_i32_0 = arith.constant 0 : i32
    %c0_i32_1 = arith.constant 0 : i32
    return %c0_i32, %c0_i32_0 : i32, i32
  }
  func.func @transform_8(%arg0: i32) -> (i32, i32) {
    %c0_i32 = arith.constant 0 : i32
    %c0_i32_0 = arith.constant 0 : i32
    %c0_i32_1 = arith.constant 0 : i32
    return %c0_i32, %c0_i32_0 : i32, i32
  }
  func.func @transform_9(%arg0: i32) -> (i32, i32) {
    %c0_i32 = arith.constant 0 : i32
    %c0_i32_0 = arith.constant 0 : i32
    return %arg0, %c0_i32 : i32, i32
  }
}

module attributes {stable_mosaic.version = 11 : i64} {
  func.func @_separated_head_kernel(%arg0: i32, %arg1: memref<8x8x32xf32, #tpu.memory_space<vmem>>, %arg2: memref<32x128xbf16, #tpu.memory_space<vmem>>, %arg3: memref<2x128xf32, #tpu.memory_space<vmem>>, %arg4: memref<128x4xf32, #tpu.memory_space<vmem>>, %arg5: memref<4x128xf32, #tpu.memory_space<vmem>>, %arg6: memref<4x128xf32, #tpu.memory_space<vmem>>, %arg7: memref<128x4xf32, #tpu.memory_space<vmem>>, %arg8: memref<32x4xbf16, #tpu.memory_space<vmem>>, %arg9: memref<2x4xf32, #tpu.memory_space<vmem>>, %arg10: memref<8x4xf32, #tpu.memory_space<vmem>>) attributes {dimension_semantics = [#tpu.dimension_semantics<parallel>], iteration_bounds = array<i64: 2>, scalar_prefetch = 0 : i64, scratch_operands = 0 : i64, tpu.core_type = #tpu.core_type<tc>, window_params = [{transform_indices = @transform_0, window_bounds = array<i64: 8, 8, 32>}, {pipeline_mode = #tpu.pipeline_mode<synchronous>, transform_indices = @transform_1, window_bounds = array<i64: 32, 128>}, {pipeline_mode = #tpu.pipeline_mode<synchronous>, transform_indices = @transform_2, window_bounds = array<i64: 2, 128>}, {pipeline_mode = #tpu.pipeline_mode<synchronous>, transform_indices = @transform_3, window_bounds = array<i64: 128, 4>}, {pipeline_mode = #tpu.pipeline_mode<synchronous>, transform_indices = @transform_4, window_bounds = array<i64: 4, 128>}, {pipeline_mode = #tpu.pipeline_mode<synchronous>, transform_indices = @transform_5, window_bounds = array<i64: 4, 128>}, {pipeline_mode = #tpu.pipeline_mode<synchronous>, transform_indices = @transform_6, window_bounds = array<i64: 128, 4>}, {pipeline_mode = #tpu.pipeline_mode<synchronous>, transform_indices = @transform_7, window_bounds = array<i64: 32, 4>}, {pipeline_mode = #tpu.pipeline_mode<synchronous>, transform_indices = @transform_8, window_bounds = array<i64: 2, 4>}, {transform_indices = @transform_9, window_bounds = array<i64: 8, 4>}]} {
    %c0 = arith.constant 0 : index
    %c0_0 = arith.constant 0 : index
    %0 = vector.load %arg3[%c0, %c0_0] : memref<2x128xf32, #tpu.memory_space<vmem>>, vector<1x128xf32>
    %c1 = arith.constant 1 : index
    %c0_1 = arith.constant 0 : index
    %1 = vector.load %arg3[%c1, %c0_1] : memref<2x128xf32, #tpu.memory_space<vmem>>, vector<1x128xf32>
    %c0_2 = arith.constant 0 : index
    %c0_3 = arith.constant 0 : index
    %2 = vector.load %arg9[%c0_2, %c0_3] : memref<2x4xf32, #tpu.memory_space<vmem>>, vector<1x4xf32>
    %c1_4 = arith.constant 1 : index
    %c0_5 = arith.constant 0 : index
    %3 = vector.load %arg9[%c1_4, %c0_5] : memref<2x4xf32, #tpu.memory_space<vmem>>, vector<1x4xf32>
    %c0_6 = arith.constant 0 : index
    %c0_7 = arith.constant 0 : index
    %c0_8 = arith.constant 0 : index
    %4 = vector.load %arg1[%c0_6, %c0_7, %c0_8] : memref<8x8x32xf32, #tpu.memory_space<vmem>>, vector<8x8x32xf32>
    %5 = vector.shape_cast %4 : vector<8x8x32xf32> to vector<64x32xf32>
    %6 = arith.truncf %5 : vector<64x32xf32> to vector<64x32xbf16>
    %c0_9 = arith.constant 0 : index
    %c0_10 = arith.constant 0 : index
    %7 = vector.load %arg2[%c0_9, %c0_10] : memref<32x128xbf16, #tpu.memory_space<vmem>>, vector<32x128xbf16>
    %cst = arith.constant dense<0.000000e+00> : vector<64x128xf32>
    %8 = tpu.matmul %6, %7, %cst {dimension_numbers = #tpu.dot_dimension_numbers<[1], [0], [0], [1], [0, 0, 1, 1], [], []>} : vector<64x32xbf16>, vector<32x128xbf16>, vector<64x128xf32> -> vector<64x128xf32>
    %9 = vector.broadcast %0 : vector<1x128xf32> to vector<64x128xf32>
    %10 = arith.addf %8, %9 : vector<64x128xf32>
    %c0_11 = arith.constant 0 : index
    %c0_12 = arith.constant 0 : index
    %11 = vector.load %arg4[%c0_11, %c0_12] : memref<128x4xf32, #tpu.memory_space<vmem>>, vector<128x4xf32>
    %cst_13 = arith.constant dense<0.000000e+00> : vector<64x4xf32>
    %12 = tpu.matmul %10, %11, %cst_13 {dimension_numbers = #tpu.dot_dimension_numbers<[1], [0], [0], [1], [0, 0, 1, 1], [], []>} : vector<64x128xf32>, vector<128x4xf32>, vector<64x4xf32> -> vector<64x4xf32>
    %c0_14 = arith.constant 0 : index
    %c0_15 = arith.constant 0 : index
    %13 = vector.load %arg5[%c0_14, %c0_15] : memref<4x128xf32, #tpu.memory_space<vmem>>, vector<4x128xf32>
    %cst_16 = arith.constant dense<0.000000e+00> : vector<64x128xf32>
    %14 = tpu.matmul %12, %13, %cst_16 {dimension_numbers = #tpu.dot_dimension_numbers<[1], [0], [0], [1], [0, 0, 1, 1], [], []>} : vector<64x4xf32>, vector<4x128xf32>, vector<64x128xf32> -> vector<64x128xf32>
    %15 = arith.subf %10, %14 : vector<64x128xf32>
    %16 = arith.mulf %15, %15 : vector<64x128xf32>
    %c0_17 = arith.constant 0 : index
    %c0_18 = arith.constant 0 : index
    %17 = vector.load %arg4[%c0_17, %c0_18] : memref<128x4xf32, #tpu.memory_space<vmem>>, vector<128x4xf32>
    %cst_19 = arith.constant dense<0.000000e+00> : vector<64x4xf32>
    %18 = tpu.matmul %16, %17, %cst_19 {dimension_numbers = #tpu.dot_dimension_numbers<[1], [0], [0], [1], [0, 0, 1, 1], [], []>} : vector<64x128xf32>, vector<128x4xf32>, vector<64x4xf32> -> vector<64x4xf32>
    %cst_20 = arith.constant 9.99999974E-6 : f32
    %19 = vector.broadcast %cst_20 : f32 to vector<64x4xf32>
    %20 = arith.addf %18, %19 : vector<64x4xf32>
    %21 = math.rsqrt %20 : vector<64x4xf32>
    %c0_21 = arith.constant 0 : index
    %c0_22 = arith.constant 0 : index
    %22 = vector.load %arg6[%c0_21, %c0_22] : memref<4x128xf32, #tpu.memory_space<vmem>>, vector<4x128xf32>
    %cst_23 = arith.constant dense<0.000000e+00> : vector<64x128xf32>
    %23 = tpu.matmul %21, %22, %cst_23 {dimension_numbers = #tpu.dot_dimension_numbers<[1], [0], [0], [1], [0, 0, 1, 1], [], []>} : vector<64x4xf32>, vector<4x128xf32>, vector<64x128xf32> -> vector<64x128xf32>
    %24 = arith.mulf %15, %23 : vector<64x128xf32>
    %25 = vector.broadcast %1 : vector<1x128xf32> to vector<64x128xf32>
    %26 = arith.addf %24, %25 : vector<64x128xf32>
    %27 = arith.mulf %26, %26 : vector<64x128xf32>
    %28 = arith.mulf %26, %27 : vector<64x128xf32>
    %cst_24 = arith.constant 4.471500e-02 : f32
    %29 = vector.broadcast %cst_24 : f32 to vector<64x128xf32>
    %30 = arith.mulf %29, %28 : vector<64x128xf32>
    %31 = arith.addf %26, %30 : vector<64x128xf32>
    %cst_25 = arith.constant 0.797884583 : f32
    %32 = vector.broadcast %cst_25 : f32 to vector<64x128xf32>
    %33 = arith.mulf %32, %31 : vector<64x128xf32>
    %34 = math.tanh %33 : vector<64x128xf32>
    %cst_26 = arith.constant 1.000000e+00 : f32
    %35 = vector.broadcast %cst_26 : f32 to vector<64x128xf32>
    %36 = arith.addf %35, %34 : vector<64x128xf32>
    %cst_27 = arith.constant 5.000000e-01 : f32
    %37 = vector.broadcast %cst_27 : f32 to vector<64x128xf32>
    %38 = arith.mulf %37, %36 : vector<64x128xf32>
    %39 = arith.mulf %26, %38 : vector<64x128xf32>
    %c0_28 = arith.constant 0 : index
    %c0_29 = arith.constant 0 : index
    %40 = vector.load %arg7[%c0_28, %c0_29] : memref<128x4xf32, #tpu.memory_space<vmem>>, vector<128x4xf32>
    %cst_30 = arith.constant dense<0.000000e+00> : vector<64x4xf32>
    %41 = tpu.matmul %39, %40, %cst_30 {dimension_numbers = #tpu.dot_dimension_numbers<[1], [0], [0], [1], [0, 0, 1, 1], [], []>} : vector<64x128xf32>, vector<128x4xf32>, vector<64x4xf32> -> vector<64x4xf32>
    %42 = vector.broadcast %2 : vector<1x4xf32> to vector<64x4xf32>
    %43 = arith.addf %41, %42 : vector<64x4xf32>
    %c0_31 = arith.constant 0 : index
    %c0_32 = arith.constant 0 : index
    %44 = vector.load %arg8[%c0_31, %c0_32] : memref<32x4xbf16, #tpu.memory_space<vmem>>, vector<32x4xbf16>
    %cst_33 = arith.constant dense<0.000000e+00> : vector<64x4xf32>
    %45 = tpu.matmul %6, %44, %cst_33 {dimension_numbers = #tpu.dot_dimension_numbers<[1], [0], [0], [1], [0, 0, 1, 1], [], []>} : vector<64x32xbf16>, vector<32x4xbf16>, vector<64x4xf32> -> vector<64x4xf32>
    %46 = vector.shape_cast %43 : vector<64x4xf32> to vector<8x8x4xf32>
    %47 = vector.shape_cast %45 : vector<64x4xf32> to vector<8x8x4xf32>
    %cst_34 = arith.constant dense<0xFF800000> : vector<8x4xf32>
    %48 = vector.multi_reduction <maximumf>, %46, %cst_34 [1] : vector<8x8x4xf32> to vector<8x4xf32>
    %49 = vector.shape_cast %48 : vector<8x4xf32> to vector<8x1x4xf32>
    %50 = vector.broadcast %49 : vector<8x1x4xf32> to vector<8x8x4xf32>
    %51 = arith.subf %46, %50 : vector<8x8x4xf32>
    %52 = math.exp %51 : vector<8x8x4xf32>
    %53 = arith.mulf %52, %47 : vector<8x8x4xf32>
    %cst_35 = arith.constant dense<0.000000e+00> : vector<8x4xf32>
    %54 = vector.multi_reduction <add>, %53, %cst_35 [1] : vector<8x8x4xf32> to vector<8x4xf32>
    %cst_36 = arith.constant dense<0.000000e+00> : vector<8x4xf32>
    %55 = vector.multi_reduction <add>, %52, %cst_36 [1] : vector<8x8x4xf32> to vector<8x4xf32>
    %56 = tpu.reciprocal %55 {approx = true} : vector<8x4xf32> -> vector<8x4xf32>
    %57 = arith.mulf %54, %56 : vector<8x4xf32>
    %58 = vector.broadcast %3 : vector<1x4xf32> to vector<8x4xf32>
    %59 = arith.addf %57, %58 : vector<8x4xf32>
    %c0_37 = arith.constant 0 : index
    %c0_38 = arith.constant 0 : index
    %60 = vector.load %arg10[%c0_37, %c0_38] : memref<8x4xf32, #tpu.memory_space<vmem>>, vector<8x4xf32>
    tpu.vector_store %arg10[%c0_37, %c0_38], %59 {strides = array<i32>} : memref<8x4xf32, #tpu.memory_space<vmem>>, vector<8x4xf32>,
    return
  }
  func.func @transform_0(%arg0: i32) -> (i32, i32, i32) {
    %c0_i32 = arith.constant 0 : i32
    %c0_i32_0 = arith.constant 0 : i32
    %c0_i32_1 = arith.constant 0 : i32
    return %arg0, %c0_i32, %c0_i32_0 : i32, i32, i32
  }
  func.func @transform_1(%arg0: i32) -> (i32, i32) {
    %c0_i32 = arith.constant 0 : i32
    %c0_i32_0 = arith.constant 0 : i32
    %c0_i32_1 = arith.constant 0 : i32
    return %c0_i32, %c0_i32_0 : i32, i32
  }
  func.func @transform_2(%arg0: i32) -> (i32, i32) {
    %c0_i32 = arith.constant 0 : i32
    %c0_i32_0 = arith.constant 0 : i32
    %c0_i32_1 = arith.constant 0 : i32
    return %c0_i32, %c0_i32_0 : i32, i32
  }
  func.func @transform_3(%arg0: i32) -> (i32, i32) {
    %c0_i32 = arith.constant 0 : i32
    %c0_i32_0 = arith.constant 0 : i32
    %c0_i32_1 = arith.constant 0 : i32
    return %c0_i32, %c0_i32_0 : i32, i32
  }
  func.func @transform_4(%arg0: i32) -> (i32, i32) {
    %c0_i32 = arith.constant 0 : i32
    %c0_i32_0 = arith.constant 0 : i32
    %c0_i32_1 = arith.constant 0 : i32
    return %c0_i32, %c0_i32_0 : i32, i32
  }
  func.func @transform_5(%arg0: i32) -> (i32, i32) {
    %c0_i32 = arith.constant 0 : i32
    %c0_i32_0 = arith.constant 0 : i32
    %c0_i32_1 = arith.constant 0 : i32
    return %c0_i32, %c0_i32_0 : i32, i32
  }
  func.func @transform_6(%arg0: i32) -> (i32, i32) {
    %c0_i32 = arith.constant 0 : i32
    %c0_i32_0 = arith.constant 0 : i32
    %c0_i32_1 = arith.constant 0 : i32
    return %c0_i32, %c0_i32_0 : i32, i32
  }
  func.func @transform_7(%arg0: i32) -> (i32, i32) {
    %c0_i32 = arith.constant 0 : i32
    %c0_i32_0 = arith.constant 0 : i32
    %c0_i32_1 = arith.constant 0 : i32
    return %c0_i32, %c0_i32_0 : i32, i32
  }
  func.func @transform_8(%arg0: i32) -> (i32, i32) {
    %c0_i32 = arith.constant 0 : i32
    %c0_i32_0 = arith.constant 0 : i32
    %c0_i32_1 = arith.constant 0 : i32
    return %c0_i32, %c0_i32_0 : i32, i32
  }
  func.func @transform_9(%arg0: i32) -> (i32, i32) {
    %c0_i32 = arith.constant 0 : i32
    %c0_i32_0 = arith.constant 0 : i32
    return %arg0, %c0_i32 : i32, i32
  }
}

</mosaic_0001>

<llo_original>
// kernel: tpu_custom_call.1
$region0: #{tpu_custom_call.1}
  #allocation0 [shape = 'u32[]', space=smem, size = 0x4, offset = 0x4, fixed_abs, tag = 'smem constant byte address 0x4 - core index']
  #allocation1 [shape = 'u32[144,128]{1,0:T(1,128)}', space=vmem, size = 0x12000, scoped, tag = 'internal scratch']
  %s0 = inlined_call_operand.vmem [shape: f32[16,8,32], index: 0, kind: input, shape index: {}]
  %s1 = inlined_call_operand.vmem [shape: bf16[32,128], index: 1, kind: input, shape index: {}]
  %s2 = inlined_call_operand.vmem [shape: f32[2,128], index: 2, kind: input, shape index: {}]
  %s3 = inlined_call_operand.vmem [shape: f32[128,4], index: 3, kind: input, shape index: {}]
  %s4 = inlined_call_operand.vmem [shape: f32[4,128], index: 4, kind: input, shape index: {}]
  %s5 = inlined_call_operand.vmem [shape: f32[4,128], index: 5, kind: input, shape index: {}]
  %s6 = inlined_call_operand.vmem [shape: f32[128,4], index: 6, kind: input, shape index: {}]
  %s7 = inlined_call_operand.vmem [shape: bf16[32,4], index: 7, kind: input, shape index: {}]
  %s8 = inlined_call_operand.vmem [shape: f32[2,4], index: 8, kind: input, shape index: {}]
  %s9 = inlined_call_operand.vmem [shape: f32[16,4], index: 9, kind: output, shape index: {}]
  %s10 = sld [smem:[#allocation0]]
  $region69: #{tpu_custom_call.1} parent=0
    _
  %s12 = ssub.s32 1, %s10
  %s13 = scalar_select 0, %s12, %s10
  loop: start=0, step=1, limit=4
  $region2: #{tpu_custom_call.1} parent=0 // loop_pre_header
    _
  $region3: #{tpu_custom_call.1} parent=0 // loop_header
    %s15 = sphi 0, %s19
    %p16 = scmp.ge.s32.totalorder %s15, 4
    %s25 = sphi 0, %s27
    %s28 = sphi 0, %s25
    %s29 = sphi 0, %s28
    %s45 = sphi 0, %s29
    %s49 = sphi 0, %s49
    %s51 = sphi 0, %s49
    %s52 = sphi 0, %s51
    %s66 = sphi 0, %s52
    %s70 = sphi 0, %s70
    %s72 = sphi 0, %s70
    %s73 = sphi 0, %s72
    %s87 = sphi 0, %s73
    %s91 = sphi 0, %s91
    %s93 = sphi 0, %s91
    %s94 = sphi 0, %s93
    %s108 = sphi 0, %s94
    %s112 = sphi 0, %s112
    %s114 = sphi 0, %s112
    %s115 = sphi 0, %s114
    %s129 = sphi 0, %s115
    %s133 = sphi 0, %s133
    %s135 = sphi 0, %s133
    %s136 = sphi 0, %s135
    %s150 = sphi 0, %s136
    %s154 = sphi 0, %s154
    %s156 = sphi 0, %s154
    %s157 = sphi 0, %s156
    %s171 = sphi 0, %s157
    %s175 = sphi 0, %s175
    %s177 = sphi 0, %s175
    %s178 = sphi 0, %s177
    %s192 = sphi 0, %s178
    %s196 = sphi 0, %s196
    %s198 = sphi 0, %s196
    %s199 = sphi 0, %s198
    %s213 = sphi 0, %s199
    %s219 = sphi 0, %s221
    %s222 = sphi 0, %s219
    %s223 = sphi 0, %s222
    %s239 = sphi 0, %s223
  $region4: #{tpu_custom_call.1} parent=0 // loop_header_branch
    %18 = sbr.rel (%p16) target = $region8
  $region5: #{tpu_custom_call.1} parent=0 // loop_body
    %s20 = ssub.s32 %s15, 1
    %s21 = ssub.s32 %s15, 2
    %s22 = sadd.s32 %s15, 1
    %s23 = ssub.s32 %s15, %s22
    %p24 = scmp.eq.s32.totalorder %s23, 0
    %s26 = sadd.s32 %s25, 1
    %s27 = scalar_select %p24, %s25, %s26
    %p30 = pneg %p24
    %p31 = scmp.eq.s32.totalorder %s15, 1
    %p32 = por %p30, %p31
    %p33 = scmp.ne.s32.totalorder %s25, %s28
    %p34 = scmp.eq.s32.totalorder %s15, 0
    %p35 = por %p33, %p34
    %p36 = scmp.ne.s32.totalorder %s25, %s28
    %p37 = scmp.eq.s32.totalorder %s20, 1
    %p38 = por %p36, %p37
    %p39 = scmp.ne.s32.totalorder %s28, %s29
    %p40 = scmp.eq.s32.totalorder %s20, 0
    %p41 = por %p39, %p40
    %p42 = scmp.ne.s32.totalorder %s28, %s29
    %p43 = scmp.eq.s32.totalorder %s21, 1
    %p44 = por %p42, %p43
    %p46 = scmp.ne.s32.totalorder %s29, %s45
    %p47 = scmp.eq.s32.totalorder %s21, 0
    %p48 = por %p46, %p47
    %s50 = sadd.s32 %s49, 1
    %p53 = scmp.eq.s32.totalorder %s15, 1
    %p54 = scmp.ne.s32.totalorder %s49, %s51
    %p55 = scmp.eq.s32.totalorder %s15, 0
    %p56 = por %p54, %p55
    %p57 = scmp.ne.s32.totalorder %s49, %s51
    %p58 = scmp.eq.s32.totalorder %s20, 1
    %p59 = por %p57, %p58
    %p60 = scmp.ne.s32.totalorder %s51, %s52
    %p61 = scmp.eq.s32.totalorder %s20, 0
    %p62 = por %p60, %p61
    %p63 = scmp.ne.s32.totalorder %s51, %s52
    %p64 = scmp.eq.s32.totalorder %s21, 1
    %p65 = por %p63, %p64
    %p67 = scmp.ne.s32.totalorder %s52, %s66
    %p68 = scmp.eq.s32.totalorder %s21, 0
    %p69 = por %p67, %p68
    %s71 = sadd.s32 %s70, 1
    %p74 = scmp.eq.s32.totalorder %s15, 1
    %p75 = scmp.ne.s32.totalorder %s70, %s72
    %p76 = scmp.eq.s32.totalorder %s15, 0
    %p77 = por %p75, %p76
    %p78 = scmp.ne.s32.totalorder %s70, %s72
    %p79 = scmp.eq.s32.totalorder %s20, 1
    %p80 = por %p78, %p79
    %p81 = scmp.ne.s32.totalorder %s72, %s73
    %p82 = scmp.eq.s32.totalorder %s20, 0
    %p83 = por %p81, %p82
    %p84 = scmp.ne.s32.totalorder %s72, %s73
    %p85 = scmp.eq.s32.totalorder %s21, 1
    %p86 = por %p84, %p85
    %p88 = scmp.ne.s32.totalorder %s73, %s87
    %p89 = scmp.eq.s32.totalorder %s21, 0
    %p90 = por %p88, %p89
    %s92 = sadd.s32 %s91, 1
    %p95 = scmp.eq.s32.totalorder %s15, 1
    %p96 = scmp.ne.s32.totalorder %s91, %s93
    %p97 = scmp.eq.s32.totalorder %s15, 0
    %p98 = por %p96, %p97
    %p99 = scmp.ne.s32.totalorder %s91, %s93
    %p100 = scmp.eq.s32.totalorder %s20, 1
    %p101 = por %p99, %p100
    %p102 = scmp.ne.s32.totalorder %s93, %s94
    %p103 = scmp.eq.s32.totalorder %s20, 0
    %p104 = por %p102, %p103
    %p105 = scmp.ne.s32.totalorder %s93, %s94
    %p106 = scmp.eq.s32.totalorder %s21, 1
    %p107 = por %p105, %p106
    %p109 = scmp.ne.s32.totalorder %s94, %s108
    %p110 = scmp.eq.s32.totalorder %s21, 0
    %p111 = por %p109, %p110
    %s113 = sadd.s32 %s112, 1
    %p116 = scmp.eq.s32.totalorder %s15, 1
    %p117 = scmp.ne.s32.totalorder %s112, %s114
    %p118 = scmp.eq.s32.totalorder %s15, 0
    %p119 = por %p117, %p118
    %p120 = scmp.ne.s32.totalorder %s112, %s114
    %p121 = scmp.eq.s32.totalorder %s20, 1
    %p122 = por %p120, %p121
    %p123 = scmp.ne.s32.totalorder %s114, %s115
    %p124 = scmp.eq.s32.totalorder %s20, 0
    %p125 = por %p123, %p124
    %p126 = scmp.ne.s32.totalorder %s114, %s115
    %p127 = scmp.eq.s32.totalorder %s21, 1
    %p128 = por %p126, %p127
    %p130 = scmp.ne.s32.totalorder %s115, %s129
    %p131 = scmp.eq.s32.totalorder %s21, 0
    %p132 = por %p130, %p131
    %s134 = sadd.s32 %s133, 1
    %p137 = scmp.eq.s32.totalorder %s15, 1
    %p138 = scmp.ne.s32.totalorder %s133, %s135
    %p139 = scmp.eq.s32.totalorder %s15, 0
    %p140 = por %p138, %p139
    %p141 = scmp.ne.s32.totalorder %s133, %s135
    %p142 = scmp.eq.s32.totalorder %s20, 1
    %p143 = por %p141, %p142
    %p144 = scmp.ne.s32.totalorder %s135, %s136
    %p145 = scmp.eq.s32.totalorder %s20, 0
    %p146 = por %p144, %p145
    %p147 = scmp.ne.s32.totalorder %s135, %s136
    %p148 = scmp.eq.s32.totalorder %s21, 1
    %p149 = por %p147, %p148
    %p151 = scmp.ne.s32.totalorder %s136, %s150
    %p152 = scmp.eq.s32.totalorder %s21, 0
    %p153 = por %p151, %p152
    %s155 = sadd.s32 %s154, 1
    %p158 = scmp.eq.s32.totalorder %s15, 1
    %p159 = scmp.ne.s32.totalorder %s154, %s156
    %p160 = scmp.eq.s32.totalorder %s15, 0
    %p161 = por %p159, %p160
    %p162 = scmp.ne.s32.totalorder %s154, %s156
    %p163 = scmp.eq.s32.totalorder %s20, 1
    %p164 = por %p162, %p163
    %p165 = scmp.ne.s32.totalorder %s156, %s157
    %p166 = scmp.eq.s32.totalorder %s20, 0
    %p167 = por %p165, %p166
    %p168 = scmp.ne.s32.totalorder %s156, %s157
    %p169 = scmp.eq.s32.totalorder %s21, 1
    %p170 = por %p168, %p169
    %p172 = scmp.ne.s32.totalorder %s157, %s171
    %p173 = scmp.eq.s32.totalorder %s21, 0
    %p174 = por %p172, %p173
    %s176 = sadd.s32 %s175, 1
    %p179 = scmp.eq.s32.totalorder %s15, 1
    %p180 = scmp.ne.s32.totalorder %s175, %s177
    %p181 = scmp.eq.s32.totalorder %s15, 0
    %p182 = por %p180, %p181
    %p183 = scmp.ne.s32.totalorder %s175, %s177
    %p184 = scmp.eq.s32.totalorder %s20, 1
    %p185 = por %p183, %p184
    %p186 = scmp.ne.s32.totalorder %s177, %s178
    %p187 = scmp.eq.s32.totalorder %s20, 0
    %p188 = por %p186, %p187
    %p189 = scmp.ne.s32.totalorder %s177, %s178
    %p190 = scmp.eq.s32.totalorder %s21, 1
    %p191 = por %p189, %p190
    %p193 = scmp.ne.s32.totalorder %s178, %s192
    %p194 = scmp.eq.s32.totalorder %s21, 0
    %p195 = por %p193, %p194
    %s197 = sadd.s32 %s196, 1
    %p200 = scmp.eq.s32.totalorder %s15, 1
    %p201 = scmp.ne.s32.totalorder %s196, %s198
    %p202 = scmp.eq.s32.totalorder %s15, 0
    %p203 = por %p201, %p202
    %p204 = scmp.ne.s32.totalorder %s196, %s198
    %p205 = scmp.eq.s32.totalorder %s20, 1
    %p206 = por %p204, %p205
    %p207 = scmp.ne.s32.totalorder %s198, %s199
    %p208 = scmp.eq.s32.totalorder %s20, 0
    %p209 = por %p207, %p208
    %p210 = scmp.ne.s32.totalorder %s198, %s199
    %p211 = scmp.eq.s32.totalorder %s21, 1
    %p212 = por %p210, %p211
    %p214 = scmp.ne.s32.totalorder %s199, %s213
    %p215 = scmp.eq.s32.totalorder %s21, 0
    %p216 = por %p214, %p215
    %s217 = ssub.s32 %s15, %s22
    %p218 = scmp.eq.s32.totalorder %s217, 0
    %s220 = sadd.s32 %s219, 1
    %s221 = scalar_select %p218, %s219, %s220
    %p224 = pneg %p218
    %p225 = scmp.eq.s32.totalorder %s15, 1
    %p226 = por %p224, %p225
    %p227 = scmp.ne.s32.totalorder %s219, %s222
    %p228 = scmp.eq.s32.totalorder %s15, 0
    %p229 = por %p227, %p228
    %p230 = scmp.ne.s32.totalorder %s219, %s222
    %p231 = scmp.eq.s32.totalorder %s20, 1
    %p232 = por %p230, %p231
    %p233 = scmp.ne.s32.totalorder %s222, %s223
    %p234 = scmp.eq.s32.totalorder %s20, 0
    %p235 = por %p233, %p234
    %p236 = scmp.ne.s32.totalorder %s222, %s223
    %p237 = scmp.eq.s32.totalorder %s21, 1
    %p238 = por %p236, %p237
    %p240 = scmp.ne.s32.totalorder %s223, %s239
    %p241 = scmp.eq.s32.totalorder %s21, 0
    %p242 = por %p240, %p241
    %p243 = scmp.le.s32.totalorder 1, %s15
    %p244 = scmp.lt.s32.totalorder %s15, 3
    %p245 = pnand %p243, %p244
    %p246 = pneg %p245
    // Predicated region
    $region9: #{tpu_custom_call.1} parent=5 // pred_check
      _
    $region10: #{tpu_custom_call.1} parent=5 // pred_check_branch
      %248 = sbr.rel (%p245) target = $region12
    $region11: #{tpu_custom_call.1} parent=5 // pred_region
      %s249 = ssub.s32 %s15, 1
      // Predicated region
      $region13: #{tpu_custom_call.1} parent=11 // pred_check
        %p250 = pneg %p62
      $region14: #{tpu_custom_call.1} parent=11 // pred_check_branch
        %252 = sbr.rel (%p250) target = $region16
      $region15: #{tpu_custom_call.1} parent=11 // pred_region
        _
      $region16: #{tpu_custom_call.1} parent=11 // pred_fallthru
        _
      // Predicated region
      $region17: #{tpu_custom_call.1} parent=11 // pred_check
        %p253 = pneg %p83
      $region18: #{tpu_custom_call.1} parent=11 // pred_check_branch
        %255 = sbr.rel (%p253) target = $region20
      $region19: #{tpu_custom_call.1} parent=11 // pred_region
        _
      $region20: #{tpu_custom_call.1} parent=11 // pred_fallthru
        _
      // Predicated region
      $region21: #{tpu_custom_call.1} parent=11 // pred_check
        %p256 = pneg %p104
      $region22: #{tpu_custom_call.1} parent=11 // pred_check_branch
        %258 = sbr.rel (%p256) target = $region24
      $region23: #{tpu_custom_call.1} parent=11 // pred_region
        _
      $region24: #{tpu_custom_call.1} parent=11 // pred_fallthru
        _
      // Predicated region
      $region25: #{tpu_custom_call.1} parent=11 // pred_check
        %p259 = pneg %p125
      $region26: #{tpu_custom_call.1} parent=11 // pred_check_branch
        %261 = sbr.rel (%p259) target = $region28
      $region27: #{tpu_custom_call.1} parent=11 // pred_region
        _
      $region28: #{tpu_custom_call.1} parent=11 // pred_fallthru
        _
      // Predicated region
      $region29: #{tpu_custom_call.1} parent=11 // pred_check
        %p262 = pneg %p146
      $region30: #{tpu_custom_call.1} parent=11 // pred_check_branch
        %264 = sbr.rel (%p262) target = $region32
      $region31: #{tpu_custom_call.1} parent=11 // pred_region
        _
      $region32: #{tpu_custom_call.1} parent=11 // pred_fallthru
        _
      // Predicated region
      $region33: #{tpu_custom_call.1} parent=11 // pred_check
        %p265 = pneg %p167
      $region34: #{tpu_custom_call.1} parent=11 // pred_check_branch
        %267 = sbr.rel (%p265) target = $region36
      $region35: #{tpu_custom_call.1} parent=11 // pred_region
        _
      $region36: #{tpu_custom_call.1} parent=11 // pred_fallthru
        _
      // Predicated region
      $region37: #{tpu_custom_call.1} parent=11 // pred_check
        %p268 = pneg %p188
      $region38: #{tpu_custom_call.1} parent=11 // pred_check_branch
        %270 = sbr.rel (%p268) target = $region40
      $region39: #{tpu_custom_call.1} parent=11 // pred_region
        _
      $region40: #{tpu_custom_call.1} parent=11 // pred_fallthru
        _
      // Predicated region
      $region41: #{tpu_custom_call.1} parent=11 // pred_check
        %p271 = pneg %p209
      $region42: #{tpu_custom_call.1} parent=11 // pred_check_branch
        %273 = sbr.rel (%p271) target = $region44
      $region43: #{tpu_custom_call.1} parent=11 // pred_region
        _
      $region44: #{tpu_custom_call.1} parent=11 // pred_fallthru
        _
    $region12: #{tpu_custom_call.1} parent=5 // pred_fallthru
      _
    %p274 = scmp.lt.s32.totalorder %s15, 2
    // Predicated region
    $region45: #{tpu_custom_call.1} parent=5 // pred_check
      %p275 = pneg %p274
    $region46: #{tpu_custom_call.1} parent=5 // pred_check_branch
      %277 = sbr.rel (%p275) target = $region48
    $region47: #{tpu_custom_call.1} parent=5 // pred_region
      // Predicated region
      $region49: #{tpu_custom_call.1} parent=47 // pred_check
        %p278 = pneg %p35
      $region50: #{tpu_custom_call.1} parent=47 // pred_check_branch
        %280 = sbr.rel (%p278) target = $region52
      $region51: #{tpu_custom_call.1} parent=47 // pred_region
        %s281 = smul.u32 8, %s15
        %p282 = scmp.lt.s32.totalorder %s281, 15
        %s283 = scalar_select %p282, %s281, 15
        %s284 = smul.addr %s283, 8
        %s285 = scalar_lea.vmem %s0, %s284
        %s286 = smul.u32 8, %s15
      $region52: #{tpu_custom_call.1} parent=47 // pred_fallthru
        _
    $region48: #{tpu_custom_call.1} parent=5 // pred_fallthru
      _
    %p287 = scmp.le.s32.totalorder 1, %s15
    %p288 = scmp.lt.s32.totalorder %s15, 3
    %p289 = pnand %p287, %p288
    %p290 = pneg %p289
    // Predicated region
    $region53: #{tpu_custom_call.1} parent=5 // pred_check
      _
    $region54: #{tpu_custom_call.1} parent=5 // pred_check_branch
      %292 = sbr.rel (%p289) target = $region56
    $region55: #{tpu_custom_call.1} parent=5 // pred_region
      %s293 = ssub.s32 %s15, 1
      %s294 = smul.u32 8, %s20
      %p295 = scmp.lt.s32.totalorder %s294, 15
      %s296 = scalar_select %p295, %s294, 15
      %s297 = smul.addr %s296, 8
      %s298 = scalar_lea.vmem %s0, %s297
      %p299 = pneg %p41
      %p300 = pneg %p38
      %p301 = pneg %p62
      %p302 = pneg %p59
      %p303 = pneg %p83
      %p304 = pneg %p80
      %p305 = pneg %p104
      %p306 = pneg %p101
      %p307 = pneg %p125
      %p308 = pneg %p122
      %p309 = pneg %p146
      %p310 = pneg %p143
      %p311 = pneg %p167
      %p312 = pneg %p164
      %p313 = pneg %p188
      %p314 = pneg %p185
      %p315 = pneg %p209
      %p316 = pneg %p206
      %p317 = pneg %p235
      %p318 = pneg %p232
      %p319 = scmp.lt.s32.totalorder %s20, 1
      %s320 = scalar_select %p319, %s20, 1
      %s321 = smul.addr %s320, 8
      %s322 = scalar_lea.vmem %s9, %s321
      %s323 = smul.u32 8, %s20
      %p324 = scmp.lt.s32.totalorder %s323, 15
      %s325 = scalar_select %p324, %s323, 15
      %s326 = smul.addr %s325, 8
      %s327 = scalar_lea.vmem %s0, %s326
      %s328 = smul.u32 8, %s20
      %p329 = scmp.lt.s32.totalorder %s20, 1
      %s330 = scalar_select %p329, %s20, 1
      %s331 = smul.addr %s330, 8
      %s332 = scalar_lea.vmem %s9, %s331
      %v334 = vld [vmem:[%s2] sm:$0x1]
      %v335 = vld [vmem:[%s2 + $0x1] sm:$0x1]
      %v336 = vld [vmem:[%s8] sm:$0x1]
      %v337 = vld [vmem:[%s8 + $0x1] sm:$0x1]
      %v338 = vld [vmem:[%s327] sm:$0xff]
      %v339 = vld [vmem:[%s327 + $0x8] sm:$0xff]
      %v340 = vld [vmem:[%s327 + $0x10] sm:$0xff]
      %v341 = vld [vmem:[%s327 + $0x18] sm:$0xff]
      %v342 = vld [vmem:[%s327 + $0x20] sm:$0xff]
      %v343 = vld [vmem:[%s327 + $0x28] sm:$0xff]
      %v344 = vld [vmem:[%s327 + $0x30] sm:$0xff]
      %v345 = vld [vmem:[%s327 + $0x38] sm:$0xff]
      %v346 = vpack.c.bf16 %v339, %v338
      %v347 = vpack.c.bf16 %v341, %v340
      %v348 = vpack.c.bf16 %v343, %v342
      %v349 = vpack.c.bf16 %v345, %v344
      %v350 = vld [vmem:[%s1] sm:$0xf]
      %v351 = vld [vmem:[%s1 + $0x4] sm:$0xf]
      %v352 = vld [vmem:[%s1 + $0x8] sm:$0xf]
      %v353 = vld [vmem:[%s1 + $0xc] sm:$0xf]
      %v354 = vlaneseq
      %v355 = vshrl.u32 %v354, 7
      %v356 = vsub.s32 0, %v355
      %v357 = vrot.slane %v334, %v356
      %v362 = vunpack.c.l.b16 %v350
      %v363 = vunpack.c.l.b16 %v351
      %v364 = vunpack.c.l.b16 %v352
      %v365 = vunpack.c.l.b16 %v353
      %v366 = vpack.c.b16 %v363, %v362
      %v367 = vpack.c.b16 %v365, %v364
      %vm370 = vcmask 261120
      %v372 = vsel %vm370, %v346, 0
      %v375 = vsel %vm370, %v347, 0
      %v378 = vsel %vm370, %v348, 0
      %v381 = vsel %vm370, %v349, 0
      %383 = vmatprep.subr.bf16.mxu0 0
      %384 = vmatpush1.bf16.msra.mxu0 %v366
      %385 = vmatprep.subr.bf16.mxu0 0
      %386 = vmatpush1.bf16.msra.mxu0 %v367
      %387 = vmatprep.subr.bf16.mxu0 0
      %388 = vmatpush1.bf16.msra.mxu0 0
      %389 = vmatprep.subr.bf16.mxu0 0
      %390 = vmatpush1.bf16.msra.mxu0 0
      %391 = vmatprep.subr.bf16.mxu0 0
      %392 = vmatpush1.bf16.msra.mxu0 0
      %393 = vmatprep.subr.bf16.mxu0 0
      %394 = vmatpush1.bf16.msra.mxu0 0
      %395 = vmatprep.subr.bf16.mxu0 0
      %396 = vmatpush1.bf16.msra.mxu0 0
      %397 = vmatprep.subr.bf16.mxu0 0
      %398 = vmatpush1.bf16.msra.mxu0 0
      %399 = vmatprep.subr.bf16.mxu0 0
      %400 = vmatpush1.bf16.msra.mxu0 0
      %401 = vmatprep.subr.bf16.mxu0 0
      %402 = vmatpush1.bf16.msra.mxu0 0
      %403 = vmatprep.subr.bf16.mxu0 0
      %404 = vmatpush1.bf16.msra.mxu0 0
      %405 = vmatprep.subr.bf16.mxu0 0
      %406 = vmatpush1.bf16.msra.mxu0 0
      %407 = vmatprep.subr.bf16.mxu0 0
      %408 = vmatpush1.bf16.msra.mxu0 0
      %409 = vmatprep.subr.bf16.mxu0 0
      %410 = vmatpush1.bf16.msra.mxu0 0
      %411 = vmatprep.subr.bf16.mxu0 0
      %412 = vmatpush1.bf16.msra.mxu0 0
      %413 = vmatprep.subr.bf16.mxu0 0
      %414 = vmatpush1.bf16.msra.mxu0 0
      %415 = vmatprep.mubr.bf16.mxu0 0
      %416 = vmatmul.mubr.bf16.gmra.mrb[0].mxu0 %v372
      %v417 = vpop.f32.mrb[0].mxu0
      %v418 = vadd.f32 %v357, %v417
      %v419 = vpop.f32.mrb[0].mxu0
      %v420 = vpop.f32.mrb[0].mxu0
      %v421 = vadd.f32 %v357, %v420
      %v422 = vpop.f32.mrb[0].mxu0
      %423 = vmatprep.mubr.bf16.mxu0 0
      %424 = vmatmul.mubr.bf16.gmra.mrb[0].mxu0 %v375
      %v425 = vpop.f32.mrb[0].mxu0
      %v426 = vadd.f32 %v357, %v425
      %v427 = vpop.f32.mrb[0].mxu0
      %v428 = vpop.f32.mrb[0].mxu0
      %v429 = vadd.f32 %v357, %v428
      %v430 = vpop.f32.mrb[0].mxu0
      %431 = vmatprep.mubr.bf16.mxu0 0
      %432 = vmatmul.mubr.bf16.gmra.mrb[0].mxu0 %v378
      %v433 = vpop.f32.mrb[0].mxu0
      %v434 = vadd.f32 %v357, %v433
      %v435 = vpop.f32.mrb[0].mxu0
      %v436 = vpop.f32.mrb[0].mxu0
      %v437 = vadd.f32 %v357, %v436
      %v438 = vpop.f32.mrb[0].mxu0
      %439 = vmatprep.mubr.bf16.mxu0 0
      %440 = vmatmul.mubr.bf16.gmra.mrb[0].mxu0 %v381
      %v441 = vpop.f32.mrb[0].mxu0
      %v442 = vadd.f32 %v357, %v441
      %v443 = vpop.f32.mrb[0].mxu0
      %v444 = vpop.f32.mrb[0].mxu0
      %v445 = vadd.f32 %v357, %v444
      %v446 = vpop.f32.mrb[0].mxu0
      %447 = vdwg.mxu0
      %v448 = vld [vmem:[%s3] sm:$0xff]
      %v449 = vld [vmem:[%s3 + $0x8] sm:$0xff]
      %v450 = vld [vmem:[%s3 + $0x10] sm:$0xff]
      %v451 = vld [vmem:[%s3 + $0x18] sm:$0xff]
      %v452 = vld [vmem:[%s3 + $0x20] sm:$0xff]
      %v453 = vld [vmem:[%s3 + $0x28] sm:$0xff]
      %v454 = vld [vmem:[%s3 + $0x30] sm:$0xff]
      %v455 = vld [vmem:[%s3 + $0x38] sm:$0xff]
      %v456 = vld [vmem:[%s3 + $0x40] sm:$0xff]
      %v457 = vld [vmem:[%s3 + $0x48] sm:$0xff]
      %v458 = vld [vmem:[%s3 + $0x50] sm:$0xff]
      %v459 = vld [vmem:[%s3 + $0x58] sm:$0xff]
      %v460 = vld [vmem:[%s3 + $0x60] sm:$0xff]
      %v461 = vld [vmem:[%s3 + $0x68] sm:$0xff]
      %v462 = vld [vmem:[%s3 + $0x70] sm:$0xff]
      %v463 = vld [vmem:[%s3 + $0x78] sm:$0xff]
      %464 = vmatprep.subr.mxu0 0.0
      %465 = vmatpush1.msra.mxu0 %v448
      %466 = vmatprep.subr.mxu0 0.0
      %467 = vmatpush1.msra.mxu0 %v449
      %468 = vmatprep.subr.mxu0 0.0
      %469 = vmatpush1.msra.mxu0 %v450
      %470 = vmatprep.subr.mxu0 0.0
      %471 = vmatpush1.msra.mxu0 %v451
      %472 = vmatprep.subr.mxu0 0.0
      %473 = vmatpush1.msra.mxu0 %v452
      %474 = vmatprep.subr.mxu0 0.0
      %475 = vmatpush1.msra.mxu0 %v453
      %476 = vmatprep.subr.mxu0 0.0
      %477 = vmatpush1.msra.mxu0 %v454
      %478 = vmatprep.subr.mxu0 0.0
      %479 = vmatpush1.msra.mxu0 %v455
      %480 = vmatprep.subr.mxu0 0.0
      %481 = vmatpush1.msra.mxu0 %v456
      %482 = vmatprep.subr.mxu0 0.0
      %483 = vmatpush1.msra.mxu0 %v457
      %484 = vmatprep.subr.mxu0 0.0
      %485 = vmatpush1.msra.mxu0 %v458
      %486 = vmatprep.subr.mxu0 0.0
      %487 = vmatpush1.msra.mxu0 %v459
      %488 = vmatprep.subr.mxu0 0.0
      %489 = vmatpush1.msra.mxu0 %v460
      %490 = vmatprep.subr.mxu0 0.0
      %491 = vmatpush1.msra.mxu0 %v461
      %492 = vmatprep.subr.mxu0 0.0
      %493 = vmatpush1.msra.mxu0 %v462
      %494 = vmatprep.subr.mxu0 0.0
      %495 = vmatpush1.msra.mxu0 %v463
      %496 = vmatprep.subr.mxu0 0.0
      %497 = vmatpush1.msra.mxu0 0.0
      %498 = vmatprep.subr.mxu0 0.0
      %499 = vmatpush1.msra.mxu0 0.0
      %500 = vmatprep.subr.mxu0 0.0
      %501 = vmatpush1.msra.mxu0 0.0
      %502 = vmatprep.subr.mxu0 0.0
      %503 = vmatpush1.msra.mxu0 0.0
      %504 = vmatprep.subr.mxu0 0.0
      %505 = vmatpush1.msra.mxu0 0.0
      %506 = vmatprep.subr.mxu0 0.0
      %507 = vmatpush1.msra.mxu0 0.0
      %508 = vmatprep.subr.mxu0 0.0
      %509 = vmatpush1.msra.mxu0 0.0
      %510 = vmatprep.subr.mxu0 0.0
      %511 = vmatpush1.msra.mxu0 0.0
      %512 = vmatprep.subr.mxu0 0.0
      %513 = vmatpush1.msra.mxu0 0.0
      %514 = vmatprep.subr.mxu0 0.0
      %515 = vmatpush1.msra.mxu0 0.0
      %516 = vmatprep.subr.mxu0 0.0
      %517 = vmatpush1.msra.mxu0 0.0
      %518 = vmatprep.subr.mxu0 0.0
      %519 = vmatpush1.msra.mxu0 0.0
      %520 = vmatprep.subr.mxu0 0.0
      %521 = vmatpush1.msra.mxu0 0.0
      %522 = vmatprep.subr.mxu0 0.0
      %523 = vmatpush1.msra.mxu0 0.0
      %524 = vmatprep.subr.mxu0 0.0
      %525 = vmatpush1.msra.mxu0 0.0
      %526 = vmatprep.subr.mxu0 0.0
      %527 = vmatpush1.msra.mxu0 0.0
      %528 = vmatprep.mubr.f32.mxu0 0.0
      %529 = vmatmul.mubr.f32.gmra.mrb[0].mxu0 %v418
      %v530 = vpop.f32.mrb[0].mxu0
      %v531 = vadd.f32 0.0, %v530
      %v532 = vpop.f32.mrb[0].mxu0
      %533 = vmatprep.mubr.f32.mxu0 0.0
      %534 = vmatmul.mubr.f32.gmra.mrb[0].mxu0 %v421
      %v535 = vpop.f32.mrb[0].mxu0
      %v536 = vadd.f32 0.0, %v535
      %v537 = vpop.f32.mrb[0].mxu0
      %538 = vmatprep.mubr.f32.mxu0 0.0
      %539 = vmatmul.mubr.f32.gmra.mrb[0].mxu0 %v426
      %v540 = vpop.f32.mrb[0].mxu0
      %v541 = vadd.f32 0.0, %v540
      %v542 = vpop.f32.mrb[0].mxu0
      %543 = vmatprep.mubr.f32.mxu0 0.0
      %544 = vmatmul.mubr.f32.gmra.mrb[0].mxu0 %v429
      %v545 = vpop.f32.mrb[0].mxu0
      %v546 = vadd.f32 0.0, %v545
      %v547 = vpop.f32.mrb[0].mxu0
      %548 = vmatprep.mubr.f32.mxu0 0.0
      %549 = vmatmul.mubr.f32.gmra.mrb[0].mxu0 %v434
      %v550 = vpop.f32.mrb[0].mxu0
      %v551 = vadd.f32 0.0, %v550
      %v552 = vpop.f32.mrb[0].mxu0
      %553 = vmatprep.mubr.f32.mxu0 0.0
      %554 = vmatmul.mubr.f32.gmra.mrb[0].mxu0 %v437
      %v555 = vpop.f32.mrb[0].mxu0
      %v556 = vadd.f32 0.0, %v555
      %v557 = vpop.f32.mrb[0].mxu0
      %558 = vmatprep.mubr.f32.mxu0 0.0
      %559 = vmatmul.mubr.f32.gmra.mrb[0].mxu0 %v442
      %v560 = vpop.f32.mrb[0].mxu0
      %v561 = vadd.f32 0.0, %v560
      %v562 = vpop.f32.mrb[0].mxu0
      %563 = vmatprep.mubr.f32.mxu0 0.0
      %564 = vmatmul.mubr.f32.gmra.mrb[0].mxu0 %v445
      %v565 = vpop.f32.mrb[0].mxu0
      %v566 = vadd.f32 0.0, %v565
      %v567 = vpop.f32.mrb[0].mxu0
      %568 = vdwg.mxu0
      %v569 = vld [vmem:[%s4] sm:$0xf]
      %vm570 = vcmask 31744
      %v572 = vsel %vm570, %v531, 0
      %v575 = vsel %vm570, %v536, 0
      %v578 = vsel %vm570, %v541, 0
      %v581 = vsel %vm570, %v546, 0
      %v584 = vsel %vm570, %v551, 0
      %v587 = vsel %vm570, %v556, 0
      %v590 = vsel %vm570, %v561, 0
      %v593 = vsel %vm570, %v566, 0
      %vm595 = vcmask 1043456
      %v597 = vsel %vm595, %v569, 0
      %599 = vmatprep.subr.mxu0 0.0
      %600 = vmatpush1.msra.mxu0 %v597
      %601 = vmatprep.subr.mxu0 0.0
      %602 = vmatpush1.msra.mxu0 0.0
      %603 = vmatprep.subr.mxu0 0.0
      %604 = vmatpush1.msra.mxu0 0.0
      %605 = vmatprep.subr.mxu0 0.0
      %606 = vmatpush1.msra.mxu0 0.0
      %607 = vmatprep.subr.mxu0 0.0
      %608 = vmatpush1.msra.mxu0 0.0
      %609 = vmatprep.subr.mxu0 0.0
      %610 = vmatpush1.msra.mxu0 0.0
      %611 = vmatprep.subr.mxu0 0.0
      %612 = vmatpush1.msra.mxu0 0.0
      %613 = vmatprep.subr.mxu0 0.0
      %614 = vmatpush1.msra.mxu0 0.0
      %615 = vmatprep.subr.mxu0 0.0
      %616 = vmatpush1.msra.mxu0 0.0
      %617 = vmatprep.subr.mxu0 0.0
      %618 = vmatpush1.msra.mxu0 0.0
      %619 = vmatprep.subr.mxu0 0.0
      %620 = vmatpush1.msra.mxu0 0.0
      %621 = vmatprep.subr.mxu0 0.0
      %622 = vmatpush1.msra.mxu0 0.0
      %623 = vmatprep.subr.mxu0 0.0
      %624 = vmatpush1.msra.mxu0 0.0
      %625 = vmatprep.subr.mxu0 0.0
      %626 = vmatpush1.msra.mxu0 0.0
      %627 = vmatprep.subr.mxu0 0.0
      %628 = vmatpush1.msra.mxu0 0.0
      %629 = vmatprep.subr.mxu0 0.0
      %630 = vmatpush1.msra.mxu0 0.0
      %631 = vmatprep.subr.mxu0 0.0
      %632 = vmatpush1.msra.mxu0 0.0
      %633 = vmatprep.subr.mxu0 0.0
      %634 = vmatpush1.msra.mxu0 0.0
      %635 = vmatprep.subr.mxu0 0.0
      %636 = vmatpush1.msra.mxu0 0.0
      %637 = vmatprep.subr.mxu0 0.0
      %638 = vmatpush1.msra.mxu0 0.0
      %639 = vmatprep.subr.mxu0 0.0
      %640 = vmatpush1.msra.mxu0 0.0
      %641 = vmatprep.subr.mxu0 0.0
      %642 = vmatpush1.msra.mxu0 0.0
      %643 = vmatprep.subr.mxu0 0.0
      %644 = vmatpush1.msra.mxu0 0.0
      %645 = vmatprep.subr.mxu0 0.0
      %646 = vmatpush1.msra.mxu0 0.0
      %647 = vmatprep.subr.mxu0 0.0
      %648 = vmatpush1.msra.mxu0 0.0
      %649 = vmatprep.subr.mxu0 0.0
      %650 = vmatpush1.msra.mxu0 0.0
      %651 = vmatprep.subr.mxu0 0.0
      %652 = vmatpush1.msra.mxu0 0.0
      %653 = vmatprep.subr.mxu0 0.0
      %654 = vmatpush1.msra.mxu0 0.0
      %655 = vmatprep.subr.mxu0 0.0
      %656 = vmatpush1.msra.mxu0 0.0
      %657 = vmatprep.subr.mxu0 0.0
      %658 = vmatpush1.msra.mxu0 0.0
      %659 = vmatprep.subr.mxu0 0.0
      %660 = vmatpush1.msra.mxu0 0.0
      %661 = vmatprep.subr.mxu0 0.0
      %662 = vmatpush1.msra.mxu0 0.0
      %663 = vmatprep.mubr.f32.mxu0 0.0
      %664 = vmatmul.mubr.f32.gmra.mrb[0].mxu0 %v572
      %v665 = vpop.f32.mrb[0].mxu0
      %v666 = vadd.f32 0.0, %v665
      %v667 = vpop.f32.mrb[0].mxu0
      %668 = vmatprep.mubr.f32.mxu0 0.0
      %669 = vmatmul.mubr.f32.gmra.mrb[0].mxu0 %v575
      %v670 = vpop.f32.mrb[0].mxu0
      %v671 = vadd.f32 0.0, %v670
      %v672 = vpop.f32.mrb[0].mxu0
      %673 = vmatprep.mubr.f32.mxu0 0.0
      %674 = vmatmul.mubr.f32.gmra.mrb[0].mxu0 %v578
      %v675 = vpop.f32.mrb[0].mxu0
      %v676 = vadd.f32 0.0, %v675
      %v677 = vpop.f32.mrb[0].mxu0
      %678 = vmatprep.mubr.f32.mxu0 0.0
      %679 = vmatmul.mubr.f32.gmra.mrb[0].mxu0 %v581
      %v680 = vpop.f32.mrb[0].mxu0
      %v681 = vadd.f32 0.0, %v680
      %v682 = vpop.f32.mrb[0].mxu0
      %683 = vmatprep.mubr.f32.mxu0 0.0
      %684 = vmatmul.mubr.f32.gmra.mrb[0].mxu0 %v584
      %v685 = vpop.f32.mrb[0].mxu0
      %v686 = vadd.f32 0.0, %v685
      %v687 = vpop.f32.mrb[0].mxu0
      %688 = vmatprep.mubr.f32.mxu0 0.0
      %689 = vmatmul.mubr.f32.gmra.mrb[0].mxu0 %v587
      %v690 = vpop.f32.mrb[0].mxu0
      %v691 = vadd.f32 0.0, %v690
      %v692 = vpop.f32.mrb[0].mxu0
      %693 = vmatprep.mubr.f32.mxu0 0.0
      %694 = vmatmul.mubr.f32.gmra.mrb[0].mxu0 %v590
      %v695 = vpop.f32.mrb[0].mxu0
      %v696 = vadd.f32 0.0, %v695
      %v697 = vpop.f32.mrb[0].mxu0
      %698 = vmatprep.mubr.f32.mxu0 0.0
      %699 = vmatmul.mubr.f32.gmra.mrb[0].mxu0 %v593
      %v700 = vpop.f32.mrb[0].mxu0
      %v701 = vadd.f32 0.0, %v700
      %v702 = vpop.f32.mrb[0].mxu0
      %703 = vdwg.mxu0
      %v704 = vsub.f32 %v418, %v666
      %v705 = vsub.f32 %v421, %v671
      %v706 = vsub.f32 %v426, %v676
      %v707 = vsub.f32 %v429, %v681
      %v708 = vsub.f32 %v434, %v686
      %v709 = vsub.f32 %v437, %v691
      %v710 = vsub.f32 %v442, %v696
      %v711 = vsub.f32 %v445, %v701
      %v712 = vmul.f32 %v704, %v704
      %v713 = vmul.f32 %v705, %v705
      %v714 = vmul.f32 %v706, %v706
      %v715 = vmul.f32 %v707, %v707
      %v716 = vmul.f32 %v708, %v708
      %v717 = vmul.f32 %v709, %v709
      %v718 = vmul.f32 %v710, %v710
      %v719 = vmul.f32 %v711, %v711
      %720 = vmatprep.subr.mxu0 0.0
      %721 = vmatpush1.msra.mxu0 %v448
      %722 = vmatprep.subr.mxu0 0.0
      %723 = vmatpush1.msra.mxu0 %v449
      %724 = vmatprep.subr.mxu0 0.0
      %725 = vmatpush1.msra.mxu0 %v450
      %726 = vmatprep.subr.mxu0 0.0
      %727 = vmatpush1.msra.mxu0 %v451
      %728 = vmatprep.subr.mxu0 0.0
      %729 = vmatpush1.msra.mxu0 %v452
      %730 = vmatprep.subr.mxu0 0.0
      %731 = vmatpush1.msra.mxu0 %v453
      %732 = vmatprep.subr.mxu0 0.0
      %733 = vmatpush1.msra.mxu0 %v454
      %734 = vmatprep.subr.mxu0 0.0
      %735 = vmatpush1.msra.mxu0 %v455
      %736 = vmatprep.subr.mxu0 0.0
      %737 = vmatpush1.msra.mxu0 %v456
      %738 = vmatprep.subr.mxu0 0.0
      %739 = vmatpush1.msra.mxu0 %v457
      %740 = vmatprep.subr.mxu0 0.0
      %741 = vmatpush1.msra.mxu0 %v458
      %742 = vmatprep.subr.mxu0 0.0
      %743 = vmatpush1.msra.mxu0 %v459
      %744 = vmatprep.subr.mxu0 0.0
      %745 = vmatpush1.msra.mxu0 %v460
      %746 = vmatprep.subr.mxu0 0.0
      %747 = vmatpush1.msra.mxu0 %v461
      %748 = vmatprep.subr.mxu0 0.0
      %749 = vmatpush1.msra.mxu0 %v462
      %750 = vmatprep.subr.mxu0 0.0
      %751 = vmatpush1.msra.mxu0 %v463
      %752 = vmatprep.subr.mxu0 0.0
      %753 = vmatpush1.msra.mxu0 0.0
      %754 = vmatprep.subr.mxu0 0.0
      %755 = vmatpush1.msra.mxu0 0.0
      %756 = vmatprep.subr.mxu0 0.0
      %757 = vmatpush1.msra.mxu0 0.0
      %758 = vmatprep.subr.mxu0 0.0
      %759 = vmatpush1.msra.mxu0 0.0
      %760 = vmatprep.subr.mxu0 0.0
      %761 = vmatpush1.msra.mxu0 0.0
      %762 = vmatprep.subr.mxu0 0.0
      %763 = vmatpush1.msra.mxu0 0.0
      %764 = vmatprep.subr.mxu0 0.0
      %765 = vmatpush1.msra.mxu0 0.0
      %766 = vmatprep.subr.mxu0 0.0
      %767 = vmatpush1.msra.mxu0 0.0
      %768 = vmatprep.subr.mxu0 0.0
      %769 = vmatpush1.msra.mxu0 0.0
      %770 = vmatprep.subr.mxu0 0.0
      %771 = vmatpush1.msra.mxu0 0.0
      %772 = vmatprep.subr.mxu0 0.0
      %773 = vmatpush1.msra.mxu0 0.0
      %774 = vmatprep.subr.mxu0 0.0
      %775 = vmatpush1.msra.mxu0 0.0
      %776 = vmatprep.subr.mxu0 0.0
      %777 = vmatpush1.msra.mxu0 0.0
      %778 = vmatprep.subr.mxu0 0.0
      %779 = vmatpush1.msra.mxu0 0.0
      %780 = vmatprep.subr.mxu0 0.0
      %781 = vmatpush1.msra.mxu0 0.0
      %782 = vmatprep.subr.mxu0 0.0
      %783 = vmatpush1.msra.mxu0 0.0
      %784 = vmatprep.mubr.f32.mxu0 0.0
      %785 = vmatmul.mubr.f32.gmra.mrb[0].mxu0 %v712
      %v786 = vpop.f32.mrb[0].mxu0
      %v787 = vadd.f32 1e-05, %v786
      %v788 = vpop.f32.mrb[0].mxu0
      %789 = vmatprep.mubr.f32.mxu0 0.0
      %790 = vmatmul.mubr.f32.gmra.mrb[0].mxu0 %v713
      %v791 = vpop.f32.mrb[0].mxu0
      %v792 = vadd.f32 1e-05, %v791
      %v793 = vpop.f32.mrb[0].mxu0
      %794 = vmatprep.mubr.f32.mxu0 0.0
      %795 = vmatmul.mubr.f32.gmra.mrb[0].mxu0 %v714
      %v796 = vpop.f32.mrb[0].mxu0
      %v797 = vadd.f32 1e-05, %v796
      %v798 = vpop.f32.mrb[0].mxu0
      %799 = vmatprep.mubr.f32.mxu0 0.0
      %800 = vmatmul.mubr.f32.gmra.mrb[0].mxu0 %v715
      %v801 = vpop.f32.mrb[0].mxu0
      %v802 = vadd.f32 1e-05, %v801
      %v803 = vpop.f32.mrb[0].mxu0
      %804 = vmatprep.mubr.f32.mxu0 0.0
      %805 = vmatmul.mubr.f32.gmra.mrb[0].mxu0 %v716
      %v806 = vpop.f32.mrb[0].mxu0
      %v807 = vadd.f32 1e-05, %v806
      %v808 = vpop.f32.mrb[0].mxu0
      %809 = vmatprep.mubr.f32.mxu0 0.0
      %810 = vmatmul.mubr.f32.gmra.mrb[0].mxu0 %v717
      %v811 = vpop.f32.mrb[0].mxu0
      %v812 = vadd.f32 1e-05, %v811
      %v813 = vpop.f32.mrb[0].mxu0
      %814 = vmatprep.mubr.f32.mxu0 0.0
      %815 = vmatmul.mubr.f32.gmra.mrb[0].mxu0 %v718
      %v816 = vpop.f32.mrb[0].mxu0
      %v817 = vadd.f32 1e-05, %v816
      %v818 = vpop.f32.mrb[0].mxu0
      %819 = vmatprep.mubr.f32.mxu0 0.0
      %820 = vmatmul.mubr.f32.gmra.mrb[0].mxu0 %v719
      %v821 = vpop.f32.mrb[0].mxu0
      %v822 = vadd.f32 1e-05, %v821
      %v823 = vpop.f32.mrb[0].mxu0
      %824 = vdwg.mxu0
      %v825 = vrsqrt.pop %v787
      %v826 = vrsqrt.pop %v792
      %v827 = vrsqrt.pop %v797
      %v828 = vrsqrt.pop %v802
      %v829 = vrsqrt.pop %v807
      %v830 = vrsqrt.pop %v812
      %v831 = vrsqrt.pop %v817
      %v832 = vrsqrt.pop %v822
      %v833 = vld [vmem:[%s5] sm:$0xf]
      %v835 = vsel %vm570, %v825, 0
      %v838 = vsel %vm570, %v826, 0
      %v841 = vsel %vm570, %v827, 0
      %v844 = vsel %vm570, %v828, 0
      %v847 = vsel %vm570, %v829, 0
      %v850 = vsel %vm570, %v830, 0
      %v853 = vsel %vm570, %v831, 0
      %v856 = vsel %vm570, %v832, 0
      %v859 = vsel %vm595, %v833, 0
      %861 = vmatprep.subr.mxu0 0.0
      %862 = vmatpush1.msra.mxu0 %v859
      %863 = vmatprep.subr.mxu0 0.0
      %864 = vmatpush1.msra.mxu0 0.0
      %865 = vmatprep.subr.mxu0 0.0
      %866 = vmatpush1.msra.mxu0 0.0
      %867 = vmatprep.subr.mxu0 0.0
      %868 = vmatpush1.msra.mxu0 0.0
      %869 = vmatprep.subr.mxu0 0.0
      %870 = vmatpush1.msra.mxu0 0.0
      %871 = vmatprep.subr.mxu0 0.0
      %872 = vmatpush1.msra.mxu0 0.0
      %873 = vmatprep.subr.mxu0 0.0
      %874 = vmatpush1.msra.mxu0 0.0
      %875 = vmatprep.subr.mxu0 0.0
      %876 = vmatpush1.msra.mxu0 0.0
      %877 = vmatprep.subr.mxu0 0.0
      %878 = vmatpush1.msra.mxu0 0.0
      %879 = vmatprep.subr.mxu0 0.0
      %880 = vmatpush1.msra.mxu0 0.0
      %881 = vmatprep.subr.mxu0 0.0
      %882 = vmatpush1.msra.mxu0 0.0
      %883 = vmatprep.subr.mxu0 0.0
      %884 = vmatpush1.msra.mxu0 0.0
      %885 = vmatprep.subr.mxu0 0.0
      %886 = vmatpush1.msra.mxu0 0.0
      %887 = vmatprep.subr.mxu0 0.0
      %888 = vmatpush1.msra.mxu0 0.0
      %889 = vmatprep.subr.mxu0 0.0
      %890 = vmatpush1.msra.mxu0 0.0
      %891 = vmatprep.subr.mxu0 0.0
      %892 = vmatpush1.msra.mxu0 0.0
      %893 = vmatprep.subr.mxu0 0.0
      %894 = vmatpush1.msra.mxu0 0.0
      %895 = vmatprep.subr.mxu0 0.0
      %896 = vmatpush1.msra.mxu0 0.0
      %897 = vmatprep.subr.mxu0 0.0
      %898 = vmatpush1.msra.mxu0 0.0
      %899 = vmatprep.subr.mxu0 0.0
      %900 = vmatpush1.msra.mxu0 0.0
      %901 = vmatprep.subr.mxu0 0.0
      %902 = vmatpush1.msra.mxu0 0.0
      %903 = vmatprep.subr.mxu0 0.0
      %904 = vmatpush1.msra.mxu0 0.0
      %905 = vmatprep.subr.mxu0 0.0
      %906 = vmatpush1.msra.mxu0 0.0
      %907 = vmatprep.subr.mxu0 0.0
      %908 = vmatpush1.msra.mxu0 0.0
      %909 = vmatprep.subr.mxu0 0.0
      %910 = vmatpush1.msra.mxu0 0.0
      %911 = vmatprep.subr.mxu0 0.0
      %912 = vmatpush1.msra.mxu0 0.0
      %913 = vmatprep.subr.mxu0 0.0
      %914 = vmatpush1.msra.mxu0 0.0
      %915 = vmatprep.subr.mxu0 0.0
      %916 = vmatpush1.msra.mxu0 0.0
      %917 = vmatprep.subr.mxu0 0.0
      %918 = vmatpush1.msra.mxu0 0.0
      %919 = vmatprep.subr.mxu0 0.0
      %920 = vmatpush1.msra.mxu0 0.0
      %921 = vmatprep.subr.mxu0 0.0
      %922 = vmatpush1.msra.mxu0 0.0
      %923 = vmatprep.subr.mxu0 0.0
      %924 = vmatpush1.msra.mxu0 0.0
      %925 = vmatprep.mubr.f32.mxu0 0.0
      %926 = vmatmul.mubr.f32.gmra.mrb[0].mxu0 %v835
      %v927 = vpop.f32.mrb[0].mxu0
      %v928 = vadd.f32 0.0, %v927
      %v929 = vpop.f32.mrb[0].mxu0
      %930 = vmatprep.mubr.f32.mxu0 0.0
      %931 = vmatmul.mubr.f32.gmra.mrb[0].mxu0 %v838
      %v932 = vpop.f32.mrb[0].mxu0
      %v933 = vadd.f32 0.0, %v932
      %v934 = vpop.f32.mrb[0].mxu0
      %935 = vmatprep.mubr.f32.mxu0 0.0
      %936 = vmatmul.mubr.f32.gmra.mrb[0].mxu0 %v841
      %v937 = vpop.f32.mrb[0].mxu0
      %v938 = vadd.f32 0.0, %v937
      %v939 = vpop.f32.mrb[0].mxu0
      %940 = vmatprep.mubr.f32.mxu0 0.0
      %941 = vmatmul.mubr.f32.gmra.mrb[0].mxu0 %v844
      %v942 = vpop.f32.mrb[0].mxu0
      %v943 = vadd.f32 0.0, %v942
      %v944 = vpop.f32.mrb[0].mxu0
      %945 = vmatprep.mubr.f32.mxu0 0.0
      %946 = vmatmul.mubr.f32.gmra.mrb[0].mxu0 %v847
      %v947 = vpop.f32.mrb[0].mxu0
      %v948 = vadd.f32 0.0, %v947
      %v949 = vpop.f32.mrb[0].mxu0
      %950 = vmatprep.mubr.f32.mxu0 0.0
      %951 = vmatmul.mubr.f32.gmra.mrb[0].mxu0 %v850
      %v952 = vpop.f32.mrb[0].mxu0
      %v953 = vadd.f32 0.0, %v952
      %v954 = vpop.f32.mrb[0].mxu0
      %955 = vmatprep.mubr.f32.mxu0 0.0
      %956 = vmatmul.mubr.f32.gmra.mrb[0].mxu0 %v853
      %v957 = vpop.f32.mrb[0].mxu0
      %v958 = vadd.f32 0.0, %v957
      %v959 = vpop.f32.mrb[0].mxu0
      %960 = vmatprep.mubr.f32.mxu0 0.0
      %961 = vmatmul.mubr.f32.gmra.mrb[0].mxu0 %v856
      %v962 = vpop.f32.mrb[0].mxu0
      %v963 = vadd.f32 0.0, %v962
      %v964 = vpop.f32.mrb[0].mxu0
      %965 = vdwg.mxu0
      %v966 = vmul.f32 %v704, %v928
      %v967 = vmul.f32 %v705, %v933
      %v968 = vmul.f32 %v706, %v938
      %v969 = vmul.f32 %v707, %v943
      %v970 = vmul.f32 %v708, %v948
      %v971 = vmul.f32 %v709, %v953
      %v972 = vmul.f32 %v710, %v958
      %v973 = vmul.f32 %v711, %v963
      %v974 = vlaneseq
      %v975 = vshrl.u32 %v974, 7
      %v976 = vsub.s32 0, %v975
      %v977 = vrot.slane %v335, %v976
      %v978 = vadd.f32 %v966, %v977
      %v979 = vadd.f32 %v967, %v977
      %v980 = vadd.f32 %v968, %v977
      %v981 = vadd.f32 %v969, %v977
      %v982 = vadd.f32 %v970, %v977
      %v983 = vadd.f32 %v971, %v977
      %v984 = vadd.f32 %v972, %v977
      %v985 = vadd.f32 %v973, %v977
      %v986 = vmul.f32 %v978, %v978
      %v987 = vmul.f32 %v979, %v979
      %v988 = vmul.f32 %v980, %v980
      %v989 = vmul.f32 %v981, %v981
      %v990 = vmul.f32 %v982, %v982
      %v991 = vmul.f32 %v983, %v983
      %v992 = vmul.f32 %v984, %v984
      %v993 = vmul.f32 %v985, %v985
      %v994 = vmul.f32 %v978, %v986
      %v995 = vmul.f32 %v979, %v987
      %v996 = vmul.f32 %v980, %v988
      %v997 = vmul.f32 %v981, %v989
      %v998 = vmul.f32 %v982, %v990
      %v999 = vmul.f32 %v983, %v991
      %v1000 = vmul.f32 %v984, %v992
      %v1001 = vmul.f32 %v985, %v993
      %v1002 = vmul.f32 %v994, 0.044715
      %v1003 = vmul.f32 %v995, 0.044715
      %v1004 = vmul.f32 %v996, 0.044715
      %v1005 = vmul.f32 %v997, 0.044715
      %v1006 = vmul.f32 %v998, 0.044715
      %v1007 = vmul.f32 %v999, 0.044715
      %v1008 = vmul.f32 %v1000, 0.044715
      %v1009 = vmul.f32 %v1001, 0.044715
      %v1010 = vadd.f32 %v978, %v1002
      %v1011 = vadd.f32 %v979, %v1003
      %v1012 = vadd.f32 %v980, %v1004
      %v1013 = vadd.f32 %v981, %v1005
      %v1014 = vadd.f32 %v982, %v1006
      %v1015 = vadd.f32 %v983, %v1007
      %v1016 = vadd.f32 %v984, %v1008
      %v1017 = vadd.f32 %v985, %v1009
      %v1018 = vmul.f32 %v1010, 0.7978846
      %v1019 = vmul.f32 %v1011, 0.7978846
      %v1020 = vmul.f32 %v1012, 0.7978846
      %v1021 = vmul.f32 %v1013, 0.7978846
      %v1022 = vmul.f32 %v1014, 0.7978846
      %v1023 = vmul.f32 %v1015, 0.7978846
      %v1024 = vmul.f32 %v1016, 0.7978846
      %v1025 = vmul.f32 %v1017, 0.7978846
      %v1026 = vtanh.pop %v1018
      %v1027 = vtanh.pop %v1019
      %v1028 = vtanh.pop %v1020
      %v1029 = vtanh.pop %v1021
      %v1030 = vtanh.pop %v1022
      %v1031 = vtanh.pop %v1023
      %v1032 = vtanh.pop %v1024
      %v1033 = vtanh.pop %v1025
      %v1034 = vadd.f32 %v1026, 1.0
      %v1035 = vadd.f32 %v1027, 1.0
      %v1036 = vadd.f32 %v1028, 1.0
      %v1037 = vadd.f32 %v1029, 1.0
      %v1038 = vadd.f32 %v1030, 1.0
      %v1039 = vadd.f32 %v1031, 1.0
      %v1040 = vadd.f32 %v1032, 1.0
      %v1041 = vadd.f32 %v1033, 1.0
      %v1042 = vmul.f32 %v1034, 0.5
      %v1043 = vmul.f32 %v1035, 0.5
      %v1044 = vmul.f32 %v1036, 0.5
      %v1045 = vmul.f32 %v1037, 0.5
      %v1046 = vmul.f32 %v1038, 0.5
      %v1047 = vmul.f32 %v1039, 0.5
      %v1048 = vmul.f32 %v1040, 0.5
      %v1049 = vmul.f32 %v1041, 0.5
      %v1050 = vmul.f32 %v978, %v1042
      %v1051 = vmul.f32 %v979, %v1043
      %v1052 = vmul.f32 %v980, %v1044
      %v1053 = vmul.f32 %v981, %v1045
      %v1054 = vmul.f32 %v982, %v1046
      %v1055 = vmul.f32 %v983, %v1047
      %v1056 = vmul.f32 %v984, %v1048
      %v1057 = vmul.f32 %v985, %v1049
      %v1058 = vld [vmem:[%s6] sm:$0xff]
      %v1059 = vld [vmem:[%s6 + $0x8] sm:$0xff]
      %v1060 = vld [vmem:[%s6 + $0x10] sm:$0xff]
      %v1061 = vld [vmem:[%s6 + $0x18] sm:$0xff]
      %v1062 = vld [vmem:[%s6 + $0x20] sm:$0xff]
      %v1063 = vld [vmem:[%s6 + $0x28] sm:$0xff]
      %v1064 = vld [vmem:[%s6 + $0x30] sm:$0xff]
      %v1065 = vld [vmem:[%s6 + $0x38] sm:$0xff]
      %v1066 = vld [vmem:[%s6 + $0x40] sm:$0xff]
      %v1067 = vld [vmem:[%s6 + $0x48] sm:$0xff]
      %v1068 = vld [vmem:[%s6 + $0x50] sm:$0xff]
      %v1069 = vld [vmem:[%s6 + $0x58] sm:$0xff]
      %v1070 = vld [vmem:[%s6 + $0x60] sm:$0xff]
      %v1071 = vld [vmem:[%s6 + $0x68] sm:$0xff]
      %v1072 = vld [vmem:[%s6 + $0x70] sm:$0xff]
      %v1073 = vld [vmem:[%s6 + $0x78] sm:$0xff]
      %v1074 = vlaneseq
      %v1075 = vshrl.u32 %v1074, 7
      %v1076 = vsub.s32 0, %v1075
      %v1077 = vrot.slane %v336, %v1076
      %1078 = vmatprep.subr.mxu0 0.0
      %1079 = vmatpush1.msra.mxu0 %v1058
      %1080 = vmatprep.subr.mxu0 0.0
      %1081 = vmatpush1.msra.mxu0 %v1059
      %1082 = vmatprep.subr.mxu0 0.0
      %1083 = vmatpush1.msra.mxu0 %v1060
      %1084 = vmatprep.subr.mxu0 0.0
      %1085 = vmatpush1.msra.mxu0 %v1061
      %1086 = vmatprep.subr.mxu0 0.0
      %1087 = vmatpush1.msra.mxu0 %v1062
      %1088 = vmatprep.subr.mxu0 0.0
      %1089 = vmatpush1.msra.mxu0 %v1063
      %1090 = vmatprep.subr.mxu0 0.0
      %1091 = vmatpush1.msra.mxu0 %v1064
      %1092 = vmatprep.subr.mxu0 0.0
      %1093 = vmatpush1.msra.mxu0 %v1065
      %1094 = vmatprep.subr.mxu0 0.0
      %1095 = vmatpush1.msra.mxu0 %v1066
      %1096 = vmatprep.subr.mxu0 0.0
      %1097 = vmatpush1.msra.mxu0 %v1067
      %1098 = vmatprep.subr.mxu0 0.0
      %1099 = vmatpush1.msra.mxu0 %v1068
      %1100 = vmatprep.subr.mxu0 0.0
      %1101 = vmatpush1.msra.mxu0 %v1069
      %1102 = vmatprep.subr.mxu0 0.0
      %1103 = vmatpush1.msra.mxu0 %v1070
      %1104 = vmatprep.subr.mxu0 0.0
      %1105 = vmatpush1.msra.mxu0 %v1071
      %1106 = vmatprep.subr.mxu0 0.0
      %1107 = vmatpush1.msra.mxu0 %v1072
      %1108 = vmatprep.subr.mxu0 0.0
      %1109 = vmatpush1.msra.mxu0 %v1073
      %1110 = vmatprep.subr.mxu0 0.0
      %1111 = vmatpush1.msra.mxu0 0.0
      %1112 = vmatprep.subr.mxu0 0.0
      %1113 = vmatpush1.msra.mxu0 0.0
      %1114 = vmatprep.subr.mxu0 0.0
      %1115 = vmatpush1.msra.mxu0 0.0
      %1116 = vmatprep.subr.mxu0 0.0
      %1117 = vmatpush1.msra.mxu0 0.0
      %1118 = vmatprep.subr.mxu0 0.0
      %1119 = vmatpush1.msra.mxu0 0.0
      %1120 = vmatprep.subr.mxu0 0.0
      %1121 = vmatpush1.msra.mxu0 0.0
      %1122 = vmatprep.subr.mxu0 0.0
      %1123 = vmatpush1.msra.mxu0 0.0
      %1124 = vmatprep.subr.mxu0 0.0
      %1125 = vmatpush1.msra.mxu0 0.0
      %1126 = vmatprep.subr.mxu0 0.0
      %1127 = vmatpush1.msra.mxu0 0.0
      %1128 = vmatprep.subr.mxu0 0.0
      %1129 = vmatpush1.msra.mxu0 0.0
      %1130 = vmatprep.subr.mxu0 0.0
      %1131 = vmatpush1.msra.mxu0 0.0
      %1132 = vmatprep.subr.mxu0 0.0
      %1133 = vmatpush1.msra.mxu0 0.0
      %1134 = vmatprep.subr.mxu0 0.0
      %1135 = vmatpush1.msra.mxu0 0.0
      %1136 = vmatprep.subr.mxu0 0.0
      %1137 = vmatpush1.msra.mxu0 0.0
      %1138 = vmatprep.subr.mxu0 0.0
      %1139 = vmatpush1.msra.mxu0 0.0
      %1140 = vmatprep.subr.mxu0 0.0
      %1141 = vmatpush1.msra.mxu0 0.0
      %1142 = vmatprep.mubr.f32.mxu0 0.0
      %1143 = vmatmul.mubr.f32.gmra.mrb[0].mxu0 %v1050
      %v1144 = vpop.f32.mrb[0].mxu0
      %v1145 = vadd.f32 %v1077, %v1144
      %v1146 = vpop.f32.mrb[0].mxu0
      %1147 = vmatprep.mubr.f32.mxu0 0.0
      %1148 = vmatmul.mubr.f32.gmra.mrb[0].mxu0 %v1051
      %v1149 = vpop.f32.mrb[0].mxu0
      %v1150 = vadd.f32 %v1077, %v1149
      %v1151 = vpop.f32.mrb[0].mxu0
      %1152 = vmatprep.mubr.f32.mxu0 0.0
      %1153 = vmatmul.mubr.f32.gmra.mrb[0].mxu0 %v1052
      %v1154 = vpop.f32.mrb[0].mxu0
      %v1155 = vadd.f32 %v1077, %v1154
      %v1156 = vpop.f32.mrb[0].mxu0
      %1157 = vmatprep.mubr.f32.mxu0 0.0
      %1158 = vmatmul.mubr.f32.gmra.mrb[0].mxu0 %v1053
      %v1159 = vpop.f32.mrb[0].mxu0
      %v1160 = vadd.f32 %v1077, %v1159
      %v1161 = vpop.f32.mrb[0].mxu0
      %1162 = vmatprep.mubr.f32.mxu0 0.0
      %1163 = vmatmul.mubr.f32.gmra.mrb[0].mxu0 %v1054
      %v1164 = vpop.f32.mrb[0].mxu0
      %v1165 = vadd.f32 %v1077, %v1164
      %v1166 = vpop.f32.mrb[0].mxu0
      %1167 = vmatprep.mubr.f32.mxu0 0.0
      %1168 = vmatmul.mubr.f32.gmra.mrb[0].mxu0 %v1055
      %v1169 = vpop.f32.mrb[0].mxu0
      %v1170 = vadd.f32 %v1077, %v1169
      %v1171 = vpop.f32.mrb[0].mxu0
      %1172 = vmatprep.mubr.f32.mxu0 0.0
      %1173 = vmatmul.mubr.f32.gmra.mrb[0].mxu0 %v1056
      %v1174 = vpop.f32.mrb[0].mxu0
      %v1175 = vadd.f32 %v1077, %v1174
      %v1176 = vpop.f32.mrb[0].mxu0
      %1177 = vmatprep.mubr.f32.mxu0 0.0
      %1178 = vmatmul.mubr.f32.gmra.mrb[0].mxu0 %v1057
      %v1179 = vpop.f32.mrb[0].mxu0
      %v1180 = vadd.f32 %v1077, %v1179
      %v1181 = vpop.f32.mrb[0].mxu0
      %1182 = vdwg.mxu0
      %v1183 = vld [vmem:[%s7] sm:$0xf]
      %v1184 = vld [vmem:[%s7 + $0x4] sm:$0xf]
      %v1185 = vld [vmem:[%s7 + $0x8] sm:$0xf]
      %v1186 = vld [vmem:[%s7 + $0xc] sm:$0xf]
      %v1191 = vunpack.c.l.b16 %v1183
      %v1192 = vunpack.c.l.b16 %v1184
      %v1193 = vunpack.c.l.b16 %v1185
      %v1194 = vunpack.c.l.b16 %v1186
      %v1195 = vpack.c.b16 %v1192, %v1191
      %v1196 = vpack.c.b16 %v1194, %v1193
      %1199 = vmatprep.subr.bf16.mxu0 0
      %1200 = vmatpush1.bf16.msra.mxu0 %v1195
      %1201 = vmatprep.subr.bf16.mxu0 0
      %1202 = vmatpush1.bf16.msra.mxu0 %v1196
      %1203 = vmatprep.subr.bf16.mxu0 0
      %1204 = vmatpush1.bf16.msra.mxu0 0
      %1205 = vmatprep.subr.bf16.mxu0 0
      %1206 = vmatpush1.bf16.msra.mxu0 0
      %1207 = vmatprep.subr.bf16.mxu0 0
      %1208 = vmatpush1.bf16.msra.mxu0 0
      %1209 = vmatprep.subr.bf16.mxu0 0
      %1210 = vmatpush1.bf16.msra.mxu0 0
      %1211 = vmatprep.subr.bf16.mxu0 0
      %1212 = vmatpush1.bf16.msra.mxu0 0
      %1213 = vmatprep.subr.bf16.mxu0 0
      %1214 = vmatpush1.bf16.msra.mxu0 0
      %1215 = vmatprep.subr.bf16.mxu0 0
      %1216 = vmatpush1.bf16.msra.mxu0 0
      %1217 = vmatprep.subr.bf16.mxu0 0
      %1218 = vmatpush1.bf16.msra.mxu0 0
      %1219 = vmatprep.subr.bf16.mxu0 0
      %1220 = vmatpush1.bf16.msra.mxu0 0
      %1221 = vmatprep.subr.bf16.mxu0 0
      %1222 = vmatpush1.bf16.msra.mxu0 0
      %1223 = vmatprep.subr.bf16.mxu0 0
      %1224 = vmatpush1.bf16.msra.mxu0 0
      %1225 = vmatprep.subr.bf16.mxu0 0
      %1226 = vmatpush1.bf16.msra.mxu0 0
      %1227 = vmatprep.subr.bf16.mxu0 0
      %1228 = vmatpush1.bf16.msra.mxu0 0
      %1229 = vmatprep.subr.bf16.mxu0 0
      %1230 = vmatpush1.bf16.msra.mxu0 0
      %1231 = vmatprep.mubr.bf16.mxu0 0
      %1232 = vmatmul.mubr.bf16.gmra.mrb[0].mxu0 %v372
      %v1233 = vpop.f32.mrb[0].mxu0
      %v1234 = vadd.f32 0.0, %v1233
      %v1235 = vpop.f32.mrb[0].mxu0
      %v1236 = vpop.f32.mrb[0].mxu0
      %v1237 = vadd.f32 0.0, %v1236
      %v1238 = vpop.f32.mrb[0].mxu0
      %1239 = vmatprep.mubr.bf16.mxu0 0
      %1240 = vmatmul.mubr.bf16.gmra.mrb[0].mxu0 %v375
      %v1241 = vpop.f32.mrb[0].mxu0
      %v1242 = vadd.f32 0.0, %v1241
      %v1243 = vpop.f32.mrb[0].mxu0
      %v1244 = vpop.f32.mrb[0].mxu0
      %v1245 = vadd.f32 0.0, %v1244
      %v1246 = vpop.f32.mrb[0].mxu0
      %1247 = vmatprep.mubr.bf16.mxu0 0
      %1248 = vmatmul.mubr.bf16.gmra.mrb[0].mxu0 %v378
      %v1249 = vpop.f32.mrb[0].mxu0
      %v1250 = vadd.f32 0.0, %v1249
      %v1251 = vpop.f32.mrb[0].mxu0
      %v1252 = vpop.f32.mrb[0].mxu0
      %v1253 = vadd.f32 0.0, %v1252
      %v1254 = vpop.f32.mrb[0].mxu0
      %1255 = vmatprep.mubr.bf16.mxu0 0
      %1256 = vmatmul.mubr.bf16.gmra.mrb[0].mxu0 %v381
      %v1257 = vpop.f32.mrb[0].mxu0
      %v1258 = vadd.f32 0.0, %v1257
      %v1259 = vpop.f32.mrb[0].mxu0
      %v1260 = vpop.f32.mrb[0].mxu0
      %v1261 = vadd.f32 0.0, %v1260
      %v1262 = vpop.f32.mrb[0].mxu0
      %1263 = vdwg.mxu0
      %v1264 = vsel %vm570, %v1145, -inf
      %v1265 = vrot.slane %v1264, 4
      %v1266 = vmax.f32 %v1264, %v1265
      %v1267 = vrot.slane %v1266, 2
      %v1268 = vmax.f32 %v1266, %v1267
      %v1269 = vrot.slane %v1268, 1
      %v1270 = vmax.f32 %v1268, %v1269
      %v1271 = vsel %vm570, %v1150, -inf
      %v1272 = vrot.slane %v1271, 4
      %v1273 = vmax.f32 %v1271, %v1272
      %v1274 = vrot.slane %v1273, 2
      %v1275 = vmax.f32 %v1273, %v1274
      %v1276 = vrot.slane %v1275, 1
      %v1277 = vmax.f32 %v1275, %v1276
      %v1278 = vsel %vm570, %v1155, -inf
      %v1279 = vrot.slane %v1278, 4
      %v1280 = vmax.f32 %v1278, %v1279
      %v1281 = vrot.slane %v1280, 2
      %v1282 = vmax.f32 %v1280, %v1281
      %v1283 = vrot.slane %v1282, 1
      %v1284 = vmax.f32 %v1282, %v1283
      %v1285 = vsel %vm570, %v1160, -inf
      %v1286 = vrot.slane %v1285, 4
      %v1287 = vmax.f32 %v1285, %v1286
      %v1288 = vrot.slane %v1287, 2
      %v1289 = vmax.f32 %v1287, %v1288
      %v1290 = vrot.slane %v1289, 1
      %v1291 = vmax.f32 %v1289, %v1290
      %v1292 = vsel %vm570, %v1165, -inf
      %v1293 = vrot.slane %v1292, 4
      %v1294 = vmax.f32 %v1292, %v1293
      %v1295 = vrot.slane %v1294, 2
      %v1296 = vmax.f32 %v1294, %v1295
      %v1297 = vrot.slane %v1296, 1
      %v1298 = vmax.f32 %v1296, %v1297
      %v1299 = vsel %vm570, %v1170, -inf
      %v1300 = vrot.slane %v1299, 4
      %v1301 = vmax.f32 %v1299, %v1300
      %v1302 = vrot.slane %v1301, 2
      %v1303 = vmax.f32 %v1301, %v1302
      %v1304 = vrot.slane %v1303, 1
      %v1305 = vmax.f32 %v1303, %v1304
      %v1306 = vsel %vm570, %v1175, -inf
      %v1307 = vrot.slane %v1306, 4
      %v1308 = vmax.f32 %v1306, %v1307
      %v1309 = vrot.slane %v1308, 2
      %v1310 = vmax.f32 %v1308, %v1309
      %v1311 = vrot.slane %v1310, 1
      %v1312 = vmax.f32 %v1310, %v1311
      %v1313 = vsel %vm570, %v1180, -inf
      %v1314 = vrot.slane %v1313, 4
      %v1315 = vmax.f32 %v1313, %v1314
      %v1316 = vrot.slane %v1315, 2
      %v1317 = vmax.f32 %v1315, %v1316
      %v1318 = vrot.slane %v1317, 1
      %v1319 = vmax.f32 %v1317, %v1318
      %v1320 = vsub.f32 %v1145, %v1270
      %v1321 = vsub.f32 %v1150, %v1277
      %v1322 = vsub.f32 %v1155, %v1284
      %v1323 = vsub.f32 %v1160, %v1291
      %v1324 = vsub.f32 %v1165, %v1298
      %v1325 = vsub.f32 %v1170, %v1305
      %v1326 = vsub.f32 %v1175, %v1312
      %v1327 = vsub.f32 %v1180, %v1319
      %v1328 = vmul.f32 %v1320, 1.442695
      %v1329 = vpow.pop %v1328
      %v1330 = vmul.f32 %v1321, 1.442695
      %v1331 = vpow.pop %v1330
      %v1332 = vmul.f32 %v1322, 1.442695
      %v1333 = vpow.pop %v1332
      %v1334 = vmul.f32 %v1323, 1.442695
      %v1335 = vpow.pop %v1334
      %v1336 = vmul.f32 %v1324, 1.442695
      %v1337 = vpow.pop %v1336
      %v1338 = vmul.f32 %v1325, 1.442695
      %v1339 = vpow.pop %v1338
      %v1340 = vmul.f32 %v1326, 1.442695
      %v1341 = vpow.pop %v1340
      %v1342 = vmul.f32 %v1327, 1.442695
      %v1343 = vpow.pop %v1342
      %v1344 = vmul.f32 %v1329, %v1234
      %v1345 = vmul.f32 %v1331, %v1237
      %v1346 = vmul.f32 %v1333, %v1242
      %v1347 = vmul.f32 %v1335, %v1245
      %v1348 = vmul.f32 %v1337, %v1250
      %v1349 = vmul.f32 %v1339, %v1253
      %v1350 = vmul.f32 %v1341, %v1258
      %v1351 = vmul.f32 %v1343, %v1261
      %v1352 = vsel %vm570, %v1344, 0.0
      %v1353 = vrot.slane %v1352, 4
      %v1354 = vadd.f32 %v1352, %v1353
      %v1355 = vrot.slane %v1354, 2
      %v1356 = vadd.f32 %v1354, %v1355
      %v1357 = vrot.slane %v1356, 1
      %v1358 = vadd.f32 %v1356, %v1357
      %v1359 = vsel %vm570, %v1345, 0.0
      %v1360 = vrot.slane %v1359, 4
      %v1361 = vadd.f32 %v1359, %v1360
      %v1362 = vrot.slane %v1361, 2
      %v1363 = vadd.f32 %v1361, %v1362
      %v1364 = vrot.slane %v1363, 1
      %v1365 = vadd.f32 %v1363, %v1364
      %v1366 = vsel %vm570, %v1346, 0.0
      %v1367 = vrot.slane %v1366, 4
      %v1368 = vadd.f32 %v1366, %v1367
      %v1369 = vrot.slane %v1368, 2
      %v1370 = vadd.f32 %v1368, %v1369
      %v1371 = vrot.slane %v1370, 1
      %v1372 = vadd.f32 %v1370, %v1371
      %v1373 = vsel %vm570, %v1347, 0.0
      %v1374 = vrot.slane %v1373, 4
      %v1375 = vadd.f32 %v1373, %v1374
      %v1376 = vrot.slane %v1375, 2
      %v1377 = vadd.f32 %v1375, %v1376
      %v1378 = vrot.slane %v1377, 1
      %v1379 = vadd.f32 %v1377, %v1378
      %v1380 = vsel %vm570, %v1348, 0.0
      %v1381 = vrot.slane %v1380, 4
      %v1382 = vadd.f32 %v1380, %v1381
      %v1383 = vrot.slane %v1382, 2
      %v1384 = vadd.f32 %v1382, %v1383
      %v1385 = vrot.slane %v1384, 1
      %v1386 = vadd.f32 %v1384, %v1385
      %v1387 = vsel %vm570, %v1349, 0.0
      %v1388 = vrot.slane %v1387, 4
      %v1389 = vadd.f32 %v1387, %v1388
      %v1390 = vrot.slane %v1389, 2
      %v1391 = vadd.f32 %v1389, %v1390
      %v1392 = vrot.slane %v1391, 1
      %v1393 = vadd.f32 %v1391, %v1392
      %v1394 = vsel %vm570, %v1350, 0.0
      %v1395 = vrot.slane %v1394, 4
      %v1396 = vadd.f32 %v1394, %v1395
      %v1397 = vrot.slane %v1396, 2
      %v1398 = vadd.f32 %v1396, %v1397
      %v1399 = vrot.slane %v1398, 1
      %v1400 = vadd.f32 %v1398, %v1399
      %v1401 = vsel %vm570, %v1351, 0.0
      %v1402 = vrot.slane %v1401, 4
      %v1403 = vadd.f32 %v1401, %v1402
      %v1404 = vrot.slane %v1403, 2
      %v1405 = vadd.f32 %v1403, %v1404
      %v1406 = vrot.slane %v1405, 1
      %v1407 = vadd.f32 %v1405, %v1406
      %v1408 = vsel %vm570, %v1329, 0.0
      %v1409 = vrot.slane %v1408, 4
      %v1410 = vadd.f32 %v1408, %v1409
      %v1411 = vrot.slane %v1410, 2
      %v1412 = vadd.f32 %v1410, %v1411
      %v1413 = vrot.slane %v1412, 1
      %v1414 = vadd.f32 %v1412, %v1413
      %v1415 = vsel %vm570, %v1331, 0.0
      %v1416 = vrot.slane %v1415, 4
      %v1417 = vadd.f32 %v1415, %v1416
      %v1418 = vrot.slane %v1417, 2
      %v1419 = vadd.f32 %v1417, %v1418
      %v1420 = vrot.slane %v1419, 1
      %v1421 = vadd.f32 %v1419, %v1420
      %v1422 = vsel %vm570, %v1333, 0.0
      %v1423 = vrot.slane %v1422, 4
      %v1424 = vadd.f32 %v1422, %v1423
      %v1425 = vrot.slane %v1424, 2
      %v1426 = vadd.f32 %v1424, %v1425
      %v1427 = vrot.slane %v1426, 1
      %v1428 = vadd.f32 %v1426, %v1427
      %v1429 = vsel %vm570, %v1335, 0.0
      %v1430 = vrot.slane %v1429, 4
      %v1431 = vadd.f32 %v1429, %v1430
      %v1432 = vrot.slane %v1431, 2
      %v1433 = vadd.f32 %v1431, %v1432
      %v1434 = vrot.slane %v1433, 1
      %v1435 = vadd.f32 %v1433, %v1434
      %v1436 = vsel %vm570, %v1337, 0.0
      %v1437 = vrot.slane %v1436, 4
      %v1438 = vadd.f32 %v1436, %v1437
      %v1439 = vrot.slane %v1438, 2
      %v1440 = vadd.f32 %v1438, %v1439
      %v1441 = vrot.slane %v1440, 1
      %v1442 = vadd.f32 %v1440, %v1441
      %v1443 = vsel %vm570, %v1339, 0.0
      %v1444 = vrot.slane %v1443, 4
      %v1445 = vadd.f32 %v1443, %v1444
      %v1446 = vrot.slane %v1445, 2
      %v1447 = vadd.f32 %v1445, %v1446
      %v1448 = vrot.slane %v1447, 1
      %v1449 = vadd.f32 %v1447, %v1448
      %v1450 = vsel %vm570, %v1341, 0.0
      %v1451 = vrot.slane %v1450, 4
      %v1452 = vadd.f32 %v1450, %v1451
      %v1453 = vrot.slane %v1452, 2
      %v1454 = vadd.f32 %v1452, %v1453
      %v1455 = vrot.slane %v1454, 1
      %v1456 = vadd.f32 %v1454, %v1455
      %v1457 = vsel %vm570, %v1343, 0.0
      %v1458 = vrot.slane %v1457, 4
      %v1459 = vadd.f32 %v1457, %v1458
      %v1460 = vrot.slane %v1459, 2
      %v1461 = vadd.f32 %v1459, %v1460
      %v1462 = vrot.slane %v1461, 1
      %v1463 = vadd.f32 %v1461, %v1462
      %v1464 = vrcp.pop %v1414
      %v1465 = vrcp.pop %v1421
      %v1466 = vrcp.pop %v1428
      %v1467 = vrcp.pop %v1435
      %v1468 = vrcp.pop %v1442
      %v1469 = vrcp.pop %v1449
      %v1470 = vrcp.pop %v1456
      %v1471 = vrcp.pop %v1463
      %v1472 = vmul.f32 %v1358, %v1464
      %v1473 = vmul.f32 %v1365, %v1465
      %v1474 = vmul.f32 %v1372, %v1466
      %v1475 = vmul.f32 %v1379, %v1467
      %v1476 = vmul.f32 %v1386, %v1468
      %v1477 = vmul.f32 %v1393, %v1469
      %v1478 = vmul.f32 %v1400, %v1470
      %v1479 = vmul.f32 %v1407, %v1471
      %v1480 = vlaneseq
      %v1481 = vshrl.u32 %v1480, 7
      %v1482 = vsub.s32 0, %v1481
      %v1483 = vrot.slane %v337, %v1482
      %v1484 = vadd.f32 %v1472, %v1483
      %v1485 = vadd.f32 %v1473, %v1483
      %v1486 = vadd.f32 %v1474, %v1483
      %v1487 = vadd.f32 %v1475, %v1483
      %v1488 = vadd.f32 %v1476, %v1483
      %v1489 = vadd.f32 %v1477, %v1483
      %v1490 = vadd.f32 %v1478, %v1483
      %v1491 = vadd.f32 %v1479, %v1483
      %v1500 = vrot.slane %v1485, 7
      %vm1501 = vcmask 1041409
      %v1502 = vsel %vm1501, %v1500, %v1484
      %v1503 = vrot.slane %v1486, 6
      %vm1504 = vcmask 1042434
      %v1505 = vsel %vm1504, %v1503, %v1502
      %v1506 = vrot.slane %v1487, 5
      %vm1507 = vcmask 1043459
      %v1508 = vsel %vm1507, %v1506, %v1505
      %v1509 = vrot.slane %v1488, 4
      %vm1510 = vcmask 1044484
      %v1511 = vsel %vm1510, %v1509, %v1508
      %v1512 = vrot.slane %v1489, 3
      %vm1513 = vcmask 1045509
      %v1514 = vsel %vm1513, %v1512, %v1511
      %v1515 = vrot.slane %v1490, 2
      %vm1516 = vcmask 1046534
      %v1517 = vsel %vm1516, %v1515, %v1514
      %v1518 = vrot.slane %v1491, 1
      %vm1519 = vcmask 1047559
      %v1520 = vsel %vm1519, %v1518, %v1517
      %1522 = vst.msk [vmem:[%s332] sm:$0xff] %vm570, %v1520
      %p1523 = scmp.lt.s32.totalorder %s20, 1
      %s1524 = scalar_select %p1523, %s20, 1
      %s1525 = smul.addr %s1524, 8
      %s1526 = scalar_lea.vmem %s9, %s1525
      // Predicated region
      $region57: #{tpu_custom_call.1} parent=55 // pred_check
        %p1527 = pneg %p232
      $region58: #{tpu_custom_call.1} parent=55 // pred_check_branch
        %1529 = sbr.rel (%p1527) target = $region60
      $region59: #{tpu_custom_call.1} parent=55 // pred_region
        _
      $region60: #{tpu_custom_call.1} parent=55 // pred_fallthru
        _
    $region56: #{tpu_custom_call.1} parent=5 // pred_fallthru
      _
    %p1530 = scmp.le.s32.totalorder 2, %s15
    // Predicated region
    $region61: #{tpu_custom_call.1} parent=5 // pred_check
      %p1531 = pneg %p1530
    $region62: #{tpu_custom_call.1} parent=5 // pred_check_branch
      %1533 = sbr.rel (%p1531) target = $region64
    $region63: #{tpu_custom_call.1} parent=5 // pred_region
      %s1534 = ssub.s32 %s15, 2
      // Predicated region
      $region65: #{tpu_custom_call.1} parent=63 // pred_check
        %p1535 = pneg %p238
      $region66: #{tpu_custom_call.1} parent=63 // pred_check_branch
        %1537 = sbr.rel (%p1535) target = $region68
      $region67: #{tpu_custom_call.1} parent=63 // pred_region
        %p1538 = scmp.lt.s32.totalorder %s21, 1
        %s1539 = scalar_select %p1538, %s21, 1
        %s1540 = smul.addr %s1539, 8
        %s1541 = scalar_lea.vmem %s9, %s1540
      $region68: #{tpu_custom_call.1} parent=63 // pred_fallthru
        _
    $region64: #{tpu_custom_call.1} parent=5 // pred_fallthru
      _
  $region6: #{tpu_custom_call.1} parent=0 // loop_footer
    %s19 = sadd.s32 1, %s15
  $region7: #{tpu_custom_call.1} parent=0 // loop_footer_branch
    %14 = sbr.rel target = $region3
  $region8: #{tpu_custom_call.1} parent=0 // loop_exit
    _

// kernel: tpu_custom_call.1
$region0: #{tpu_custom_call.1}
  #allocation0 [shape = 'u32[]', space=smem, size = 0x4, offset = 0x4, fixed_abs, tag = 'smem constant byte address 0x4 - core index']
  #allocation1 [shape = 'u32[144,128]{1,0:T(1,128)}', space=vmem, size = 0x12000, scoped, tag = 'internal scratch']
  %s0 = inlined_call_operand.vmem [shape: f32[16,8,32], index: 0, kind: input, shape index: {}]
  %s1 = inlined_call_operand.vmem [shape: bf16[32,128], index: 1, kind: input, shape index: {}]
  %s2 = inlined_call_operand.vmem [shape: f32[2,128], index: 2, kind: input, shape index: {}]
  %s3 = inlined_call_operand.vmem [shape: f32[128,4], index: 3, kind: input, shape index: {}]
  %s4 = inlined_call_operand.vmem [shape: f32[4,128], index: 4, kind: input, shape index: {}]
  %s5 = inlined_call_operand.vmem [shape: f32[4,128], index: 5, kind: input, shape index: {}]
  %s6 = inlined_call_operand.vmem [shape: f32[128,4], index: 6, kind: input, shape index: {}]
  %s7 = inlined_call_operand.vmem [shape: bf16[32,4], index: 7, kind: input, shape index: {}]
  %s8 = inlined_call_operand.vmem [shape: f32[2,4], index: 8, kind: input, shape index: {}]
  %s9 = inlined_call_operand.vmem [shape: f32[16,4], index: 9, kind: output, shape index: {}]
  %s10 = sld [smem:[#allocation0]]
  $region69: #{tpu_custom_call.1} parent=0
    _
  %s12 = ssub.s32 1, %s10
  %s13 = scalar_select 0, %s12, %s10
  loop: start=0, step=1, limit=4
  $region2: #{tpu_custom_call.1} parent=0 // loop_pre_header
    _
  $region3: #{tpu_custom_call.1} parent=0 // loop_header
    %s15 = sphi 0, %s19
    %p16 = scmp.ge.s32.totalorder %s15, 4
    %s25 = sphi 0, %s27
    %s28 = sphi 0, %s25
    %s29 = sphi 0, %s28
    %s45 = sphi 0, %s29
    %s49 = sphi 0, %s49
    %s51 = sphi 0, %s49
    %s52 = sphi 0, %s51
    %s66 = sphi 0, %s52
    %s70 = sphi 0, %s70
    %s72 = sphi 0, %s70
    %s73 = sphi 0, %s72
    %s87 = sphi 0, %s73
    %s91 = sphi 0, %s91
    %s93 = sphi 0, %s91
    %s94 = sphi 0, %s93
    %s108 = sphi 0, %s94
    %s112 = sphi 0, %s112
    %s114 = sphi 0, %s112
    %s115 = sphi 0, %s114
    %s129 = sphi 0, %s115
    %s133 = sphi 0, %s133
    %s135 = sphi 0, %s133
    %s136 = sphi 0, %s135
    %s150 = sphi 0, %s136
    %s154 = sphi 0, %s154
    %s156 = sphi 0, %s154
    %s157 = sphi 0, %s156
    %s171 = sphi 0, %s157
    %s175 = sphi 0, %s175
    %s177 = sphi 0, %s175
    %s178 = sphi 0, %s177
    %s192 = sphi 0, %s178
    %s196 = sphi 0, %s196
    %s198 = sphi 0, %s196
    %s199 = sphi 0, %s198
    %s213 = sphi 0, %s199
    %s219 = sphi 0, %s221
    %s222 = sphi 0, %s219
    %s223 = sphi 0, %s222
    %s239 = sphi 0, %s223
  $region4: #{tpu_custom_call.1} parent=0 // loop_header_branch
    %18 = sbr.rel (%p16) target = $region8
  $region5: #{tpu_custom_call.1} parent=0 // loop_body
    %s20 = ssub.s32 %s15, 1
    %s21 = ssub.s32 %s15, 2
    %s22 = sadd.s32 %s15, 1
    %s23 = ssub.s32 %s15, %s22
    %p24 = scmp.eq.s32.totalorder %s23, 0
    %s26 = sadd.s32 %s25, 1
    %s27 = scalar_select %p24, %s25, %s26
    %p30 = pneg %p24
    %p31 = scmp.eq.s32.totalorder %s15, 1
    %p32 = por %p30, %p31
    %p33 = scmp.ne.s32.totalorder %s25, %s28
    %p34 = scmp.eq.s32.totalorder %s15, 0
    %p35 = por %p33, %p34
    %p36 = scmp.ne.s32.totalorder %s25, %s28
    %p37 = scmp.eq.s32.totalorder %s20, 1
    %p38 = por %p36, %p37
    %p39 = scmp.ne.s32.totalorder %s28, %s29
    %p40 = scmp.eq.s32.totalorder %s20, 0
    %p41 = por %p39, %p40
    %p42 = scmp.ne.s32.totalorder %s28, %s29
    %p43 = scmp.eq.s32.totalorder %s21, 1
    %p44 = por %p42, %p43
    %p46 = scmp.ne.s32.totalorder %s29, %s45
    %p47 = scmp.eq.s32.totalorder %s21, 0
    %p48 = por %p46, %p47
    %s50 = sadd.s32 %s49, 1
    %p53 = scmp.eq.s32.totalorder %s15, 1
    %p54 = scmp.ne.s32.totalorder %s49, %s51
    %p55 = scmp.eq.s32.totalorder %s15, 0
    %p56 = por %p54, %p55
    %p57 = scmp.ne.s32.totalorder %s49, %s51
    %p58 = scmp.eq.s32.totalorder %s20, 1
    %p59 = por %p57, %p58
    %p60 = scmp.ne.s32.totalorder %s51, %s52
    %p61 = scmp.eq.s32.totalorder %s20, 0
    %p62 = por %p60, %p61
    %p63 = scmp.ne.s32.totalorder %s51, %s52
    %p64 = scmp.eq.s32.totalorder %s21, 1
    %p65 = por %p63, %p64
    %p67 = scmp.ne.s32.totalorder %s52, %s66
    %p68 = scmp.eq.s32.totalorder %s21, 0
    %p69 = por %p67, %p68
    %s71 = sadd.s32 %s70, 1
    %p74 = scmp.eq.s32.totalorder %s15, 1
    %p75 = scmp.ne.s32.totalorder %s70, %s72
    %p76 = scmp.eq.s32.totalorder %s15, 0
    %p77 = por %p75, %p76
    %p78 = scmp.ne.s32.totalorder %s70, %s72
    %p79 = scmp.eq.s32.totalorder %s20, 1
    %p80 = por %p78, %p79
    %p81 = scmp.ne.s32.totalorder %s72, %s73
    %p82 = scmp.eq.s32.totalorder %s20, 0
    %p83 = por %p81, %p82
    %p84 = scmp.ne.s32.totalorder %s72, %s73
    %p85 = scmp.eq.s32.totalorder %s21, 1
    %p86 = por %p84, %p85
    %p88 = scmp.ne.s32.totalorder %s73, %s87
    %p89 = scmp.eq.s32.totalorder %s21, 0
    %p90 = por %p88, %p89
    %s92 = sadd.s32 %s91, 1
    %p95 = scmp.eq.s32.totalorder %s15, 1
    %p96 = scmp.ne.s32.totalorder %s91, %s93
    %p97 = scmp.eq.s32.totalorder %s15, 0
    %p98 = por %p96, %p97
    %p99 = scmp.ne.s32.totalorder %s91, %s93
    %p100 = scmp.eq.s32.totalorder %s20, 1
    %p101 = por %p99, %p100
    %p102 = scmp.ne.s32.totalorder %s93, %s94
    %p103 = scmp.eq.s32.totalorder %s20, 0
    %p104 = por %p102, %p103
    %p105 = scmp.ne.s32.totalorder %s93, %s94
    %p106 = scmp.eq.s32.totalorder %s21, 1
    %p107 = por %p105, %p106
    %p109 = scmp.ne.s32.totalorder %s94, %s108
    %p110 = scmp.eq.s32.totalorder %s21, 0
    %p111 = por %p109, %p110
    %s113 = sadd.s32 %s112, 1
    %p116 = scmp.eq.s32.totalorder %s15, 1
    %p117 = scmp.ne.s32.totalorder %s112, %s114
    %p118 = scmp.eq.s32.totalorder %s15, 0
    %p119 = por %p117, %p118
    %p120 = scmp.ne.s32.totalorder %s112, %s114
    %p121 = scmp.eq.s32.totalorder %s20, 1
    %p122 = por %p120, %p121
    %p123 = scmp.ne.s32.totalorder %s114, %s115
    %p124 = scmp.eq.s32.totalorder %s20, 0
    %p125 = por %p123, %p124
    %p126 = scmp.ne.s32.totalorder %s114, %s115
    %p127 = scmp.eq.s32.totalorder %s21, 1
    %p128 = por %p126, %p127
    %p130 = scmp.ne.s32.totalorder %s115, %s129
    %p131 = scmp.eq.s32.totalorder %s21, 0
    %p132 = por %p130, %p131
    %s134 = sadd.s32 %s133, 1
    %p137 = scmp.eq.s32.totalorder %s15, 1
    %p138 = scmp.ne.s32.totalorder %s133, %s135
    %p139 = scmp.eq.s32.totalorder %s15, 0
    %p140 = por %p138, %p139
    %p141 = scmp.ne.s32.totalorder %s133, %s135
    %p142 = scmp.eq.s32.totalorder %s20, 1
    %p143 = por %p141, %p142
    %p144 = scmp.ne.s32.totalorder %s135, %s136
    %p145 = scmp.eq.s32.totalorder %s20, 0
    %p146 = por %p144, %p145
    %p147 = scmp.ne.s32.totalorder %s135, %s136
    %p148 = scmp.eq.s32.totalorder %s21, 1
    %p149 = por %p147, %p148
    %p151 = scmp.ne.s32.totalorder %s136, %s150
    %p152 = scmp.eq.s32.totalorder %s21, 0
    %p153 = por %p151, %p152
    %s155 = sadd.s32 %s154, 1
    %p158 = scmp.eq.s32.totalorder %s15, 1
    %p159 = scmp.ne.s32.totalorder %s154, %s156
    %p160 = scmp.eq.s32.totalorder %s15, 0
    %p161 = por %p159, %p160
    %p162 = scmp.ne.s32.totalorder %s154, %s156
    %p163 = scmp.eq.s32.totalorder %s20, 1
    %p164 = por %p162, %p163
    %p165 = scmp.ne.s32.totalorder %s156, %s157
    %p166 = scmp.eq.s32.totalorder %s20, 0
    %p167 = por %p165, %p166
    %p168 = scmp.ne.s32.totalorder %s156, %s157
    %p169 = scmp.eq.s32.totalorder %s21, 1
    %p170 = por %p168, %p169
    %p172 = scmp.ne.s32.totalorder %s157, %s171
    %p173 = scmp.eq.s32.totalorder %s21, 0
    %p174 = por %p172, %p173
    %s176 = sadd.s32 %s175, 1
    %p179 = scmp.eq.s32.totalorder %s15, 1
    %p180 = scmp.ne.s32.totalorder %s175, %s177
    %p181 = scmp.eq.s32.totalorder %s15, 0
    %p182 = por %p180, %p181
    %p183 = scmp.ne.s32.totalorder %s175, %s177
    %p184 = scmp.eq.s32.totalorder %s20, 1
    %p185 = por %p183, %p184
    %p186 = scmp.ne.s32.totalorder %s177, %s178
    %p187 = scmp.eq.s32.totalorder %s20, 0
    %p188 = por %p186, %p187
    %p189 = scmp.ne.s32.totalorder %s177, %s178
    %p190 = scmp.eq.s32.totalorder %s21, 1
    %p191 = por %p189, %p190
    %p193 = scmp.ne.s32.totalorder %s178, %s192
    %p194 = scmp.eq.s32.totalorder %s21, 0
    %p195 = por %p193, %p194
    %s197 = sadd.s32 %s196, 1
    %p200 = scmp.eq.s32.totalorder %s15, 1
    %p201 = scmp.ne.s32.totalorder %s196, %s198
    %p202 = scmp.eq.s32.totalorder %s15, 0
    %p203 = por %p201, %p202
    %p204 = scmp.ne.s32.totalorder %s196, %s198
    %p205 = scmp.eq.s32.totalorder %s20, 1
    %p206 = por %p204, %p205
    %p207 = scmp.ne.s32.totalorder %s198, %s199
    %p208 = scmp.eq.s32.totalorder %s20, 0
    %p209 = por %p207, %p208
    %p210 = scmp.ne.s32.totalorder %s198, %s199
    %p211 = scmp.eq.s32.totalorder %s21, 1
    %p212 = por %p210, %p211
    %p214 = scmp.ne.s32.totalorder %s199, %s213
    %p215 = scmp.eq.s32.totalorder %s21, 0
    %p216 = por %p214, %p215
    %s217 = ssub.s32 %s15, %s22
    %p218 = scmp.eq.s32.totalorder %s217, 0
    %s220 = sadd.s32 %s219, 1
    %s221 = scalar_select %p218, %s219, %s220
    %p224 = pneg %p218
    %p225 = scmp.eq.s32.totalorder %s15, 1
    %p226 = por %p224, %p225
    %p227 = scmp.ne.s32.totalorder %s219, %s222
    %p228 = scmp.eq.s32.totalorder %s15, 0
    %p229 = por %p227, %p228
    %p230 = scmp.ne.s32.totalorder %s219, %s222
    %p231 = scmp.eq.s32.totalorder %s20, 1
    %p232 = por %p230, %p231
    %p233 = scmp.ne.s32.totalorder %s222, %s223
    %p234 = scmp.eq.s32.totalorder %s20, 0
    %p235 = por %p233, %p234
    %p236 = scmp.ne.s32.totalorder %s222, %s223
    %p237 = scmp.eq.s32.totalorder %s21, 1
    %p238 = por %p236, %p237
    %p240 = scmp.ne.s32.totalorder %s223, %s239
    %p241 = scmp.eq.s32.totalorder %s21, 0
    %p242 = por %p240, %p241
    %p243 = scmp.le.s32.totalorder 1, %s15
    %p244 = scmp.lt.s32.totalorder %s15, 3
    %p245 = pnand %p243, %p244
    %p246 = pneg %p245
    // Predicated region
    $region9: #{tpu_custom_call.1} parent=5 // pred_check
      _
    $region10: #{tpu_custom_call.1} parent=5 // pred_check_branch
      %248 = sbr.rel (%p245) target = $region12
    $region11: #{tpu_custom_call.1} parent=5 // pred_region
      %s249 = ssub.s32 %s15, 1
      // Predicated region
      $region13: #{tpu_custom_call.1} parent=11 // pred_check
        %p250 = pneg %p62
      $region14: #{tpu_custom_call.1} parent=11 // pred_check_branch
        %252 = sbr.rel (%p250) target = $region16
      $region15: #{tpu_custom_call.1} parent=11 // pred_region
        _
      $region16: #{tpu_custom_call.1} parent=11 // pred_fallthru
        _
      // Predicated region
      $region17: #{tpu_custom_call.1} parent=11 // pred_check
        %p253 = pneg %p83
      $region18: #{tpu_custom_call.1} parent=11 // pred_check_branch
        %255 = sbr.rel (%p253) target = $region20
      $region19: #{tpu_custom_call.1} parent=11 // pred_region
        _
      $region20: #{tpu_custom_call.1} parent=11 // pred_fallthru
        _
      // Predicated region
      $region21: #{tpu_custom_call.1} parent=11 // pred_check
        %p256 = pneg %p104
      $region22: #{tpu_custom_call.1} parent=11 // pred_check_branch
        %258 = sbr.rel (%p256) target = $region24
      $region23: #{tpu_custom_call.1} parent=11 // pred_region
        _
      $region24: #{tpu_custom_call.1} parent=11 // pred_fallthru
        _
      // Predicated region
      $region25: #{tpu_custom_call.1} parent=11 // pred_check
        %p259 = pneg %p125
      $region26: #{tpu_custom_call.1} parent=11 // pred_check_branch
        %261 = sbr.rel (%p259) target = $region28
      $region27: #{tpu_custom_call.1} parent=11 // pred_region
        _
      $region28: #{tpu_custom_call.1} parent=11 // pred_fallthru
        _
      // Predicated region
      $region29: #{tpu_custom_call.1} parent=11 // pred_check
        %p262 = pneg %p146
      $region30: #{tpu_custom_call.1} parent=11 // pred_check_branch
        %264 = sbr.rel (%p262) target = $region32
      $region31: #{tpu_custom_call.1} parent=11 // pred_region
        _
      $region32: #{tpu_custom_call.1} parent=11 // pred_fallthru
        _
      // Predicated region
      $region33: #{tpu_custom_call.1} parent=11 // pred_check
        %p265 = pneg %p167
      $region34: #{tpu_custom_call.1} parent=11 // pred_check_branch
        %267 = sbr.rel (%p265) target = $region36
      $region35: #{tpu_custom_call.1} parent=11 // pred_region
        _
      $region36: #{tpu_custom_call.1} parent=11 // pred_fallthru
        _
      // Predicated region
      $region37: #{tpu_custom_call.1} parent=11 // pred_check
        %p268 = pneg %p188
      $region38: #{tpu_custom_call.1} parent=11 // pred_check_branch
        %270 = sbr.rel (%p268) target = $region40
      $region39: #{tpu_custom_call.1} parent=11 // pred_region
        _
      $region40: #{tpu_custom_call.1} parent=11 // pred_fallthru
        _
      // Predicated region
      $region41: #{tpu_custom_call.1} parent=11 // pred_check
        %p271 = pneg %p209
      $region42: #{tpu_custom_call.1} parent=11 // pred_check_branch
        %273 = sbr.rel (%p271) target = $region44
      $region43: #{tpu_custom_call.1} parent=11 // pred_region
        _
      $region44: #{tpu_custom_call.1} parent=11 // pred_fallthru
        _
    $region12: #{tpu_custom_call.1} parent=5 // pred_fallthru
      _
    %p274 = scmp.lt.s32.totalorder %s15, 2
    // Predicated region
    $region45: #{tpu_custom_call.1} parent=5 // pred_check
      %p275 = pneg %p274
    $region46: #{tpu_custom_call.1} parent=5 // pred_check_branch
      %277 = sbr.rel (%p275) target = $region48
    $region47: #{tpu_custom_call.1} parent=5 // pred_region
      // Predicated region
      $region49: #{tpu_custom_call.1} parent=47 // pred_check
        %p278 = pneg %p35
      $region50: #{tpu_custom_call.1} parent=47 // pred_check_branch
        %280 = sbr.rel (%p278) target = $region52
      $region51: #{tpu_custom_call.1} parent=47 // pred_region
        %s281 = smul.u32 8, %s15
        %p282 = scmp.lt.s32.totalorder %s281, 15
        %s283 = scalar_select %p282, %s281, 15
        %s284 = smul.addr %s283, 8
        %s285 = scalar_lea.vmem %s0, %s284
        %s286 = smul.u32 8, %s15
      $region52: #{tpu_custom_call.1} parent=47 // pred_fallthru
        _
    $region48: #{tpu_custom_call.1} parent=5 // pred_fallthru
      _
    %p287 = scmp.le.s32.totalorder 1, %s15
    %p288 = scmp.lt.s32.totalorder %s15, 3
    %p289 = pnand %p287, %p288
    %p290 = pneg %p289
    // Predicated region
    $region53: #{tpu_custom_call.1} parent=5 // pred_check
      _
    $region54: #{tpu_custom_call.1} parent=5 // pred_check_branch
      %292 = sbr.rel (%p289) target = $region56
    $region55: #{tpu_custom_call.1} parent=5 // pred_region
      %s293 = ssub.s32 %s15, 1
      %s294 = smul.u32 8, %s20
      %p295 = scmp.lt.s32.totalorder %s294, 15
      %s296 = scalar_select %p295, %s294, 15
      %s297 = smul.addr %s296, 8
      %s298 = scalar_lea.vmem %s0, %s297
      %p299 = pneg %p41
      %p300 = pneg %p38
      %p301 = pneg %p62
      %p302 = pneg %p59
      %p303 = pneg %p83
      %p304 = pneg %p80
      %p305 = pneg %p104
      %p306 = pneg %p101
      %p307 = pneg %p125
      %p308 = pneg %p122
      %p309 = pneg %p146
      %p310 = pneg %p143
      %p311 = pneg %p167
      %p312 = pneg %p164
      %p313 = pneg %p188
      %p314 = pneg %p185
      %p315 = pneg %p209
      %p316 = pneg %p206
      %p317 = pneg %p235
      %p318 = pneg %p232
      %p319 = scmp.lt.s32.totalorder %s20, 1
      %s320 = scalar_select %p319, %s20, 1
      %s321 = smul.addr %s320, 8
      %s322 = scalar_lea.vmem %s9, %s321
      %s323 = smul.u32 8, %s20
      %p324 = scmp.lt.s32.totalorder %s323, 15
      %s325 = scalar_select %p324, %s323, 15
      %s326 = smul.addr %s325, 8
      %s327 = scalar_lea.vmem %s0, %s326
      %s328 = smul.u32 8, %s20
      %p329 = scmp.lt.s32.totalorder %s20, 1
      %s330 = scalar_select %p329, %s20, 1
      %s331 = smul.addr %s330, 8
      %s332 = scalar_lea.vmem %s9, %s331
      %v334 = vld [vmem:[%s2] sm:$0x1]
      %v335 = vld [vmem:[%s2 + $0x1] sm:$0x1]
      %v336 = vld [vmem:[%s8] sm:$0x1]
      %v337 = vld [vmem:[%s8 + $0x1] sm:$0x1]
      %v338 = vld [vmem:[%s327] sm:$0xff]
      %v339 = vld [vmem:[%s327 + $0x8] sm:$0xff]
      %v340 = vld [vmem:[%s327 + $0x10] sm:$0xff]
      %v341 = vld [vmem:[%s327 + $0x18] sm:$0xff]
      %v342 = vld [vmem:[%s327 + $0x20] sm:$0xff]
      %v343 = vld [vmem:[%s327 + $0x28] sm:$0xff]
      %v344 = vld [vmem:[%s327 + $0x30] sm:$0xff]
      %v345 = vld [vmem:[%s327 + $0x38] sm:$0xff]
      %v346 = vpack.c.bf16 %v339, %v338
      %v347 = vpack.c.bf16 %v341, %v340
      %v348 = vpack.c.bf16 %v343, %v342
      %v349 = vpack.c.bf16 %v345, %v344
      %v350 = vld [vmem:[%s1] sm:$0xf]
      %v351 = vld [vmem:[%s1 + $0x4] sm:$0xf]
      %v352 = vld [vmem:[%s1 + $0x8] sm:$0xf]
      %v353 = vld [vmem:[%s1 + $0xc] sm:$0xf]
      %v354 = vlaneseq
      %v355 = vshrl.u32 %v354, 7
      %v356 = vsub.s32 0, %v355
      %v357 = vrot.slane %v334, %v356
      %v362 = vunpack.c.l.b16 %v350
      %v363 = vunpack.c.l.b16 %v351
      %v364 = vunpack.c.l.b16 %v352
      %v365 = vunpack.c.l.b16 %v353
      %v366 = vpack.c.b16 %v363, %v362
      %v367 = vpack.c.b16 %v365, %v364
      %vm370 = vcmask 261120
      %v372 = vsel %vm370, %v346, 0
      %v375 = vsel %vm370, %v347, 0
      %v378 = vsel %vm370, %v348, 0
      %v381 = vsel %vm370, %v349, 0
      %383 = vmatprep.subr.bf16.mxu0 0
      %384 = vmatpush1.bf16.msra.mxu0 %v366
      %385 = vmatprep.subr.bf16.mxu0 0
      %386 = vmatpush1.bf16.msra.mxu0 %v367
      %387 = vmatprep.subr.bf16.mxu0 0
      %388 = vmatpush1.bf16.msra.mxu0 0
      %389 = vmatprep.subr.bf16.mxu0 0
      %390 = vmatpush1.bf16.msra.mxu0 0
      %391 = vmatprep.subr.bf16.mxu0 0
      %392 = vmatpush1.bf16.msra.mxu0 0
      %393 = vmatprep.subr.bf16.mxu0 0
      %394 = vmatpush1.bf16.msra.mxu0 0
      %395 = vmatprep.subr.bf16.mxu0 0
      %396 = vmatpush1.bf16.msra.mxu0 0
      %397 = vmatprep.subr.bf16.mxu0 0
      %398 = vmatpush1.bf16.msra.mxu0 0
      %399 = vmatprep.subr.bf16.mxu0 0
      %400 = vmatpush1.bf16.msra.mxu0 0
      %401 = vmatprep.subr.bf16.mxu0 0
      %402 = vmatpush1.bf16.msra.mxu0 0
      %403 = vmatprep.subr.bf16.mxu0 0
      %404 = vmatpush1.bf16.msra.mxu0 0
      %405 = vmatprep.subr.bf16.mxu0 0
      %406 = vmatpush1.bf16.msra.mxu0 0
      %407 = vmatprep.subr.bf16.mxu0 0
      %408 = vmatpush1.bf16.msra.mxu0 0
      %409 = vmatprep.subr.bf16.mxu0 0
      %410 = vmatpush1.bf16.msra.mxu0 0
      %411 = vmatprep.subr.bf16.mxu0 0
      %412 = vmatpush1.bf16.msra.mxu0 0
      %413 = vmatprep.subr.bf16.mxu0 0
      %414 = vmatpush1.bf16.msra.mxu0 0
      %415 = vmatprep.mubr.bf16.mxu0 0
      %416 = vmatmul.mubr.bf16.gmra.mrb[0].mxu0 %v372
      %v417 = vpop.f32.mrb[0].mxu0
      %v418 = vadd.f32 %v357, %v417
      %v419 = vpop.f32.mrb[0].mxu0
      %v420 = vpop.f32.mrb[0].mxu0
      %v421 = vadd.f32 %v357, %v420
      %v422 = vpop.f32.mrb[0].mxu0
      %423 = vmatprep.mubr.bf16.mxu0 0
      %424 = vmatmul.mubr.bf16.gmra.mrb[0].mxu0 %v375
      %v425 = vpop.f32.mrb[0].mxu0
      %v426 = vadd.f32 %v357, %v425
      %v427 = vpop.f32.mrb[0].mxu0
      %v428 = vpop.f32.mrb[0].mxu0
      %v429 = vadd.f32 %v357, %v428
      %v430 = vpop.f32.mrb[0].mxu0
      %431 = vmatprep.mubr.bf16.mxu0 0
      %432 = vmatmul.mubr.bf16.gmra.mrb[0].mxu0 %v378
      %v433 = vpop.f32.mrb[0].mxu0
      %v434 = vadd.f32 %v357, %v433
      %v435 = vpop.f32.mrb[0].mxu0
      %v436 = vpop.f32.mrb[0].mxu0
      %v437 = vadd.f32 %v357, %v436
      %v438 = vpop.f32.mrb[0].mxu0
      %439 = vmatprep.mubr.bf16.mxu0 0
      %440 = vmatmul.mubr.bf16.gmra.mrb[0].mxu0 %v381
      %v441 = vpop.f32.mrb[0].mxu0
      %v442 = vadd.f32 %v357, %v441
      %v443 = vpop.f32.mrb[0].mxu0
      %v444 = vpop.f32.mrb[0].mxu0
      %v445 = vadd.f32 %v357, %v444
      %v446 = vpop.f32.mrb[0].mxu0
      %447 = vdwg.mxu0
      %v448 = vld [vmem:[%s3] sm:$0xff]
      %v449 = vld [vmem:[%s3 + $0x8] sm:$0xff]
      %v450 = vld [vmem:[%s3 + $0x10] sm:$0xff]
      %v451 = vld [vmem:[%s3 + $0x18] sm:$0xff]
      %v452 = vld [vmem:[%s3 + $0x20] sm:$0xff]
      %v453 = vld [vmem:[%s3 + $0x28] sm:$0xff]
      %v454 = vld [vmem:[%s3 + $0x30] sm:$0xff]
      %v455 = vld [vmem:[%s3 + $0x38] sm:$0xff]
      %v456 = vld [vmem:[%s3 + $0x40] sm:$0xff]
      %v457 = vld [vmem:[%s3 + $0x48] sm:$0xff]
      %v458 = vld [vmem:[%s3 + $0x50] sm:$0xff]
      %v459 = vld [vmem:[%s3 + $0x58] sm:$0xff]
      %v460 = vld [vmem:[%s3 + $0x60] sm:$0xff]
      %v461 = vld [vmem:[%s3 + $0x68] sm:$0xff]
      %v462 = vld [vmem:[%s3 + $0x70] sm:$0xff]
      %v463 = vld [vmem:[%s3 + $0x78] sm:$0xff]
      %464 = vmatprep.subr.mxu0 0.0
      %465 = vmatpush1.msra.mxu0 %v448
      %466 = vmatprep.subr.mxu0 0.0
      %467 = vmatpush1.msra.mxu0 %v449
      %468 = vmatprep.subr.mxu0 0.0
      %469 = vmatpush1.msra.mxu0 %v450
      %470 = vmatprep.subr.mxu0 0.0
      %471 = vmatpush1.msra.mxu0 %v451
      %472 = vmatprep.subr.mxu0 0.0
      %473 = vmatpush1.msra.mxu0 %v452
      %474 = vmatprep.subr.mxu0 0.0
      %475 = vmatpush1.msra.mxu0 %v453
      %476 = vmatprep.subr.mxu0 0.0
      %477 = vmatpush1.msra.mxu0 %v454
      %478 = vmatprep.subr.mxu0 0.0
      %479 = vmatpush1.msra.mxu0 %v455
      %480 = vmatprep.subr.mxu0 0.0
      %481 = vmatpush1.msra.mxu0 %v456
      %482 = vmatprep.subr.mxu0 0.0
      %483 = vmatpush1.msra.mxu0 %v457
      %484 = vmatprep.subr.mxu0 0.0
      %485 = vmatpush1.msra.mxu0 %v458
      %486 = vmatprep.subr.mxu0 0.0
      %487 = vmatpush1.msra.mxu0 %v459
      %488 = vmatprep.subr.mxu0 0.0
      %489 = vmatpush1.msra.mxu0 %v460
      %490 = vmatprep.subr.mxu0 0.0
      %491 = vmatpush1.msra.mxu0 %v461
      %492 = vmatprep.subr.mxu0 0.0
      %493 = vmatpush1.msra.mxu0 %v462
      %494 = vmatprep.subr.mxu0 0.0
      %495 = vmatpush1.msra.mxu0 %v463
      %496 = vmatprep.subr.mxu0 0.0
      %497 = vmatpush1.msra.mxu0 0.0
      %498 = vmatprep.subr.mxu0 0.0
      %499 = vmatpush1.msra.mxu0 0.0
      %500 = vmatprep.subr.mxu0 0.0
      %501 = vmatpush1.msra.mxu0 0.0
      %502 = vmatprep.subr.mxu0 0.0
      %503 = vmatpush1.msra.mxu0 0.0
      %504 = vmatprep.subr.mxu0 0.0
      %505 = vmatpush1.msra.mxu0 0.0
      %506 = vmatprep.subr.mxu0 0.0
      %507 = vmatpush1.msra.mxu0 0.0
      %508 = vmatprep.subr.mxu0 0.0
      %509 = vmatpush1.msra.mxu0 0.0
      %510 = vmatprep.subr.mxu0 0.0
      %511 = vmatpush1.msra.mxu0 0.0
      %512 = vmatprep.subr.mxu0 0.0
      %513 = vmatpush1.msra.mxu0 0.0
      %514 = vmatprep.subr.mxu0 0.0
      %515 = vmatpush1.msra.mxu0 0.0
      %516 = vmatprep.subr.mxu0 0.0
      %517 = vmatpush1.msra.mxu0 0.0
      %518 = vmatprep.subr.mxu0 0.0
      %519 = vmatpush1.msra.mxu0 0.0
      %520 = vmatprep.subr.mxu0 0.0
      %521 = vmatpush1.msra.mxu0 0.0
      %522 = vmatprep.subr.mxu0 0.0
      %523 = vmatpush1.msra.mxu0 0.0
      %524 = vmatprep.subr.mxu0 0.0
      %525 = vmatpush1.msra.mxu0 0.0
      %526 = vmatprep.subr.mxu0 0.0
      %527 = vmatpush1.msra.mxu0 0.0
      %528 = vmatprep.mubr.f32.mxu0 0.0
      %529 = vmatmul.mubr.f32.gmra.mrb[0].mxu0 %v418
      %v530 = vpop.f32.mrb[0].mxu0
      %v531 = vadd.f32 0.0, %v530
      %v532 = vpop.f32.mrb[0].mxu0
      %533 = vmatprep.mubr.f32.mxu0 0.0
      %534 = vmatmul.mubr.f32.gmra.mrb[0].mxu0 %v421
      %v535 = vpop.f32.mrb[0].mxu0
      %v536 = vadd.f32 0.0, %v535
      %v537 = vpop.f32.mrb[0].mxu0
      %538 = vmatprep.mubr.f32.mxu0 0.0
      %539 = vmatmul.mubr.f32.gmra.mrb[0].mxu0 %v426
      %v540 = vpop.f32.mrb[0].mxu0
      %v541 = vadd.f32 0.0, %v540
      %v542 = vpop.f32.mrb[0].mxu0
      %543 = vmatprep.mubr.f32.mxu0 0.0
      %544 = vmatmul.mubr.f32.gmra.mrb[0].mxu0 %v429
      %v545 = vpop.f32.mrb[0].mxu0
      %v546 = vadd.f32 0.0, %v545
      %v547 = vpop.f32.mrb[0].mxu0
      %548 = vmatprep.mubr.f32.mxu0 0.0
      %549 = vmatmul.mubr.f32.gmra.mrb[0].mxu0 %v434
      %v550 = vpop.f32.mrb[0].mxu0
      %v551 = vadd.f32 0.0, %v550
      %v552 = vpop.f32.mrb[0].mxu0
      %553 = vmatprep.mubr.f32.mxu0 0.0
      %554 = vmatmul.mubr.f32.gmra.mrb[0].mxu0 %v437
      %v555 = vpop.f32.mrb[0].mxu0
      %v556 = vadd.f32 0.0, %v555
      %v557 = vpop.f32.mrb[0].mxu0
      %558 = vmatprep.mubr.f32.mxu0 0.0
      %559 = vmatmul.mubr.f32.gmra.mrb[0].mxu0 %v442
      %v560 = vpop.f32.mrb[0].mxu0
      %v561 = vadd.f32 0.0, %v560
      %v562 = vpop.f32.mrb[0].mxu0
      %563 = vmatprep.mubr.f32.mxu0 0.0
      %564 = vmatmul.mubr.f32.gmra.mrb[0].mxu0 %v445
      %v565 = vpop.f32.mrb[0].mxu0
      %v566 = vadd.f32 0.0, %v565
      %v567 = vpop.f32.mrb[0].mxu0
      %568 = vdwg.mxu0
      %v569 = vld [vmem:[%s4] sm:$0xf]
      %vm570 = vcmask 31744
      %v572 = vsel %vm570, %v531, 0
      %v575 = vsel %vm570, %v536, 0
      %v578 = vsel %vm570, %v541, 0
      %v581 = vsel %vm570, %v546, 0
      %v584 = vsel %vm570, %v551, 0
      %v587 = vsel %vm570, %v556, 0
      %v590 = vsel %vm570, %v561, 0
      %v593 = vsel %vm570, %v566, 0
      %vm595 = vcmask 1043456
      %v597 = vsel %vm595, %v569, 0
      %599 = vmatprep.subr.mxu0 0.0
      %600 = vmatpush1.msra.mxu0 %v597
      %601 = vmatprep.subr.mxu0 0.0
      %602 = vmatpush1.msra.mxu0 0.0
      %603 = vmatprep.subr.mxu0 0.0
      %604 = vmatpush1.msra.mxu0 0.0
      %605 = vmatprep.subr.mxu0 0.0
      %606 = vmatpush1.msra.mxu0 0.0
      %607 = vmatprep.subr.mxu0 0.0
      %608 = vmatpush1.msra.mxu0 0.0
      %609 = vmatprep.subr.mxu0 0.0
      %610 = vmatpush1.msra.mxu0 0.0
      %611 = vmatprep.subr.mxu0 0.0
      %612 = vmatpush1.msra.mxu0 0.0
      %613 = vmatprep.subr.mxu0 0.0
      %614 = vmatpush1.msra.mxu0 0.0
      %615 = vmatprep.subr.mxu0 0.0
      %616 = vmatpush1.msra.mxu0 0.0
      %617 = vmatprep.subr.mxu0 0.0
      %618 = vmatpush1.msra.mxu0 0.0
      %619 = vmatprep.subr.mxu0 0.0
      %620 = vmatpush1.msra.mxu0 0.0
      %621 = vmatprep.subr.mxu0 0.0
      %622 = vmatpush1.msra.mxu0 0.0
      %623 = vmatprep.subr.mxu0 0.0
      %624 = vmatpush1.msra.mxu0 0.0
      %625 = vmatprep.subr.mxu0 0.0
      %626 = vmatpush1.msra.mxu0 0.0
      %627 = vmatprep.subr.mxu0 0.0
      %628 = vmatpush1.msra.mxu0 0.0
      %629 = vmatprep.subr.mxu0 0.0
      %630 = vmatpush1.msra.mxu0 0.0
      %631 = vmatprep.subr.mxu0 0.0
      %632 = vmatpush1.msra.mxu0 0.0
      %633 = vmatprep.subr.mxu0 0.0
      %634 = vmatpush1.msra.mxu0 0.0
      %635 = vmatprep.subr.mxu0 0.0
      %636 = vmatpush1.msra.mxu0 0.0
      %637 = vmatprep.subr.mxu0 0.0
      %638 = vmatpush1.msra.mxu0 0.0
      %639 = vmatprep.subr.mxu0 0.0
      %640 = vmatpush1.msra.mxu0 0.0
      %641 = vmatprep.subr.mxu0 0.0
      %642 = vmatpush1.msra.mxu0 0.0
      %643 = vmatprep.subr.mxu0 0.0
      %644 = vmatpush1.msra.mxu0 0.0
      %645 = vmatprep.subr.mxu0 0.0
      %646 = vmatpush1.msra.mxu0 0.0
      %647 = vmatprep.subr.mxu0 0.0
      %648 = vmatpush1.msra.mxu0 0.0
      %649 = vmatprep.subr.mxu0 0.0
      %650 = vmatpush1.msra.mxu0 0.0
      %651 = vmatprep.subr.mxu0 0.0
      %652 = vmatpush1.msra.mxu0 0.0
      %653 = vmatprep.subr.mxu0 0.0
      %654 = vmatpush1.msra.mxu0 0.0
      %655 = vmatprep.subr.mxu0 0.0
      %656 = vmatpush1.msra.mxu0 0.0
      %657 = vmatprep.subr.mxu0 0.0
      %658 = vmatpush1.msra.mxu0 0.0
      %659 = vmatprep.subr.mxu0 0.0
      %660 = vmatpush1.msra.mxu0 0.0
      %661 = vmatprep.subr.mxu0 0.0
      %662 = vmatpush1.msra.mxu0 0.0
      %663 = vmatprep.mubr.f32.mxu0 0.0
      %664 = vmatmul.mubr.f32.gmra.mrb[0].mxu0 %v572
      %v665 = vpop.f32.mrb[0].mxu0
      %v666 = vadd.f32 0.0, %v665
      %v667 = vpop.f32.mrb[0].mxu0
      %668 = vmatprep.mubr.f32.mxu0 0.0
      %669 = vmatmul.mubr.f32.gmra.mrb[0].mxu0 %v575
      %v670 = vpop.f32.mrb[0].mxu0
      %v671 = vadd.f32 0.0, %v670
      %v672 = vpop.f32.mrb[0].mxu0
      %673 = vmatprep.mubr.f32.mxu0 0.0
      %674 = vmatmul.mubr.f32.gmra.mrb[0].mxu0 %v578
      %v675 = vpop.f32.mrb[0].mxu0
      %v676 = vadd.f32 0.0, %v675
      %v677 = vpop.f32.mrb[0].mxu0
      %678 = vmatprep.mubr.f32.mxu0 0.0
      %679 = vmatmul.mubr.f32.gmra.mrb[0].mxu0 %v581
      %v680 = vpop.f32.mrb[0].mxu0
      %v681 = vadd.f32 0.0, %v680
      %v682 = vpop.f32.mrb[0].mxu0
      %683 = vmatprep.mubr.f32.mxu0 0.0
      %684 = vmatmul.mubr.f32.gmra.mrb[0].mxu0 %v584
      %v685 = vpop.f32.mrb[0].mxu0
      %v686 = vadd.f32 0.0, %v685
      %v687 = vpop.f32.mrb[0].mxu0
      %688 = vmatprep.mubr.f32.mxu0 0.0
      %689 = vmatmul.mubr.f32.gmra.mrb[0].mxu0 %v587
      %v690 = vpop.f32.mrb[0].mxu0
      %v691 = vadd.f32 0.0, %v690
      %v692 = vpop.f32.mrb[0].mxu0
      %693 = vmatprep.mubr.f32.mxu0 0.0
      %694 = vmatmul.mubr.f32.gmra.mrb[0].mxu0 %v590
      %v695 = vpop.f32.mrb[0].mxu0
      %v696 = vadd.f32 0.0, %v695
      %v697 = vpop.f32.mrb[0].mxu0
      %698 = vmatprep.mubr.f32.mxu0 0.0
      %699 = vmatmul.mubr.f32.gmra.mrb[0].mxu0 %v593
      %v700 = vpop.f32.mrb[0].mxu0
      %v701 = vadd.f32 0.0, %v700
      %v702 = vpop.f32.mrb[0].mxu0
      %703 = vdwg.mxu0
      %v704 = vsub.f32 %v418, %v666
      %v705 = vsub.f32 %v421, %v671
      %v706 = vsub.f32 %v426, %v676
      %v707 = vsub.f32 %v429, %v681
      %v708 = vsub.f32 %v434, %v686
      %v709 = vsub.f32 %v437, %v691
      %v710 = vsub.f32 %v442, %v696
      %v711 = vsub.f32 %v445, %v701
      %v712 = vmul.f32 %v704, %v704
      %v713 = vmul.f32 %v705, %v705
      %v714 = vmul.f32 %v706, %v706
      %v715 = vmul.f32 %v707, %v707
      %v716 = vmul.f32 %v708, %v708
      %v717 = vmul.f32 %v709, %v709
      %v718 = vmul.f32 %v710, %v710
      %v719 = vmul.f32 %v711, %v711
      %720 = vmatprep.subr.mxu0 0.0
      %721 = vmatpush1.msra.mxu0 %v448
      %722 = vmatprep.subr.mxu0 0.0
      %723 = vmatpush1.msra.mxu0 %v449
      %724 = vmatprep.subr.mxu0 0.0
      %725 = vmatpush1.msra.mxu0 %v450
      %726 = vmatprep.subr.mxu0 0.0
      %727 = vmatpush1.msra.mxu0 %v451
      %728 = vmatprep.subr.mxu0 0.0
      %729 = vmatpush1.msra.mxu0 %v452
      %730 = vmatprep.subr.mxu0 0.0
      %731 = vmatpush1.msra.mxu0 %v453
      %732 = vmatprep.subr.mxu0 0.0
      %733 = vmatpush1.msra.mxu0 %v454
      %734 = vmatprep.subr.mxu0 0.0
      %735 = vmatpush1.msra.mxu0 %v455
      %736 = vmatprep.subr.mxu0 0.0
      %737 = vmatpush1.msra.mxu0 %v456
      %738 = vmatprep.subr.mxu0 0.0
      %739 = vmatpush1.msra.mxu0 %v457
      %740 = vmatprep.subr.mxu0 0.0
      %741 = vmatpush1.msra.mxu0 %v458
      %742 = vmatprep.subr.mxu0 0.0
      %743 = vmatpush1.msra.mxu0 %v459
      %744 = vmatprep.subr.mxu0 0.0
      %745 = vmatpush1.msra.mxu0 %v460
      %746 = vmatprep.subr.mxu0 0.0
      %747 = vmatpush1.msra.mxu0 %v461
      %748 = vmatprep.subr.mxu0 0.0
      %749 = vmatpush1.msra.mxu0 %v462
      %750 = vmatprep.subr.mxu0 0.0
      %751 = vmatpush1.msra.mxu0 %v463
      %752 = vmatprep.subr.mxu0 0.0
      %753 = vmatpush1.msra.mxu0 0.0
      %754 = vmatprep.subr.mxu0 0.0
      %755 = vmatpush1.msra.mxu0 0.0
      %756 = vmatprep.subr.mxu0 0.0
      %757 = vmatpush1.msra.mxu0 0.0
      %758 = vmatprep.subr.mxu0 0.0
      %759 = vmatpush1.msra.mxu0 0.0
      %760 = vmatprep.subr.mxu0 0.0
      %761 = vmatpush1.msra.mxu0 0.0
      %762 = vmatprep.subr.mxu0 0.0
      %763 = vmatpush1.msra.mxu0 0.0
      %764 = vmatprep.subr.mxu0 0.0
      %765 = vmatpush1.msra.mxu0 0.0
      %766 = vmatprep.subr.mxu0 0.0
      %767 = vmatpush1.msra.mxu0 0.0
      %768 = vmatprep.subr.mxu0 0.0
      %769 = vmatpush1.msra.mxu0 0.0
      %770 = vmatprep.subr.mxu0 0.0
      %771 = vmatpush1.msra.mxu0 0.0
      %772 = vmatprep.subr.mxu0 0.0
      %773 = vmatpush1.msra.mxu0 0.0
      %774 = vmatprep.subr.mxu0 0.0
      %775 = vmatpush1.msra.mxu0 0.0
      %776 = vmatprep.subr.mxu0 0.0
      %777 = vmatpush1.msra.mxu0 0.0
      %778 = vmatprep.subr.mxu0 0.0
      %779 = vmatpush1.msra.mxu0 0.0
      %780 = vmatprep.subr.mxu0 0.0
      %781 = vmatpush1.msra.mxu0 0.0
      %782 = vmatprep.subr.mxu0 0.0
      %783 = vmatpush1.msra.mxu0 0.0
      %784 = vmatprep.mubr.f32.mxu0 0.0
      %785 = vmatmul.mubr.f32.gmra.mrb[0].mxu0 %v712
      %v786 = vpop.f32.mrb[0].mxu0
      %v787 = vadd.f32 1e-05, %v786
      %v788 = vpop.f32.mrb[0].mxu0
      %789 = vmatprep.mubr.f32.mxu0 0.0
      %790 = vmatmul.mubr.f32.gmra.mrb[0].mxu0 %v713
      %v791 = vpop.f32.mrb[0].mxu0
      %v792 = vadd.f32 1e-05, %v791
      %v793 = vpop.f32.mrb[0].mxu0
      %794 = vmatprep.mubr.f32.mxu0 0.0
      %795 = vmatmul.mubr.f32.gmra.mrb[0].mxu0 %v714
      %v796 = vpop.f32.mrb[0].mxu0
      %v797 = vadd.f32 1e-05, %v796
      %v798 = vpop.f32.mrb[0].mxu0
      %799 = vmatprep.mubr.f32.mxu0 0.0
      %800 = vmatmul.mubr.f32.gmra.mrb[0].mxu0 %v715
      %v801 = vpop.f32.mrb[0].mxu0
      %v802 = vadd.f32 1e-05, %v801
      %v803 = vpop.f32.mrb[0].mxu0
      %804 = vmatprep.mubr.f32.mxu0 0.0
      %805 = vmatmul.mubr.f32.gmra.mrb[0].mxu0 %v716
      %v806 = vpop.f32.mrb[0].mxu0
      %v807 = vadd.f32 1e-05, %v806
      %v808 = vpop.f32.mrb[0].mxu0
      %809 = vmatprep.mubr.f32.mxu0 0.0
      %810 = vmatmul.mubr.f32.gmra.mrb[0].mxu0 %v717
      %v811 = vpop.f32.mrb[0].mxu0
      %v812 = vadd.f32 1e-05, %v811
      %v813 = vpop.f32.mrb[0].mxu0
      %814 = vmatprep.mubr.f32.mxu0 0.0
      %815 = vmatmul.mubr.f32.gmra.mrb[0].mxu0 %v718
      %v816 = vpop.f32.mrb[0].mxu0
      %v817 = vadd.f32 1e-05, %v816
      %v818 = vpop.f32.mrb[0].mxu0
      %819 = vmatprep.mubr.f32.mxu0 0.0
      %820 = vmatmul.mubr.f32.gmra.mrb[0].mxu0 %v719
      %v821 = vpop.f32.mrb[0].mxu0
      %v822 = vadd.f32 1e-05, %v821
      %v823 = vpop.f32.mrb[0].mxu0
      %824 = vdwg.mxu0
      %v825 = vrsqrt.pop %v787
      %v826 = vrsqrt.pop %v792
      %v827 = vrsqrt.pop %v797
      %v828 = vrsqrt.pop %v802
      %v829 = vrsqrt.pop %v807
      %v830 = vrsqrt.pop %v812
      %v831 = vrsqrt.pop %v817
      %v832 = vrsqrt.pop %v822
      %v833 = vld [vmem:[%s5] sm:$0xf]
      %v835 = vsel %vm570, %v825, 0
      %v838 = vsel %vm570, %v826, 0
      %v841 = vsel %vm570, %v827, 0
      %v844 = vsel %vm570, %v828, 0
      %v847 = vsel %vm570, %v829, 0
      %v850 = vsel %vm570, %v830, 0
      %v853 = vsel %vm570, %v831, 0
      %v856 = vsel %vm570, %v832, 0
      %v859 = vsel %vm595, %v833, 0
      %861 = vmatprep.subr.mxu0 0.0
      %862 = vmatpush1.msra.mxu0 %v859
      %863 = vmatprep.subr.mxu0 0.0
      %864 = vmatpush1.msra.mxu0 0.0
      %865 = vmatprep.subr.mxu0 0.0
      %866 = vmatpush1.msra.mxu0 0.0
      %867 = vmatprep.subr.mxu0 0.0
      %868 = vmatpush1.msra.mxu0 0.0
      %869 = vmatprep.subr.mxu0 0.0
      %870 = vmatpush1.msra.mxu0 0.0
      %871 = vmatprep.subr.mxu0 0.0
      %872 = vmatpush1.msra.mxu0 0.0
      %873 = vmatprep.subr.mxu0 0.0
      %874 = vmatpush1.msra.mxu0 0.0
      %875 = vmatprep.subr.mxu0 0.0
      %876 = vmatpush1.msra.mxu0 0.0
      %877 = vmatprep.subr.mxu0 0.0
      %878 = vmatpush1.msra.mxu0 0.0
      %879 = vmatprep.subr.mxu0 0.0
      %880 = vmatpush1.msra.mxu0 0.0
      %881 = vmatprep.subr.mxu0 0.0
      %882 = vmatpush1.msra.mxu0 0.0
      %883 = vmatprep.subr.mxu0 0.0
      %884 = vmatpush1.msra.mxu0 0.0
      %885 = vmatprep.subr.mxu0 0.0
      %886 = vmatpush1.msra.mxu0 0.0
      %887 = vmatprep.subr.mxu0 0.0
      %888 = vmatpush1.msra.mxu0 0.0
      %889 = vmatprep.subr.mxu0 0.0
      %890 = vmatpush1.msra.mxu0 0.0
      %891 = vmatprep.subr.mxu0 0.0
      %892 = vmatpush1.msra.mxu0 0.0
      %893 = vmatprep.subr.mxu0 0.0
      %894 = vmatpush1.msra.mxu0 0.0
      %895 = vmatprep.subr.mxu0 0.0
      %896 = vmatpush1.msra.mxu0 0.0
      %897 = vmatprep.subr.mxu0 0.0
      %898 = vmatpush1.msra.mxu0 0.0
      %899 = vmatprep.subr.mxu0 0.0
      %900 = vmatpush1.msra.mxu0 0.0
      %901 = vmatprep.subr.mxu0 0.0
      %902 = vmatpush1.msra.mxu0 0.0
      %903 = vmatprep.subr.mxu0 0.0
      %904 = vmatpush1.msra.mxu0 0.0
      %905 = vmatprep.subr.mxu0 0.0
      %906 = vmatpush1.msra.mxu0 0.0
      %907 = vmatprep.subr.mxu0 0.0
      %908 = vmatpush1.msra.mxu0 0.0
      %909 = vmatprep.subr.mxu0 0.0
      %910 = vmatpush1.msra.mxu0 0.0
      %911 = vmatprep.subr.mxu0 0.0
      %912 = vmatpush1.msra.mxu0 0.0
      %913 = vmatprep.subr.mxu0 0.0
      %914 = vmatpush1.msra.mxu0 0.0
      %915 = vmatprep.subr.mxu0 0.0
      %916 = vmatpush1.msra.mxu0 0.0
      %917 = vmatprep.subr.mxu0 0.0
      %918 = vmatpush1.msra.mxu0 0.0
      %919 = vmatprep.subr.mxu0 0.0
      %920 = vmatpush1.msra.mxu0 0.0
      %921 = vmatprep.subr.mxu0 0.0
      %922 = vmatpush1.msra.mxu0 0.0
      %923 = vmatprep.subr.mxu0 0.0
      %924 = vmatpush1.msra.mxu0 0.0
      %925 = vmatprep.mubr.f32.mxu0 0.0
      %926 = vmatmul.mubr.f32.gmra.mrb[0].mxu0 %v835
      %v927 = vpop.f32.mrb[0].mxu0
      %v928 = vadd.f32 0.0, %v927
      %v929 = vpop.f32.mrb[0].mxu0
      %930 = vmatprep.mubr.f32.mxu0 0.0
      %931 = vmatmul.mubr.f32.gmra.mrb[0].mxu0 %v838
      %v932 = vpop.f32.mrb[0].mxu0
      %v933 = vadd.f32 0.0, %v932
      %v934 = vpop.f32.mrb[0].mxu0
      %935 = vmatprep.mubr.f32.mxu0 0.0
      %936 = vmatmul.mubr.f32.gmra.mrb[0].mxu0 %v841
      %v937 = vpop.f32.mrb[0].mxu0
      %v938 = vadd.f32 0.0, %v937
      %v939 = vpop.f32.mrb[0].mxu0
      %940 = vmatprep.mubr.f32.mxu0 0.0
      %941 = vmatmul.mubr.f32.gmra.mrb[0].mxu0 %v844
      %v942 = vpop.f32.mrb[0].mxu0
      %v943 = vadd.f32 0.0, %v942
      %v944 = vpop.f32.mrb[0].mxu0
      %945 = vmatprep.mubr.f32.mxu0 0.0
      %946 = vmatmul.mubr.f32.gmra.mrb[0].mxu0 %v847
      %v947 = vpop.f32.mrb[0].mxu0
      %v948 = vadd.f32 0.0, %v947
      %v949 = vpop.f32.mrb[0].mxu0
      %950 = vmatprep.mubr.f32.mxu0 0.0
      %951 = vmatmul.mubr.f32.gmra.mrb[0].mxu0 %v850
      %v952 = vpop.f32.mrb[0].mxu0
      %v953 = vadd.f32 0.0, %v952
      %v954 = vpop.f32.mrb[0].mxu0
      %955 = vmatprep.mubr.f32.mxu0 0.0
      %956 = vmatmul.mubr.f32.gmra.mrb[0].mxu0 %v853
      %v957 = vpop.f32.mrb[0].mxu0
      %v958 = vadd.f32 0.0, %v957
      %v959 = vpop.f32.mrb[0].mxu0
      %960 = vmatprep.mubr.f32.mxu0 0.0
      %961 = vmatmul.mubr.f32.gmra.mrb[0].mxu0 %v856
      %v962 = vpop.f32.mrb[0].mxu0
      %v963 = vadd.f32 0.0, %v962
      %v964 = vpop.f32.mrb[0].mxu0
      %965 = vdwg.mxu0
      %v966 = vmul.f32 %v704, %v928
      %v967 = vmul.f32 %v705, %v933
      %v968 = vmul.f32 %v706, %v938
      %v969 = vmul.f32 %v707, %v943
      %v970 = vmul.f32 %v708, %v948
      %v971 = vmul.f32 %v709, %v953
      %v972 = vmul.f32 %v710, %v958
      %v973 = vmul.f32 %v711, %v963
      %v974 = vlaneseq
      %v975 = vshrl.u32 %v974, 7
      %v976 = vsub.s32 0, %v975
      %v977 = vrot.slane %v335, %v976
      %v978 = vadd.f32 %v966, %v977
      %v979 = vadd.f32 %v967, %v977
      %v980 = vadd.f32 %v968, %v977
      %v981 = vadd.f32 %v969, %v977
      %v982 = vadd.f32 %v970, %v977
      %v983 = vadd.f32 %v971, %v977
      %v984 = vadd.f32 %v972, %v977
      %v985 = vadd.f32 %v973, %v977
      %v986 = vmul.f32 %v978, %v978
      %v987 = vmul.f32 %v979, %v979
      %v988 = vmul.f32 %v980, %v980
      %v989 = vmul.f32 %v981, %v981
      %v990 = vmul.f32 %v982, %v982
      %v991 = vmul.f32 %v983, %v983
      %v992 = vmul.f32 %v984, %v984
      %v993 = vmul.f32 %v985, %v985
      %v994 = vmul.f32 %v978, %v986
      %v995 = vmul.f32 %v979, %v987
      %v996 = vmul.f32 %v980, %v988
      %v997 = vmul.f32 %v981, %v989
      %v998 = vmul.f32 %v982, %v990
      %v999 = vmul.f32 %v983, %v991
      %v1000 = vmul.f32 %v984, %v992
      %v1001 = vmul.f32 %v985, %v993
      %v1002 = vmul.f32 %v994, 0.044715
      %v1003 = vmul.f32 %v995, 0.044715
      %v1004 = vmul.f32 %v996, 0.044715
      %v1005 = vmul.f32 %v997, 0.044715
      %v1006 = vmul.f32 %v998, 0.044715
      %v1007 = vmul.f32 %v999, 0.044715
      %v1008 = vmul.f32 %v1000, 0.044715
      %v1009 = vmul.f32 %v1001, 0.044715
      %v1010 = vadd.f32 %v978, %v1002
      %v1011 = vadd.f32 %v979, %v1003
      %v1012 = vadd.f32 %v980, %v1004
      %v1013 = vadd.f32 %v981, %v1005
      %v1014 = vadd.f32 %v982, %v1006
      %v1015 = vadd.f32 %v983, %v1007
      %v1016 = vadd.f32 %v984, %v1008
      %v1017 = vadd.f32 %v985, %v1009
      %v1018 = vmul.f32 %v1010, 0.7978846
      %v1019 = vmul.f32 %v1011, 0.7978846
      %v1020 = vmul.f32 %v1012, 0.7978846
      %v1021 = vmul.f32 %v1013, 0.7978846
      %v1022 = vmul.f32 %v1014, 0.7978846
      %v1023 = vmul.f32 %v1015, 0.7978846
      %v1024 = vmul.f32 %v1016, 0.7978846
      %v1025 = vmul.f32 %v1017, 0.7978846
      %v1026 = vtanh.pop %v1018
      %v1027 = vtanh.pop %v1019
      %v1028 = vtanh.pop %v1020
      %v1029 = vtanh.pop %v1021
      %v1030 = vtanh.pop %v1022
      %v1031 = vtanh.pop %v1023
      %v1032 = vtanh.pop %v1024
      %v1033 = vtanh.pop %v1025
      %v1034 = vadd.f32 %v1026, 1.0
      %v1035 = vadd.f32 %v1027, 1.0
      %v1036 = vadd.f32 %v1028, 1.0
      %v1037 = vadd.f32 %v1029, 1.0
      %v1038 = vadd.f32 %v1030, 1.0
      %v1039 = vadd.f32 %v1031, 1.0
      %v1040 = vadd.f32 %v1032, 1.0
      %v1041 = vadd.f32 %v1033, 1.0
      %v1042 = vmul.f32 %v1034, 0.5
      %v1043 = vmul.f32 %v1035, 0.5
      %v1044 = vmul.f32 %v1036, 0.5
      %v1045 = vmul.f32 %v1037, 0.5
      %v1046 = vmul.f32 %v1038, 0.5
      %v1047 = vmul.f32 %v1039, 0.5
      %v1048 = vmul.f32 %v1040, 0.5
      %v1049 = vmul.f32 %v1041, 0.5
      %v1050 = vmul.f32 %v978, %v1042
      %v1051 = vmul.f32 %v979, %v1043
      %v1052 = vmul.f32 %v980, %v1044
      %v1053 = vmul.f32 %v981, %v1045
      %v1054 = vmul.f32 %v982, %v1046
      %v1055 = vmul.f32 %v983, %v1047
      %v1056 = vmul.f32 %v984, %v1048
      %v1057 = vmul.f32 %v985, %v1049
      %v1058 = vld [vmem:[%s6] sm:$0xff]
      %v1059 = vld [vmem:[%s6 + $0x8] sm:$0xff]
      %v1060 = vld [vmem:[%s6 + $0x10] sm:$0xff]
      %v1061 = vld [vmem:[%s6 + $0x18] sm:$0xff]
      %v1062 = vld [vmem:[%s6 + $0x20] sm:$0xff]
      %v1063 = vld [vmem:[%s6 + $0x28] sm:$0xff]
      %v1064 = vld [vmem:[%s6 + $0x30] sm:$0xff]
      %v1065 = vld [vmem:[%s6 + $0x38] sm:$0xff]
      %v1066 = vld [vmem:[%s6 + $0x40] sm:$0xff]
      %v1067 = vld [vmem:[%s6 + $0x48] sm:$0xff]
      %v1068 = vld [vmem:[%s6 + $0x50] sm:$0xff]
      %v1069 = vld [vmem:[%s6 + $0x58] sm:$0xff]
      %v1070 = vld [vmem:[%s6 + $0x60] sm:$0xff]
      %v1071 = vld [vmem:[%s6 + $0x68] sm:$0xff]
      %v1072 = vld [vmem:[%s6 + $0x70] sm:$0xff]
      %v1073 = vld [vmem:[%s6 + $0x78] sm:$0xff]
      %v1074 = vlaneseq
      %v1075 = vshrl.u32 %v1074, 7
      %v1076 = vsub.s32 0, %v1075
      %v1077 = vrot.slane %v336, %v1076
      %1078 = vmatprep.subr.mxu0 0.0
      %1079 = vmatpush1.msra.mxu0 %v1058
      %1080 = vmatprep.subr.mxu0 0.0
      %1081 = vmatpush1.msra.mxu0 %v1059
      %1082 = vmatprep.subr.mxu0 0.0
      %1083 = vmatpush1.msra.mxu0 %v1060
      %1084 = vmatprep.subr.mxu0 0.0
      %1085 = vmatpush1.msra.mxu0 %v1061
      %1086 = vmatprep.subr.mxu0 0.0
      %1087 = vmatpush1.msra.mxu0 %v1062
      %1088 = vmatprep.subr.mxu0 0.0
      %1089 = vmatpush1.msra.mxu0 %v1063
      %1090 = vmatprep.subr.mxu0 0.0
      %1091 = vmatpush1.msra.mxu0 %v1064
      %1092 = vmatprep.subr.mxu0 0.0
      %1093 = vmatpush1.msra.mxu0 %v1065
      %1094 = vmatprep.subr.mxu0 0.0
      %1095 = vmatpush1.msra.mxu0 %v1066
      %1096 = vmatprep.subr.mxu0 0.0
      %1097 = vmatpush1.msra.mxu0 %v1067
      %1098 = vmatprep.subr.mxu0 0.0
      %1099 = vmatpush1.msra.mxu0 %v1068
      %1100 = vmatprep.subr.mxu0 0.0
      %1101 = vmatpush1.msra.mxu0 %v1069
      %1102 = vmatprep.subr.mxu0 0.0
      %1103 = vmatpush1.msra.mxu0 %v1070
      %1104 = vmatprep.subr.mxu0 0.0
      %1105 = vmatpush1.msra.mxu0 %v1071
      %1106 = vmatprep.subr.mxu0 0.0
      %1107 = vmatpush1.msra.mxu0 %v1072
      %1108 = vmatprep.subr.mxu0 0.0
      %1109 = vmatpush1.msra.mxu0 %v1073
      %1110 = vmatprep.subr.mxu0 0.0
      %1111 = vmatpush1.msra.mxu0 0.0
      %1112 = vmatprep.subr.mxu0 0.0
      %1113 = vmatpush1.msra.mxu0 0.0
      %1114 = vmatprep.subr.mxu0 0.0
      %1115 = vmatpush1.msra.mxu0 0.0
      %1116 = vmatprep.subr.mxu0 0.0
      %1117 = vmatpush1.msra.mxu0 0.0
      %1118 = vmatprep.subr.mxu0 0.0
      %1119 = vmatpush1.msra.mxu0 0.0
      %1120 = vmatprep.subr.mxu0 0.0
      %1121 = vmatpush1.msra.mxu0 0.0
      %1122 = vmatprep.subr.mxu0 0.0
      %1123 = vmatpush1.msra.mxu0 0.0
      %1124 = vmatprep.subr.mxu0 0.0
      %1125 = vmatpush1.msra.mxu0 0.0
      %1126 = vmatprep.subr.mxu0 0.0
      %1127 = vmatpush1.msra.mxu0 0.0
      %1128 = vmatprep.subr.mxu0 0.0
      %1129 = vmatpush1.msra.mxu0 0.0
      %1130 = vmatprep.subr.mxu0 0.0
      %1131 = vmatpush1.msra.mxu0 0.0
      %1132 = vmatprep.subr.mxu0 0.0
      %1133 = vmatpush1.msra.mxu0 0.0
      %1134 = vmatprep.subr.mxu0 0.0
      %1135 = vmatpush1.msra.mxu0 0.0
      %1136 = vmatprep.subr.mxu0 0.0
      %1137 = vmatpush1.msra.mxu0 0.0
      %1138 = vmatprep.subr.mxu0 0.0
      %1139 = vmatpush1.msra.mxu0 0.0
      %1140 = vmatprep.subr.mxu0 0.0
      %1141 = vmatpush1.msra.mxu0 0.0
      %1142 = vmatprep.mubr.f32.mxu0 0.0
      %1143 = vmatmul.mubr.f32.gmra.mrb[0].mxu0 %v1050
      %v1144 = vpop.f32.mrb[0].mxu0
      %v1145 = vadd.f32 %v1077, %v1144
      %v1146 = vpop.f32.mrb[0].mxu0
      %1147 = vmatprep.mubr.f32.mxu0 0.0
      %1148 = vmatmul.mubr.f32.gmra.mrb[0].mxu0 %v1051
      %v1149 = vpop.f32.mrb[0].mxu0
      %v1150 = vadd.f32 %v1077, %v1149
      %v1151 = vpop.f32.mrb[0].mxu0
      %1152 = vmatprep.mubr.f32.mxu0 0.0
      %1153 = vmatmul.mubr.f32.gmra.mrb[0].mxu0 %v1052
      %v1154 = vpop.f32.mrb[0].mxu0
      %v1155 = vadd.f32 %v1077, %v1154
      %v1156 = vpop.f32.mrb[0].mxu0
      %1157 = vmatprep.mubr.f32.mxu0 0.0
      %1158 = vmatmul.mubr.f32.gmra.mrb[0].mxu0 %v1053
      %v1159 = vpop.f32.mrb[0].mxu0
      %v1160 = vadd.f32 %v1077, %v1159
      %v1161 = vpop.f32.mrb[0].mxu0
      %1162 = vmatprep.mubr.f32.mxu0 0.0
      %1163 = vmatmul.mubr.f32.gmra.mrb[0].mxu0 %v1054
      %v1164 = vpop.f32.mrb[0].mxu0
      %v1165 = vadd.f32 %v1077, %v1164
      %v1166 = vpop.f32.mrb[0].mxu0
      %1167 = vmatprep.mubr.f32.mxu0 0.0
      %1168 = vmatmul.mubr.f32.gmra.mrb[0].mxu0 %v1055
      %v1169 = vpop.f32.mrb[0].mxu0
      %v1170 = vadd.f32 %v1077, %v1169
      %v1171 = vpop.f32.mrb[0].mxu0
      %1172 = vmatprep.mubr.f32.mxu0 0.0
      %1173 = vmatmul.mubr.f32.gmra.mrb[0].mxu0 %v1056
      %v1174 = vpop.f32.mrb[0].mxu0
      %v1175 = vadd.f32 %v1077, %v1174
      %v1176 = vpop.f32.mrb[0].mxu0
      %1177 = vmatprep.mubr.f32.mxu0 0.0
      %1178 = vmatmul.mubr.f32.gmra.mrb[0].mxu0 %v1057
      %v1179 = vpop.f32.mrb[0].mxu0
      %v1180 = vadd.f32 %v1077, %v1179
      %v1181 = vpop.f32.mrb[0].mxu0
      %1182 = vdwg.mxu0
      %v1183 = vld [vmem:[%s7] sm:$0xf]
      %v1184 = vld [vmem:[%s7 + $0x4] sm:$0xf]
      %v1185 = vld [vmem:[%s7 + $0x8] sm:$0xf]
      %v1186 = vld [vmem:[%s7 + $0xc] sm:$0xf]
      %v1191 = vunpack.c.l.b16 %v1183
      %v1192 = vunpack.c.l.b16 %v1184
      %v1193 = vunpack.c.l.b16 %v1185
      %v1194 = vunpack.c.l.b16 %v1186
      %v1195 = vpack.c.b16 %v1192, %v1191
      %v1196 = vpack.c.b16 %v1194, %v1193
      %1199 = vmatprep.subr.bf16.mxu0 0
      %1200 = vmatpush1.bf16.msra.mxu0 %v1195
      %1201 = vmatprep.subr.bf16.mxu0 0
      %1202 = vmatpush1.bf16.msra.mxu0 %v1196
      %1203 = vmatprep.subr.bf16.mxu0 0
      %1204 = vmatpush1.bf16.msra.mxu0 0
      %1205 = vmatprep.subr.bf16.mxu0 0
      %1206 = vmatpush1.bf16.msra.mxu0 0
      %1207 = vmatprep.subr.bf16.mxu0 0
      %1208 = vmatpush1.bf16.msra.mxu0 0
      %1209 = vmatprep.subr.bf16.mxu0 0
      %1210 = vmatpush1.bf16.msra.mxu0 0
      %1211 = vmatprep.subr.bf16.mxu0 0
      %1212 = vmatpush1.bf16.msra.mxu0 0
      %1213 = vmatprep.subr.bf16.mxu0 0
      %1214 = vmatpush1.bf16.msra.mxu0 0
      %1215 = vmatprep.subr.bf16.mxu0 0
      %1216 = vmatpush1.bf16.msra.mxu0 0
      %1217 = vmatprep.subr.bf16.mxu0 0
      %1218 = vmatpush1.bf16.msra.mxu0 0
      %1219 = vmatprep.subr.bf16.mxu0 0
      %1220 = vmatpush1.bf16.msra.mxu0 0
      %1221 = vmatprep.subr.bf16.mxu0 0
      %1222 = vmatpush1.bf16.msra.mxu0 0
      %1223 = vmatprep.subr.bf16.mxu0 0
      %1224 = vmatpush1.bf16.msra.mxu0 0
      %1225 = vmatprep.subr.bf16.mxu0 0
      %1226 = vmatpush1.bf16.msra.mxu0 0
      %1227 = vmatprep.subr.bf16.mxu0 0
      %1228 = vmatpush1.bf16.msra.mxu0 0
      %1229 = vmatprep.subr.bf16.mxu0 0
      %1230 = vmatpush1.bf16.msra.mxu0 0
      %1231 = vmatprep.mubr.bf16.mxu0 0
      %1232 = vmatmul.mubr.bf16.gmra.mrb[0].mxu0 %v372
      %v1233 = vpop.f32.mrb[0].mxu0
      %v1234 = vadd.f32 0.0, %v1233
      %v1235 = vpop.f32.mrb[0].mxu0
      %v1236 = vpop.f32.mrb[0].mxu0
      %v1237 = vadd.f32 0.0, %v1236
      %v1238 = vpop.f32.mrb[0].mxu0
      %1239 = vmatprep.mubr.bf16.mxu0 0
      %1240 = vmatmul.mubr.bf16.gmra.mrb[0].mxu0 %v375
      %v1241 = vpop.f32.mrb[0].mxu0
      %v1242 = vadd.f32 0.0, %v1241
      %v1243 = vpop.f32.mrb[0].mxu0
      %v1244 = vpop.f32.mrb[0].mxu0
      %v1245 = vadd.f32 0.0, %v1244
      %v1246 = vpop.f32.mrb[0].mxu0
      %1247 = vmatprep.mubr.bf16.mxu0 0
      %1248 = vmatmul.mubr.bf16.gmra.mrb[0].mxu0 %v378
      %v1249 = vpop.f32.mrb[0].mxu0
      %v1250 = vadd.f32 0.0, %v1249
      %v1251 = vpop.f32.mrb[0].mxu0
      %v1252 = vpop.f32.mrb[0].mxu0
      %v1253 = vadd.f32 0.0, %v1252
      %v1254 = vpop.f32.mrb[0].mxu0
      %1255 = vmatprep.mubr.bf16.mxu0 0
      %1256 = vmatmul.mubr.bf16.gmra.mrb[0].mxu0 %v381
      %v1257 = vpop.f32.mrb[0].mxu0
      %v1258 = vadd.f32 0.0, %v1257
      %v1259 = vpop.f32.mrb[0].mxu0
      %v1260 = vpop.f32.mrb[0].mxu0
      %v1261 = vadd.f32 0.0, %v1260
      %v1262 = vpop.f32.mrb[0].mxu0
      %1263 = vdwg.mxu0
      %v1264 = vsel %vm570, %v1145, -inf
      %v1265 = vrot.slane %v1264, 4
      %v1266 = vmax.f32 %v1264, %v1265
      %v1267 = vrot.slane %v1266, 2
      %v1268 = vmax.f32 %v1266, %v1267
      %v1269 = vrot.slane %v1268, 1
      %v1270 = vmax.f32 %v1268, %v1269
      %v1271 = vsel %vm570, %v1150, -inf
      %v1272 = vrot.slane %v1271, 4
      %v1273 = vmax.f32 %v1271, %v1272
      %v1274 = vrot.slane %v1273, 2
      %v1275 = vmax.f32 %v1273, %v1274
      %v1276 = vrot.slane %v1275, 1
      %v1277 = vmax.f32 %v1275, %v1276
      %v1278 = vsel %vm570, %v1155, -inf
      %v1279 = vrot.slane %v1278, 4
      %v1280 = vmax.f32 %v1278, %v1279
      %v1281 = vrot.slane %v1280, 2
      %v1282 = vmax.f32 %v1280, %v1281
      %v1283 = vrot.slane %v1282, 1
      %v1284 = vmax.f32 %v1282, %v1283
      %v1285 = vsel %vm570, %v1160, -inf
      %v1286 = vrot.slane %v1285, 4
      %v1287 = vmax.f32 %v1285, %v1286
      %v1288 = vrot.slane %v1287, 2
      %v1289 = vmax.f32 %v1287, %v1288
      %v1290 = vrot.slane %v1289, 1
      %v1291 = vmax.f32 %v1289, %v1290
      %v1292 = vsel %vm570, %v1165, -inf
      %v1293 = vrot.slane %v1292, 4
      %v1294 = vmax.f32 %v1292, %v1293
      %v1295 = vrot.slane %v1294, 2
      %v1296 = vmax.f32 %v1294, %v1295
      %v1297 = vrot.slane %v1296, 1
      %v1298 = vmax.f32 %v1296, %v1297
      %v1299 = vsel %vm570, %v1170, -inf
      %v1300 = vrot.slane %v1299, 4
      %v1301 = vmax.f32 %v1299, %v1300
      %v1302 = vrot.slane %v1301, 2
      %v1303 = vmax.f32 %v1301, %v1302
      %v1304 = vrot.slane %v1303, 1
      %v1305 = vmax.f32 %v1303, %v1304
      %v1306 = vsel %vm570, %v1175, -inf
      %v1307 = vrot.slane %v1306, 4
      %v1308 = vmax.f32 %v1306, %v1307
      %v1309 = vrot.slane %v1308, 2
      %v1310 = vmax.f32 %v1308, %v1309
      %v1311 = vrot.slane %v1310, 1
      %v1312 = vmax.f32 %v1310, %v1311
      %v1313 = vsel %vm570, %v1180, -inf
      %v1314 = vrot.slane %v1313, 4
      %v1315 = vmax.f32 %v1313, %v1314
      %v1316 = vrot.slane %v1315, 2
      %v1317 = vmax.f32 %v1315, %v1316
      %v1318 = vrot.slane %v1317, 1
      %v1319 = vmax.f32 %v1317, %v1318
      %v1320 = vsub.f32 %v1145, %v1270
      %v1321 = vsub.f32 %v1150, %v1277
      %v1322 = vsub.f32 %v1155, %v1284
      %v1323 = vsub.f32 %v1160, %v1291
      %v1324 = vsub.f32 %v1165, %v1298
      %v1325 = vsub.f32 %v1170, %v1305
      %v1326 = vsub.f32 %v1175, %v1312
      %v1327 = vsub.f32 %v1180, %v1319
      %v1328 = vmul.f32 %v1320, 1.442695
      %v1329 = vpow.pop %v1328
      %v1330 = vmul.f32 %v1321, 1.442695
      %v1331 = vpow.pop %v1330
      %v1332 = vmul.f32 %v1322, 1.442695
      %v1333 = vpow.pop %v1332
      %v1334 = vmul.f32 %v1323, 1.442695
      %v1335 = vpow.pop %v1334
      %v1336 = vmul.f32 %v1324, 1.442695
      %v1337 = vpow.pop %v1336
      %v1338 = vmul.f32 %v1325, 1.442695
      %v1339 = vpow.pop %v1338
      %v1340 = vmul.f32 %v1326, 1.442695
      %v1341 = vpow.pop %v1340
      %v1342 = vmul.f32 %v1327, 1.442695
      %v1343 = vpow.pop %v1342
      %v1344 = vmul.f32 %v1329, %v1234
      %v1345 = vmul.f32 %v1331, %v1237
      %v1346 = vmul.f32 %v1333, %v1242
      %v1347 = vmul.f32 %v1335, %v1245
      %v1348 = vmul.f32 %v1337, %v1250
      %v1349 = vmul.f32 %v1339, %v1253
      %v1350 = vmul.f32 %v1341, %v1258
      %v1351 = vmul.f32 %v1343, %v1261
      %v1352 = vsel %vm570, %v1344, 0.0
      %v1353 = vrot.slane %v1352, 4
      %v1354 = vadd.f32 %v1352, %v1353
      %v1355 = vrot.slane %v1354, 2
      %v1356 = vadd.f32 %v1354, %v1355
      %v1357 = vrot.slane %v1356, 1
      %v1358 = vadd.f32 %v1356, %v1357
      %v1359 = vsel %vm570, %v1345, 0.0
      %v1360 = vrot.slane %v1359, 4
      %v1361 = vadd.f32 %v1359, %v1360
      %v1362 = vrot.slane %v1361, 2
      %v1363 = vadd.f32 %v1361, %v1362
      %v1364 = vrot.slane %v1363, 1
      %v1365 = vadd.f32 %v1363, %v1364
      %v1366 = vsel %vm570, %v1346, 0.0
      %v1367 = vrot.slane %v1366, 4
      %v1368 = vadd.f32 %v1366, %v1367
      %v1369 = vrot.slane %v1368, 2
      %v1370 = vadd.f32 %v1368, %v1369
      %v1371 = vrot.slane %v1370, 1
      %v1372 = vadd.f32 %v1370, %v1371
      %v1373 = vsel %vm570, %v1347, 0.0
      %v1374 = vrot.slane %v1373, 4
      %v1375 = vadd.f32 %v1373, %v1374
      %v1376 = vrot.slane %v1375, 2
      %v1377 = vadd.f32 %v1375, %v1376
      %v1378 = vrot.slane %v1377, 1
      %v1379 = vadd.f32 %v1377, %v1378
      %v1380 = vsel %vm570, %v1348, 0.0
      %v1381 = vrot.slane %v1380, 4
      %v1382 = vadd.f32 %v1380, %v1381
      %v1383 = vrot.slane %v1382, 2
      %v1384 = vadd.f32 %v1382, %v1383
      %v1385 = vrot.slane %v1384, 1
      %v1386 = vadd.f32 %v1384, %v1385
      %v1387 = vsel %vm570, %v1349, 0.0
      %v1388 = vrot.slane %v1387, 4
      %v1389 = vadd.f32 %v1387, %v1388
      %v1390 = vrot.slane %v1389, 2
      %v1391 = vadd.f32 %v1389, %v1390
      %v1392 = vrot.slane %v1391, 1
      %v1393 = vadd.f32 %v1391, %v1392
      %v1394 = vsel %vm570, %v1350, 0.0
      %v1395 = vrot.slane %v1394, 4
      %v1396 = vadd.f32 %v1394, %v1395
      %v1397 = vrot.slane %v1396, 2
      %v1398 = vadd.f32 %v1396, %v1397
      %v1399 = vrot.slane %v1398, 1
      %v1400 = vadd.f32 %v1398, %v1399
      %v1401 = vsel %vm570, %v1351, 0.0
      %v1402 = vrot.slane %v1401, 4
      %v1403 = vadd.f32 %v1401, %v1402
      %v1404 = vrot.slane %v1403, 2
      %v1405 = vadd.f32 %v1403, %v1404
      %v1406 = vrot.slane %v1405, 1
      %v1407 = vadd.f32 %v1405, %v1406
      %v1408 = vsel %vm570, %v1329, 0.0
      %v1409 = vrot.slane %v1408, 4
      %v1410 = vadd.f32 %v1408, %v1409
      %v1411 = vrot.slane %v1410, 2
      %v1412 = vadd.f32 %v1410, %v1411
      %v1413 = vrot.slane %v1412, 1
      %v1414 = vadd.f32 %v1412, %v1413
      %v1415 = vsel %vm570, %v1331, 0.0
      %v1416 = vrot.slane %v1415, 4
      %v1417 = vadd.f32 %v1415, %v1416
      %v1418 = vrot.slane %v1417, 2
      %v1419 = vadd.f32 %v1417, %v1418
      %v1420 = vrot.slane %v1419, 1
      %v1421 = vadd.f32 %v1419, %v1420
      %v1422 = vsel %vm570, %v1333, 0.0
      %v1423 = vrot.slane %v1422, 4
      %v1424 = vadd.f32 %v1422, %v1423
      %v1425 = vrot.slane %v1424, 2
      %v1426 = vadd.f32 %v1424, %v1425
      %v1427 = vrot.slane %v1426, 1
      %v1428 = vadd.f32 %v1426, %v1427
      %v1429 = vsel %vm570, %v1335, 0.0
      %v1430 = vrot.slane %v1429, 4
      %v1431 = vadd.f32 %v1429, %v1430
      %v1432 = vrot.slane %v1431, 2
      %v1433 = vadd.f32 %v1431, %v1432
      %v1434 = vrot.slane %v1433, 1
      %v1435 = vadd.f32 %v1433, %v1434
      %v1436 = vsel %vm570, %v1337, 0.0
      %v1437 = vrot.slane %v1436, 4
      %v1438 = vadd.f32 %v1436, %v1437
      %v1439 = vrot.slane %v1438, 2
      %v1440 = vadd.f32 %v1438, %v1439
      %v1441 = vrot.slane %v1440, 1
      %v1442 = vadd.f32 %v1440, %v1441
      %v1443 = vsel %vm570, %v1339, 0.0
      %v1444 = vrot.slane %v1443, 4
      %v1445 = vadd.f32 %v1443, %v1444
      %v1446 = vrot.slane %v1445, 2
      %v1447 = vadd.f32 %v1445, %v1446
      %v1448 = vrot.slane %v1447, 1
      %v1449 = vadd.f32 %v1447, %v1448
      %v1450 = vsel %vm570, %v1341, 0.0
      %v1451 = vrot.slane %v1450, 4
      %v1452 = vadd.f32 %v1450, %v1451
      %v1453 = vrot.slane %v1452, 2
      %v1454 = vadd.f32 %v1452, %v1453
      %v1455 = vrot.slane %v1454, 1
      %v1456 = vadd.f32 %v1454, %v1455
      %v1457 = vsel %vm570, %v1343, 0.0
      %v1458 = vrot.slane %v1457, 4
      %v1459 = vadd.f32 %v1457, %v1458
      %v1460 = vrot.slane %v1459, 2
      %v1461 = vadd.f32 %v1459, %v1460
      %v1462 = vrot.slane %v1461, 1
      %v1463 = vadd.f32 %v1461, %v1462
      %v1464 = vrcp.pop %v1414
      %v1465 = vrcp.pop %v1421
      %v1466 = vrcp.pop %v1428
      %v1467 = vrcp.pop %v1435
      %v1468 = vrcp.pop %v1442
      %v1469 = vrcp.pop %v1449
      %v1470 = vrcp.pop %v1456
      %v1471 = vrcp.pop %v1463
      %v1472 = vmul.f32 %v1358, %v1464
      %v1473 = vmul.f32 %v1365, %v1465
      %v1474 = vmul.f32 %v1372, %v1466
      %v1475 = vmul.f32 %v1379, %v1467
      %v1476 = vmul.f32 %v1386, %v1468
      %v1477 = vmul.f32 %v1393, %v1469
      %v1478 = vmul.f32 %v1400, %v1470
      %v1479 = vmul.f32 %v1407, %v1471
      %v1480 = vlaneseq
      %v1481 = vshrl.u32 %v1480, 7
      %v1482 = vsub.s32 0, %v1481
      %v1483 = vrot.slane %v337, %v1482
      %v1484 = vadd.f32 %v1472, %v1483
      %v1485 = vadd.f32 %v1473, %v1483
      %v1486 = vadd.f32 %v1474, %v1483
      %v1487 = vadd.f32 %v1475, %v1483
      %v1488 = vadd.f32 %v1476, %v1483
      %v1489 = vadd.f32 %v1477, %v1483
      %v1490 = vadd.f32 %v1478, %v1483
      %v1491 = vadd.f32 %v1479, %v1483
      %v1500 = vrot.slane %v1485, 7
      %vm1501 = vcmask 1041409
      %v1502 = vsel %vm1501, %v1500, %v1484
      %v1503 = vrot.slane %v1486, 6
      %vm1504 = vcmask 1042434
      %v1505 = vsel %vm1504, %v1503, %v1502
      %v1506 = vrot.slane %v1487, 5
      %vm1507 = vcmask 1043459
      %v1508 = vsel %vm1507, %v1506, %v1505
      %v1509 = vrot.slane %v1488, 4
      %vm1510 = vcmask 1044484
      %v1511 = vsel %vm1510, %v1509, %v1508
      %v1512 = vrot.slane %v1489, 3
      %vm1513 = vcmask 1045509
      %v1514 = vsel %vm1513, %v1512, %v1511
      %v1515 = vrot.slane %v1490, 2
      %vm1516 = vcmask 1046534
      %v1517 = vsel %vm1516, %v1515, %v1514
      %v1518 = vrot.slane %v1491, 1
      %vm1519 = vcmask 1047559
      %v1520 = vsel %vm1519, %v1518, %v1517
      %1522 = vst.msk [vmem:[%s332] sm:$0xff] %vm570, %v1520
      %p1523 = scmp.lt.s32.totalorder %s20, 1
      %s1524 = scalar_select %p1523, %s20, 1
      %s1525 = smul.addr %s1524, 8
      %s1526 = scalar_lea.vmem %s9, %s1525
      // Predicated region
      $region57: #{tpu_custom_call.1} parent=55 // pred_check
        %p1527 = pneg %p232
      $region58: #{tpu_custom_call.1} parent=55 // pred_check_branch
        %1529 = sbr.rel (%p1527) target = $region60
      $region59: #{tpu_custom_call.1} parent=55 // pred_region
        _
      $region60: #{tpu_custom_call.1} parent=55 // pred_fallthru
        _
    $region56: #{tpu_custom_call.1} parent=5 // pred_fallthru
      _
    %p1530 = scmp.le.s32.totalorder 2, %s15
    // Predicated region
    $region61: #{tpu_custom_call.1} parent=5 // pred_check
      %p1531 = pneg %p1530
    $region62: #{tpu_custom_call.1} parent=5 // pred_check_branch
      %1533 = sbr.rel (%p1531) target = $region64
    $region63: #{tpu_custom_call.1} parent=5 // pred_region
      %s1534 = ssub.s32 %s15, 2
      // Predicated region
      $region65: #{tpu_custom_call.1} parent=63 // pred_check
        %p1535 = pneg %p238
      $region66: #{tpu_custom_call.1} parent=63 // pred_check_branch
        %1537 = sbr.rel (%p1535) target = $region68
      $region67: #{tpu_custom_call.1} parent=63 // pred_region
        %p1538 = scmp.lt.s32.totalorder %s21, 1
        %s1539 = scalar_select %p1538, %s21, 1
        %s1540 = smul.addr %s1539, 8
        %s1541 = scalar_lea.vmem %s9, %s1540
      $region68: #{tpu_custom_call.1} parent=63 // pred_fallthru
        _
    $region64: #{tpu_custom_call.1} parent=5 // pred_fallthru
      _
  $region6: #{tpu_custom_call.1} parent=0 // loop_footer
    %s19 = sadd.s32 1, %s15
  $region7: #{tpu_custom_call.1} parent=0 // loop_footer_branch
    %14 = sbr.rel target = $region3
  $region8: #{tpu_custom_call.1} parent=0 // loop_exit
    _

</llo_original>
